<compile_context>
chip_gen: v7x
topology: tpu7x:2x2x1
jax: 0.10.0
libtpu: 0.0.40
codegen_flags: <defaults>
</compile_context>

<pallas_src>
import math

import jax
import jax.numpy as jnp
import numpy as np
from jax.experimental import pallas as pl
from jax.experimental.pallas import tpu as pltpu

D_MODEL = 32      # encoder.ubarn.d_model
N_Q = 4           # query.shape[1]
TILE_TARGET = 512 # pixel-rows per grid step (capped by H*W)


def _mono_sits_kernel(sits_ref, valid_ref, pe_ref,
                      wemb_ref, bemb_ref, wkq_ref, wvo_ref,
                      out_ref):
    TC = sits_ref.shape[-1]          # T*C
    TD = pe_ref.shape[-1]            # T*D
    T = valid_ref.shape[-1]
    D = TD // T
    NQD = out_ref.shape[-1]          # nq*D (lane-dense output slab)
    NQ = NQD // D
    scale = 1.0 / math.sqrt(D)

    x = sits_ref[0]                                                  # (tn, T*C)

    # ---- per-timestep linear embedding + ReLU + DOY PE (all lane-dense) ----
    # block-diagonal weight -> one MXU matmul with K = T*C = 32
    e = jnp.dot(x, wemb_ref[...], preferred_element_type=jnp.float32)  # (tn, T*D)
    e = jnp.maximum(e + bemb_ref[...], 0.0) + pe_ref[0]                # broadcast adds

    # ---- scores for the folded cross-attention: s[:, q*T + t] ----
    s = jnp.dot(e, wkq_ref[...], preferred_element_type=jnp.float32) * scale  # (tn, nq*T)

    valid = valid_ref[0]                                             # (1, T), 1.0 = valid
    validb = valid > 0.5
    neg = jnp.float32(-1e30)

    # ---- per-query masked softmax over T + weighted sum over T (VPU) ----
    chunks = []
    for q in range(NQ):
        sq = s[:, q * T:(q + 1) * T]                                 # (tn, T)
        sq = jnp.where(validb, sq, neg)
        m = jnp.max(sq, axis=-1, keepdims=True)
        p = jnp.exp(sq - m)
        a = p / jnp.sum(p, axis=-1, keepdims=True)                   # (tn, T)
        ctx_q = a[:, 0:1] * e[:, 0:D]
        for t in range(1, T):
            ctx_q = ctx_q + a[:, t:t + 1] * e[:, t * D:(t + 1) * D]
        chunks.append(ctx_q)                                         # (tn, D)
    ctx = jnp.concatenate(chunks, axis=-1)                           # (tn, nq*D)

    # ---- folded value/output projection: one (tn,128)@(128,128) matmul ----
    out = jnp.dot(ctx, wvo_ref[...], preferred_element_type=jnp.float32)
    out_ref[0] = out.astype(out_ref.dtype)


def sinusoidal_doy_encoding(doy, d_model):
    """doy: (B, T) float -> (B, T, d_model) sinusoidal positional encoding."""
    i = jnp.arange(d_model // 2, dtype=jnp.float32)
    div = jnp.exp(-jnp.log(10000.0) * (2.0 * i / d_model))
    ang = doy[..., None].astype(jnp.float32) * div                   # (B, T, d/2)
    return jnp.concatenate([jnp.sin(ang), jnp.cos(ang)], axis=-1)


def mono_sits_encoder_forward(sits, input_doy, padd_index, params):
    """MonoSITSEncoder.forward: returns repr of shape (B*H*W, nq, d_model)."""
    B, T, C, H, W = sits.shape
    HW = H * W
    D = params['w_embed'].shape[1]
    nq = params['query'].shape[1]
    TC, TD, NQD = T * C, T * D, nq * D

    # tile rows; pad H*W so the grid divides evenly (padded rows are dropped)
    tile_n = min(TILE_TARGET, HW)
    tile_n = max(8, (tile_n // 8) * 8)
    HWp = ((HW + tile_n - 1) // tile_n) * tile_n

    # 'B t c h w -> B (h w) (t c)'  (lane-dense 32-wide rows)
    sits_flat = jnp.transpose(sits, (0, 3, 4, 1, 2)).reshape(B, HW, TC)
    if HWp != HW:
        sits_flat = jnp.pad(sits_flat, ((0, 0), (0, HWp - HW), (0, 0)))

    # per-batch (NOT per-pixel) mask and positional encoding
    valid3 = (~padd_index).astype(jnp.float32).reshape(B, 1, T)
    pe3 = sinusoidal_doy_encoding(input_doy, D).reshape(B, 1, TD)

    # ---- fold projection chains into small constant weights ----
    qp = params['query'][0] @ params['w_q']                          # (nq, D)
    wkq = params['w_k'] @ qp.T                                       # (D, nq)
    wvo = params['w_v'] @ params['w_o']                              # (D, D)
    eyeT = jnp.eye(T, dtype=jnp.float32)
    wemb_big = jnp.kron(eyeT, params['w_embed'])                     # (T*C, T*D) block-diag
    bemb_big = jnp.tile(params['b_embed'], T).reshape(1, TD)         # (1, T*D)
    # wkq_big[t*D+d, q*T+t'] = wkq[d,q] * delta(t,t')
    wkq_big = jnp.einsum('dq,te->tdqe', wkq, eyeT).reshape(TD, nq * T)
    wvo_blk = jnp.kron(jnp.eye(nq, dtype=jnp.float32), wvo)          # (nq*D, nq*D)

    flops_row = 2 * TC * TD + 2 * TD * nq * T + 2 * nq * T * D + 2 * NQD * NQD
    cost = pl.CostEstimate(
        flops=int(B * HWp * flops_row),
        transcendentals=int(B * HWp * nq * T),
        bytes_accessed=int(4 * (B * HWp * (TC + NQD) + B * (T + TD)
                                + TC * TD + TD + TD * nq * T + NQD * NQD)))

    wspec = lambda b, i: (0, 0)
    out = pl.pallas_call(
        _mono_sits_kernel,
        out_shape=jax.ShapeDtypeStruct((B, HWp, NQD), jnp.float32),
        grid=(B, HWp // tile_n),
        in_specs=[
            pl.BlockSpec((1, tile_n, TC), lambda b, i: (b, i, 0)),   # sits rows
            pl.BlockSpec((1, 1, T), lambda b, i: (b, 0, 0)),         # per-batch validity
            pl.BlockSpec((1, 1, TD), lambda b, i: (b, 0, 0)),        # per-batch DOY PE
            pl.BlockSpec((TC, TD), wspec),                           # block-diag embed W
            pl.BlockSpec((1, TD), wspec),                            # tiled embed bias
            pl.BlockSpec((TD, nq * T), wspec),                       # folded K.q weight
            pl.BlockSpec((NQD, NQD), wspec),                         # folded V.O weight
        ],
        out_specs=pl.BlockSpec((1, tile_n, NQD), lambda b, i: (b, i, 0)),
        compiler_params=pltpu.CompilerParams(
            dimension_semantics=("parallel", "parallel"),
            vmem_limit_bytes=32 * 1024 * 1024),
        cost_estimate=cost,
    )(sits_flat, valid3, pe3, wemb_big, bemb_big, wkq_big, wvo_blk)

    return out[:, :HW].reshape(B * HW, nq, D)


def reference_forward(sits, input_doy, padd_index, params):
    """Pure-JAX reference with identical math (for verification)."""
    B, T, C, H, W = sits.shape
    N = B * H * W
    D = params['w_embed'].shape[1]
    x = jnp.transpose(sits, (0, 3, 4, 1, 2)).reshape(N, T, C)
    e = jnp.maximum(jnp.einsum('ntc,cd->ntd', x, params['w_embed'])
                    + params['b_embed'], 0.0)
    pe = sinusoidal_doy_encoding(input_doy, D)
    e = e + jnp.broadcast_to(pe[:, None, None, :, :],
                             (B, H, W, T, D)).reshape(N, T, D)
    qp = params['query'][0] @ params['w_q']
    k = jnp.einsum('ntd,de->nte', e, params['w_k'])
    v = jnp.einsum('ntd,de->nte', e, params['w_v'])
    scores = jnp.einsum('ntd,qd->ntq', k, qp) / math.sqrt(D)
    valid = (~padd_index).astype(jnp.float32)
    valid_flat = jnp.broadcast_to(valid[:, None, None, :],
                                  (B, H, W, T)).reshape(N, T)
    scores = jnp.where(valid_flat[:, :, None] > 0.5, scores, -1e30)
    m = jnp.max(scores, axis=1, keepdims=True)
    p = jnp.exp(scores - m)
    attn = p / jnp.sum(p, axis=1, keepdims=True)
    ctx = jnp.einsum('ntq,ntd->nqd', attn, v)
    return jnp.einsum('nqd,de->nqe', ctx, params['w_o'])


if __name__ == "__main__":
    B, T, C, H, W = 2, 8, 4, 8, 8
    D, nq = D_MODEL, N_Q

    key = jax.random.PRNGKey(0)
    keys = jax.random.split(key, 8)
    sits = jax.random.normal(keys[0], (B, T, C, H, W), jnp.float32)
    input_doy = jnp.tile(10.0 * jnp.arange(T, dtype=jnp.float32)[None, :], (B, 1))
    # last 2 timesteps of batch element 1 are padding
    padd_index = jnp.zeros((B, T), dtype=bool).at[1, T - 2:].set(True)

    params = {
        'w_embed': 0.1 * jax.random.normal(keys[1], (C, D), jnp.float32),
        'b_embed': 0.1 * jax.random.normal(keys[2], (D,), jnp.float32),
        'query':   0.1 * jax.random.normal(keys[3], (1, nq, D), jnp.float32),
        'w_q':     0.1 * jax.random.normal(keys[4], (D, D), jnp.float32),
        'w_k':     0.1 * jax.random.normal(keys[5], (D, D), jnp.float32),
        'w_v':     0.1 * jax.random.normal(keys[6], (D, D), jnp.float32),
        'w_o':     0.1 * jax.random.normal(keys[7], (D, D), jnp.float32),
    }

    out = mono_sits_encoder_forward(sits, input_doy, padd_index, params)
    out = jax.block_until_ready(out)

    ref = reference_forward(sits, input_doy, padd_index, params)
    np.testing.assert_allclose(np.asarray(out), np.asarray(ref),
                               rtol=2e-2, atol=2e-2)
    assert out.shape == (B * H * W, nq, D)
    print("KERNEL_OK")
</pallas_src>

<mosaic_0001>
module attributes {stable_mosaic.version = 11 : i64} {
  func.func @_mono_sits_kernel(%arg0: i32, %arg1: i32, %arg2: memref<1x64x32xf32, #tpu.memory_space<vmem>>, %arg3: memref<1x1x8xf32, #tpu.memory_space<vmem>>, %arg4: memref<1x1x256xf32, #tpu.memory_space<vmem>>, %arg5: memref<32x256xf32, #tpu.memory_space<vmem>>, %arg6: memref<1x256xf32, #tpu.memory_space<vmem>>, %arg7: memref<256x32xf32, #tpu.memory_space<vmem>>, %arg8: memref<128x128xf32, #tpu.memory_space<vmem>>, %arg9: memref<1x64x128xf32, #tpu.memory_space<vmem>>) attributes {dimension_semantics = [#tpu.dimension_semantics<parallel>, #tpu.dimension_semantics<parallel>], iteration_bounds = array<i64: 2, 1>, scalar_prefetch = 0 : i64, scratch_operands = 0 : i64, tpu.core_type = #tpu.core_type<tc>, window_params = [{transform_indices = @transform_0, window_bounds = array<i64: 1, 64, 32>}, {transform_indices = @transform_1, window_bounds = array<i64: 1, 1, 8>}, {transform_indices = @transform_2, window_bounds = array<i64: 1, 1, 256>}, {pipeline_mode = #tpu.pipeline_mode<synchronous>, transform_indices = @transform_3, window_bounds = array<i64: 32, 256>}, {pipeline_mode = #tpu.pipeline_mode<synchronous>, transform_indices = @transform_4, window_bounds = array<i64: 1, 256>}, {pipeline_mode = #tpu.pipeline_mode<synchronous>, transform_indices = @transform_5, window_bounds = array<i64: 256, 32>}, {pipeline_mode = #tpu.pipeline_mode<synchronous>, transform_indices = @transform_6, window_bounds = array<i64: 128, 128>}, {transform_indices = @transform_7, window_bounds = array<i64: 1, 64, 128>}]} {
    %c0 = arith.constant 0 : index
    %c0_0 = arith.constant 0 : index
    %c0_1 = arith.constant 0 : index
    %0 = vector.load %arg2[%c0, %c0_0, %c0_1] : memref<1x64x32xf32, #tpu.memory_space<vmem>>, vector<1x64x32xf32>
    %1 = vector.shape_cast %0 : vector<1x64x32xf32> to vector<64x32xf32>
    %c0_2 = arith.constant 0 : index
    %c0_3 = arith.constant 0 : index
    %2 = vector.load %arg5[%c0_2, %c0_3] : memref<32x256xf32, #tpu.memory_space<vmem>>, vector<32x256xf32>
    %cst = arith.constant dense<0.000000e+00> : vector<64x256xf32>
    %3 = tpu.matmul %1, %2, %cst {dimension_numbers = #tpu.dot_dimension_numbers<[1], [0], [0], [1], [0, 0, 1, 1], [], []>} : vector<64x32xf32>, vector<32x256xf32>, vector<64x256xf32> -> vector<64x256xf32>
    %c0_4 = arith.constant 0 : index
    %c0_5 = arith.constant 0 : index
    %4 = vector.load %arg6[%c0_4, %c0_5] : memref<1x256xf32, #tpu.memory_space<vmem>>, vector<1x256xf32>
    %5 = vector.broadcast %4 : vector<1x256xf32> to vector<64x256xf32>
    %6 = arith.addf %3, %5 : vector<64x256xf32>
    %cst_6 = arith.constant 0.000000e+00 : f32
    %7 = vector.broadcast %cst_6 : f32 to vector<64x256xf32>
    %8 = arith.maximumf %6, %7 : vector<64x256xf32>
    %c0_7 = arith.constant 0 : index
    %c0_8 = arith.constant 0 : index
    %c0_9 = arith.constant 0 : index
    %9 = vector.load %arg4[%c0_7, %c0_8, %c0_9] : memref<1x1x256xf32, #tpu.memory_space<vmem>>, vector<1x1x256xf32>
    %10 = vector.shape_cast %9 : vector<1x1x256xf32> to vector<1x256xf32>
    %11 = vector.broadcast %10 : vector<1x256xf32> to vector<64x256xf32>
    %12 = arith.addf %8, %11 : vector<64x256xf32>
    %c0_10 = arith.constant 0 : index
    %c0_11 = arith.constant 0 : index
    %13 = vector.load %arg7[%c0_10, %c0_11] : memref<256x32xf32, #tpu.memory_space<vmem>>, vector<256x32xf32>
    %cst_12 = arith.constant dense<0.000000e+00> : vector<64x32xf32>
    %14 = tpu.matmul %12, %13, %cst_12 {dimension_numbers = #tpu.dot_dimension_numbers<[1], [0], [0], [1], [0, 0, 1, 1], [], []>} : vector<64x256xf32>, vector<256x32xf32>, vector<64x32xf32> -> vector<64x32xf32>
    %cst_13 = arith.constant 0.176776692 : f32
    %15 = vector.broadcast %cst_13 : f32 to vector<64x32xf32>
    %16 = arith.mulf %14, %15 : vector<64x32xf32>
    %c0_14 = arith.constant 0 : index
    %c0_15 = arith.constant 0 : index
    %c0_16 = arith.constant 0 : index
    %17 = vector.load %arg3[%c0_14, %c0_15, %c0_16] : memref<1x1x8xf32, #tpu.memory_space<vmem>>, vector<1x1x8xf32>
    %18 = vector.shape_cast %17 : vector<1x1x8xf32> to vector<1x8xf32>
    %cst_17 = arith.constant 5.000000e-01 : f32
    %19 = vector.broadcast %cst_17 : f32 to vector<1x8xf32>
    %20 = arith.cmpf ogt, %18, %19 : vector<1x8xf32>
    %21 = vector.extract_strided_slice %16 {offsets = [0, 0], sizes = [64, 8], strides = [1, 1]} : vector<64x32xf32> to vector<64x8xf32>
    %cst_18 = arith.constant -1.000000e+30 : f32
    %22 = vector.shape_cast %20 : vector<1x8xi1> to vector<1x8xi1>
    %23 = vector.broadcast %22 : vector<1x8xi1> to vector<64x8xi1>
    %24 = vector.broadcast %cst_18 : f32 to vector<64x8xf32>
    %25 = arith.select %23, %21, %24 : vector<64x8xi1>, vector<64x8xf32>
    %cst_19 = arith.constant dense<0xFF800000> : vector<64xf32>
    %26 = vector.multi_reduction <maximumf>, %25, %cst_19 [1] : vector<64x8xf32> to vector<64xf32>
    %27 = vector.shape_cast %26 : vector<64xf32> to vector<64x1xf32>
    %28 = vector.broadcast %27 : vector<64x1xf32> to vector<64x8xf32>
    %29 = arith.subf %25, %28 : vector<64x8xf32>
    %30 = math.exp %29 : vector<64x8xf32>
    %cst_20 = arith.constant dense<0.000000e+00> : vector<64xf32>
    %31 = vector.multi_reduction <add>, %30, %cst_20 [1] : vector<64x8xf32> to vector<64xf32>
    %32 = vector.shape_cast %31 : vector<64xf32> to vector<64x1xf32>
    %33 = vector.broadcast %32 : vector<64x1xf32> to vector<64x8xf32>
    %34 = arith.divf %30, %33 : vector<64x8xf32>
    %35 = vector.extract_strided_slice %34 {offsets = [0, 0], sizes = [64, 1], strides = [1, 1]} : vector<64x8xf32> to vector<64x1xf32>
    %36 = vector.extract_strided_slice %12 {offsets = [0, 0], sizes = [64, 32], strides = [1, 1]} : vector<64x256xf32> to vector<64x32xf32>
    %37 = vector.broadcast %35 : vector<64x1xf32> to vector<64x32xf32>
    %38 = arith.mulf %37, %36 : vector<64x32xf32>
    %39 = vector.extract_strided_slice %34 {offsets = [0, 1], sizes = [64, 1], strides = [1, 1]} : vector<64x8xf32> to vector<64x1xf32>
    %40 = vector.extract_strided_slice %12 {offsets = [0, 32], sizes = [64, 32], strides = [1, 1]} : vector<64x256xf32> to vector<64x32xf32>
    %41 = vector.broadcast %39 : vector<64x1xf32> to vector<64x32xf32>
    %42 = arith.mulf %41, %40 : vector<64x32xf32>
    %43 = arith.addf %38, %42 : vector<64x32xf32>
    %44 = vector.extract_strided_slice %34 {offsets = [0, 2], sizes = [64, 1], strides = [1, 1]} : vector<64x8xf32> to vector<64x1xf32>
    %45 = vector.extract_strided_slice %12 {offsets = [0, 64], sizes = [64, 32], strides = [1, 1]} : vector<64x256xf32> to vector<64x32xf32>
    %46 = vector.broadcast %44 : vector<64x1xf32> to vector<64x32xf32>
    %47 = arith.mulf %46, %45 : vector<64x32xf32>
    %48 = arith.addf %43, %47 : vector<64x32xf32>
    %49 = vector.extract_strided_slice %34 {offsets = [0, 3], sizes = [64, 1], strides = [1, 1]} : vector<64x8xf32> to vector<64x1xf32>
    %50 = vector.extract_strided_slice %12 {offsets = [0, 96], sizes = [64, 32], strides = [1, 1]} : vector<64x256xf32> to vector<64x32xf32>
    %51 = vector.broadcast %49 : vector<64x1xf32> to vector<64x32xf32>
    %52 = arith.mulf %51, %50 : vector<64x32xf32>
    %53 = arith.addf %48, %52 : vector<64x32xf32>
    %54 = vector.extract_strided_slice %34 {offsets = [0, 4], sizes = [64, 1], strides = [1, 1]} : vector<64x8xf32> to vector<64x1xf32>
    %55 = vector.extract_strided_slice %12 {offsets = [0, 128], sizes = [64, 32], strides = [1, 1]} : vector<64x256xf32> to vector<64x32xf32>
    %56 = vector.broadcast %54 : vector<64x1xf32> to vector<64x32xf32>
    %57 = arith.mulf %56, %55 : vector<64x32xf32>
    %58 = arith.addf %53, %57 : vector<64x32xf32>
    %59 = vector.extract_strided_slice %34 {offsets = [0, 5], sizes = [64, 1], strides = [1, 1]} : vector<64x8xf32> to vector<64x1xf32>
    %60 = vector.extract_strided_slice %12 {offsets = [0, 160], sizes = [64, 32], strides = [1, 1]} : vector<64x256xf32> to vector<64x32xf32>
    %61 = vector.broadcast %59 : vector<64x1xf32> to vector<64x32xf32>
    %62 = arith.mulf %61, %60 : vector<64x32xf32>
    %63 = arith.addf %58, %62 : vector<64x32xf32>
    %64 = vector.extract_strided_slice %34 {offsets = [0, 6], sizes = [64, 1], strides = [1, 1]} : vector<64x8xf32> to vector<64x1xf32>
    %65 = vector.extract_strided_slice %12 {offsets = [0, 192], sizes = [64, 32], strides = [1, 1]} : vector<64x256xf32> to vector<64x32xf32>
    %66 = vector.broadcast %64 : vector<64x1xf32> to vector<64x32xf32>
    %67 = arith.mulf %66, %65 : vector<64x32xf32>
    %68 = arith.addf %63, %67 : vector<64x32xf32>
    %69 = vector.extract_strided_slice %34 {offsets = [0, 7], sizes = [64, 1], strides = [1, 1]} : vector<64x8xf32> to vector<64x1xf32>
    %70 = vector.extract_strided_slice %12 {offsets = [0, 224], sizes = [64, 32], strides = [1, 1]} : vector<64x256xf32> to vector<64x32xf32>
    %71 = vector.broadcast %69 : vector<64x1xf32> to vector<64x32xf32>
    %72 = arith.mulf %71, %70 : vector<64x32xf32>
    %73 = arith.addf %68, %72 : vector<64x32xf32>
    %74 = vector.extract_strided_slice %16 {offsets = [0, 8], sizes = [64, 8], strides = [1, 1]} : vector<64x32xf32> to vector<64x8xf32>
    %cst_21 = arith.constant -1.000000e+30 : f32
    %75 = vector.shape_cast %20 : vector<1x8xi1> to vector<1x8xi1>
    %76 = vector.broadcast %75 : vector<1x8xi1> to vector<64x8xi1>
    %77 = vector.broadcast %cst_21 : f32 to vector<64x8xf32>
    %78 = arith.select %76, %74, %77 : vector<64x8xi1>, vector<64x8xf32>
    %cst_22 = arith.constant dense<0xFF800000> : vector<64xf32>
    %79 = vector.multi_reduction <maximumf>, %78, %cst_22 [1] : vector<64x8xf32> to vector<64xf32>
    %80 = vector.shape_cast %79 : vector<64xf32> to vector<64x1xf32>
    %81 = vector.broadcast %80 : vector<64x1xf32> to vector<64x8xf32>
    %82 = arith.subf %78, %81 : vector<64x8xf32>
    %83 = math.exp %82 : vector<64x8xf32>
    %cst_23 = arith.constant dense<0.000000e+00> : vector<64xf32>
    %84 = vector.multi_reduction <add>, %83, %cst_23 [1] : vector<64x8xf32> to vector<64xf32>
    %85 = vector.shape_cast %84 : vector<64xf32> to vector<64x1xf32>
    %86 = vector.broadcast %85 : vector<64x1xf32> to vector<64x8xf32>
    %87 = arith.divf %83, %86 : vector<64x8xf32>
    %88 = vector.extract_strided_slice %87 {offsets = [0, 0], sizes = [64, 1], strides = [1, 1]} : vector<64x8xf32> to vector<64x1xf32>
    %89 = vector.extract_strided_slice %12 {offsets = [0, 0], sizes = [64, 32], strides = [1, 1]} : vector<64x256xf32> to vector<64x32xf32>
    %90 = vector.broadcast %88 : vector<64x1xf32> to vector<64x32xf32>
    %91 = arith.mulf %90, %89 : vector<64x32xf32>
    %92 = vector.extract_strided_slice %87 {offsets = [0, 1], sizes = [64, 1], strides = [1, 1]} : vector<64x8xf32> to vector<64x1xf32>
    %93 = vector.extract_strided_slice %12 {offsets = [0, 32], sizes = [64, 32], strides = [1, 1]} : vector<64x256xf32> to vector<64x32xf32>
    %94 = vector.broadcast %92 : vector<64x1xf32> to vector<64x32xf32>
    %95 = arith.mulf %94, %93 : vector<64x32xf32>
    %96 = arith.addf %91, %95 : vector<64x32xf32>
    %97 = vector.extract_strided_slice %87 {offsets = [0, 2], sizes = [64, 1], strides = [1, 1]} : vector<64x8xf32> to vector<64x1xf32>
    %98 = vector.extract_strided_slice %12 {offsets = [0, 64], sizes = [64, 32], strides = [1, 1]} : vector<64x256xf32> to vector<64x32xf32>
    %99 = vector.broadcast %97 : vector<64x1xf32> to vector<64x32xf32>
    %100 = arith.mulf %99, %98 : vector<64x32xf32>
    %101 = arith.addf %96, %100 : vector<64x32xf32>
    %102 = vector.extract_strided_slice %87 {offsets = [0, 3], sizes = [64, 1], strides = [1, 1]} : vector<64x8xf32> to vector<64x1xf32>
    %103 = vector.extract_strided_slice %12 {offsets = [0, 96], sizes = [64, 32], strides = [1, 1]} : vector<64x256xf32> to vector<64x32xf32>
    %104 = vector.broadcast %102 : vector<64x1xf32> to vector<64x32xf32>
    %105 = arith.mulf %104, %103 : vector<64x32xf32>
    %106 = arith.addf %101, %105 : vector<64x32xf32>
    %107 = vector.extract_strided_slice %87 {offsets = [0, 4], sizes = [64, 1], strides = [1, 1]} : vector<64x8xf32> to vector<64x1xf32>
    %108 = vector.extract_strided_slice %12 {offsets = [0, 128], sizes = [64, 32], strides = [1, 1]} : vector<64x256xf32> to vector<64x32xf32>
    %109 = vector.broadcast %107 : vector<64x1xf32> to vector<64x32xf32>
    %110 = arith.mulf %109, %108 : vector<64x32xf32>
    %111 = arith.addf %106, %110 : vector<64x32xf32>
    %112 = vector.extract_strided_slice %87 {offsets = [0, 5], sizes = [64, 1], strides = [1, 1]} : vector<64x8xf32> to vector<64x1xf32>
    %113 = vector.extract_strided_slice %12 {offsets = [0, 160], sizes = [64, 32], strides = [1, 1]} : vector<64x256xf32> to vector<64x32xf32>
    %114 = vector.broadcast %112 : vector<64x1xf32> to vector<64x32xf32>
    %115 = arith.mulf %114, %113 : vector<64x32xf32>
    %116 = arith.addf %111, %115 : vector<64x32xf32>
    %117 = vector.extract_strided_slice %87 {offsets = [0, 6], sizes = [64, 1], strides = [1, 1]} : vector<64x8xf32> to vector<64x1xf32>
    %118 = vector.extract_strided_slice %12 {offsets = [0, 192], sizes = [64, 32], strides = [1, 1]} : vector<64x256xf32> to vector<64x32xf32>
    %119 = vector.broadcast %117 : vector<64x1xf32> to vector<64x32xf32>
    %120 = arith.mulf %119, %118 : vector<64x32xf32>
    %121 = arith.addf %116, %120 : vector<64x32xf32>
    %122 = vector.extract_strided_slice %87 {offsets = [0, 7], sizes = [64, 1], strides = [1, 1]} : vector<64x8xf32> to vector<64x1xf32>
    %123 = vector.extract_strided_slice %12 {offsets = [0, 224], sizes = [64, 32], strides = [1, 1]} : vector<64x256xf32> to vector<64x32xf32>
    %124 = vector.broadcast %122 : vector<64x1xf32> to vector<64x32xf32>
    %125 = arith.mulf %124, %123 : vector<64x32xf32>
    %126 = arith.addf %121, %125 : vector<64x32xf32>
    %127 = vector.extract_strided_slice %16 {offsets = [0, 16], sizes = [64, 8], strides = [1, 1]} : vector<64x32xf32> to vector<64x8xf32>
    %cst_24 = arith.constant -1.000000e+30 : f32
    %128 = vector.shape_cast %20 : vector<1x8xi1> to vector<1x8xi1>
    %129 = vector.broadcast %128 : vector<1x8xi1> to vector<64x8xi1>
    %130 = vector.broadcast %cst_24 : f32 to vector<64x8xf32>
    %131 = arith.select %129, %127, %130 : vector<64x8xi1>, vector<64x8xf32>
    %cst_25 = arith.constant dense<0xFF800000> : vector<64xf32>
    %132 = vector.multi_reduction <maximumf>, %131, %cst_25 [1] : vector<64x8xf32> to vector<64xf32>
    %133 = vector.shape_cast %132 : vector<64xf32> to vector<64x1xf32>
    %134 = vector.broadcast %133 : vector<64x1xf32> to vector<64x8xf32>
    %135 = arith.subf %131, %134 : vector<64x8xf32>
    %136 = math.exp %135 : vector<64x8xf32>
    %cst_26 = arith.constant dense<0.000000e+00> : vector<64xf32>
    %137 = vector.multi_reduction <add>, %136, %cst_26 [1] : vector<64x8xf32> to vector<64xf32>
    %138 = vector.shape_cast %137 : vector<64xf32> to vector<64x1xf32>
    %139 = vector.broadcast %138 : vector<64x1xf32> to vector<64x8xf32>
    %140 = arith.divf %136, %139 : vector<64x8xf32>
    %141 = vector.extract_strided_slice %140 {offsets = [0, 0], sizes = [64, 1], strides = [1, 1]} : vector<64x8xf32> to vector<64x1xf32>
    %142 = vector.extract_strided_slice %12 {offsets = [0, 0], sizes = [64, 32], strides = [1, 1]} : vector<64x256xf32> to vector<64x32xf32>
    %143 = vector.broadcast %141 : vector<64x1xf32> to vector<64x32xf32>
    %144 = arith.mulf %143, %142 : vector<64x32xf32>
    %145 = vector.extract_strided_slice %140 {offsets = [0, 1], sizes = [64, 1], strides = [1, 1]} : vector<64x8xf32> to vector<64x1xf32>
    %146 = vector.extract_strided_slice %12 {offsets = [0, 32], sizes = [64, 32], strides = [1, 1]} : vector<64x256xf32> to vector<64x32xf32>
    %147 = vector.broadcast %145 : vector<64x1xf32> to vector<64x32xf32>
    %148 = arith.mulf %147, %146 : vector<64x32xf32>
    %149 = arith.addf %144, %148 : vector<64x32xf32>
    %150 = vector.extract_strided_slice %140 {offsets = [0, 2], sizes = [64, 1], strides = [1, 1]} : vector<64x8xf32> to vector<64x1xf32>
    %151 = vector.extract_strided_slice %12 {offsets = [0, 64], sizes = [64, 32], strides = [1, 1]} : vector<64x256xf32> to vector<64x32xf32>
    %152 = vector.broadcast %150 : vector<64x1xf32> to vector<64x32xf32>
    %153 = arith.mulf %152, %151 : vector<64x32xf32>
    %154 = arith.addf %149, %153 : vector<64x32xf32>
    %155 = vector.extract_strided_slice %140 {offsets = [0, 3], sizes = [64, 1], strides = [1, 1]} : vector<64x8xf32> to vector<64x1xf32>
    %156 = vector.extract_strided_slice %12 {offsets = [0, 96], sizes = [64, 32], strides = [1, 1]} : vector<64x256xf32> to vector<64x32xf32>
    %157 = vector.broadcast %155 : vector<64x1xf32> to vector<64x32xf32>
    %158 = arith.mulf %157, %156 : vector<64x32xf32>
    %159 = arith.addf %154, %158 : vector<64x32xf32>
    %160 = vector.extract_strided_slice %140 {offsets = [0, 4], sizes = [64, 1], strides = [1, 1]} : vector<64x8xf32> to vector<64x1xf32>
    %161 = vector.extract_strided_slice %12 {offsets = [0, 128], sizes = [64, 32], strides = [1, 1]} : vector<64x256xf32> to vector<64x32xf32>
    %162 = vector.broadcast %160 : vector<64x1xf32> to vector<64x32xf32>
    %163 = arith.mulf %162, %161 : vector<64x32xf32>
    %164 = arith.addf %159, %163 : vector<64x32xf32>
    %165 = vector.extract_strided_slice %140 {offsets = [0, 5], sizes = [64, 1], strides = [1, 1]} : vector<64x8xf32> to vector<64x1xf32>
    %166 = vector.extract_strided_slice %12 {offsets = [0, 160], sizes = [64, 32], strides = [1, 1]} : vector<64x256xf32> to vector<64x32xf32>
    %167 = vector.broadcast %165 : vector<64x1xf32> to vector<64x32xf32>
    %168 = arith.mulf %167, %166 : vector<64x32xf32>
    %169 = arith.addf %164, %168 : vector<64x32xf32>
    %170 = vector.extract_strided_slice %140 {offsets = [0, 6], sizes = [64, 1], strides = [1, 1]} : vector<64x8xf32> to vector<64x1xf32>
    %171 = vector.extract_strided_slice %12 {offsets = [0, 192], sizes = [64, 32], strides = [1, 1]} : vector<64x256xf32> to vector<64x32xf32>
    %172 = vector.broadcast %170 : vector<64x1xf32> to vector<64x32xf32>
    %173 = arith.mulf %172, %171 : vector<64x32xf32>
    %174 = arith.addf %169, %173 : vector<64x32xf32>
    %175 = vector.extract_strided_slice %140 {offsets = [0, 7], sizes = [64, 1], strides = [1, 1]} : vector<64x8xf32> to vector<64x1xf32>
    %176 = vector.extract_strided_slice %12 {offsets = [0, 224], sizes = [64, 32], strides = [1, 1]} : vector<64x256xf32> to vector<64x32xf32>
    %177 = vector.broadcast %175 : vector<64x1xf32> to vector<64x32xf32>
    %178 = arith.mulf %177, %176 : vector<64x32xf32>
    %179 = arith.addf %174, %178 : vector<64x32xf32>
    %180 = vector.extract_strided_slice %16 {offsets = [0, 24], sizes = [64, 8], strides = [1, 1]} : vector<64x32xf32> to vector<64x8xf32>
    %cst_27 = arith.constant -1.000000e+30 : f32
    %181 = vector.shape_cast %20 : vector<1x8xi1> to vector<1x8xi1>
    %182 = vector.broadcast %181 : vector<1x8xi1> to vector<64x8xi1>
    %183 = vector.broadcast %cst_27 : f32 to vector<64x8xf32>
    %184 = arith.select %182, %180, %183 : vector<64x8xi1>, vector<64x8xf32>
    %cst_28 = arith.constant dense<0xFF800000> : vector<64xf32>
    %185 = vector.multi_reduction <maximumf>, %184, %cst_28 [1] : vector<64x8xf32> to vector<64xf32>
    %186 = vector.shape_cast %185 : vector<64xf32> to vector<64x1xf32>
    %187 = vector.broadcast %186 : vector<64x1xf32> to vector<64x8xf32>
    %188 = arith.subf %184, %187 : vector<64x8xf32>
    %189 = math.exp %188 : vector<64x8xf32>
    %cst_29 = arith.constant dense<0.000000e+00> : vector<64xf32>
    %190 = vector.multi_reduction <add>, %189, %cst_29 [1] : vector<64x8xf32> to vector<64xf32>
    %191 = vector.shape_cast %190 : vector<64xf32> to vector<64x1xf32>
    %192 = vector.broadcast %191 : vector<64x1xf32> to vector<64x8xf32>
    %193 = arith.divf %189, %192 : vector<64x8xf32>
    %194 = vector.extract_strided_slice %193 {offsets = [0, 0], sizes = [64, 1], strides = [1, 1]} : vector<64x8xf32> to vector<64x1xf32>
    %195 = vector.extract_strided_slice %12 {offsets = [0, 0], sizes = [64, 32], strides = [1, 1]} : vector<64x256xf32> to vector<64x32xf32>
    %196 = vector.broadcast %194 : vector<64x1xf32> to vector<64x32xf32>
    %197 = arith.mulf %196, %195 : vector<64x32xf32>
    %198 = vector.extract_strided_slice %193 {offsets = [0, 1], sizes = [64, 1], strides = [1, 1]} : vector<64x8xf32> to vector<64x1xf32>
    %199 = vector.extract_strided_slice %12 {offsets = [0, 32], sizes = [64, 32], strides = [1, 1]} : vector<64x256xf32> to vector<64x32xf32>
    %200 = vector.broadcast %198 : vector<64x1xf32> to vector<64x32xf32>
    %201 = arith.mulf %200, %199 : vector<64x32xf32>
    %202 = arith.addf %197, %201 : vector<64x32xf32>
    %203 = vector.extract_strided_slice %193 {offsets = [0, 2], sizes = [64, 1], strides = [1, 1]} : vector<64x8xf32> to vector<64x1xf32>
    %204 = vector.extract_strided_slice %12 {offsets = [0, 64], sizes = [64, 32], strides = [1, 1]} : vector<64x256xf32> to vector<64x32xf32>
    %205 = vector.broadcast %203 : vector<64x1xf32> to vector<64x32xf32>
    %206 = arith.mulf %205, %204 : vector<64x32xf32>
    %207 = arith.addf %202, %206 : vector<64x32xf32>
    %208 = vector.extract_strided_slice %193 {offsets = [0, 3], sizes = [64, 1], strides = [1, 1]} : vector<64x8xf32> to vector<64x1xf32>
    %209 = vector.extract_strided_slice %12 {offsets = [0, 96], sizes = [64, 32], strides = [1, 1]} : vector<64x256xf32> to vector<64x32xf32>
    %210 = vector.broadcast %208 : vector<64x1xf32> to vector<64x32xf32>
    %211 = arith.mulf %210, %209 : vector<64x32xf32>
    %212 = arith.addf %207, %211 : vector<64x32xf32>
    %213 = vector.extract_strided_slice %193 {offsets = [0, 4], sizes = [64, 1], strides = [1, 1]} : vector<64x8xf32> to vector<64x1xf32>
    %214 = vector.extract_strided_slice %12 {offsets = [0, 128], sizes = [64, 32], strides = [1, 1]} : vector<64x256xf32> to vector<64x32xf32>
    %215 = vector.broadcast %213 : vector<64x1xf32> to vector<64x32xf32>
    %216 = arith.mulf %215, %214 : vector<64x32xf32>
    %217 = arith.addf %212, %216 : vector<64x32xf32>
    %218 = vector.extract_strided_slice %193 {offsets = [0, 5], sizes = [64, 1], strides = [1, 1]} : vector<64x8xf32> to vector<64x1xf32>
    %219 = vector.extract_strided_slice %12 {offsets = [0, 160], sizes = [64, 32], strides = [1, 1]} : vector<64x256xf32> to vector<64x32xf32>
    %220 = vector.broadcast %218 : vector<64x1xf32> to vector<64x32xf32>
    %221 = arith.mulf %220, %219 : vector<64x32xf32>
    %222 = arith.addf %217, %221 : vector<64x32xf32>
    %223 = vector.extract_strided_slice %193 {offsets = [0, 6], sizes = [64, 1], strides = [1, 1]} : vector<64x8xf32> to vector<64x1xf32>
    %224 = vector.extract_strided_slice %12 {offsets = [0, 192], sizes = [64, 32], strides = [1, 1]} : vector<64x256xf32> to vector<64x32xf32>
    %225 = vector.broadcast %223 : vector<64x1xf32> to vector<64x32xf32>
    %226 = arith.mulf %225, %224 : vector<64x32xf32>
    %227 = arith.addf %222, %226 : vector<64x32xf32>
    %228 = vector.extract_strided_slice %193 {offsets = [0, 7], sizes = [64, 1], strides = [1, 1]} : vector<64x8xf32> to vector<64x1xf32>
    %229 = vector.extract_strided_slice %12 {offsets = [0, 224], sizes = [64, 32], strides = [1, 1]} : vector<64x256xf32> to vector<64x32xf32>
    %230 = vector.broadcast %228 : vector<64x1xf32> to vector<64x32xf32>
    %231 = arith.mulf %230, %229 : vector<64x32xf32>
    %232 = arith.addf %227, %231 : vector<64x32xf32>
    %233 = tpu.concatenate %73, %126, %179, %232 in 1 : vector<64x32xf32>, vector<64x32xf32>, vector<64x32xf32>, vector<64x32xf32> -> vector<64x128xf32>
    %c0_30 = arith.constant 0 : index
    %c0_31 = arith.constant 0 : index
    %234 = vector.load %arg8[%c0_30, %c0_31] : memref<128x128xf32, #tpu.memory_space<vmem>>, vector<128x128xf32>
    %cst_32 = arith.constant dense<0.000000e+00> : vector<64x128xf32>
    %235 = tpu.matmul %233, %234, %cst_32 {dimension_numbers = #tpu.dot_dimension_numbers<[1], [0], [0], [1], [0, 0, 1, 1], [], []>} : vector<64x128xf32>, vector<128x128xf32>, vector<64x128xf32> -> vector<64x128xf32>
    %c0_33 = arith.constant 0 : index
    %c0_34 = arith.constant 0 : index
    %c0_35 = arith.constant 0 : index
    %236 = vector.load %arg9[%c0_33, %c0_34, %c0_35] : memref<1x64x128xf32, #tpu.memory_space<vmem>>, vector<1x64x128xf32>
    %237 = vector.shape_cast %236 : vector<1x64x128xf32> to vector<64x128xf32>
    %238 = vector.shape_cast %235 : vector<64x128xf32> to vector<1x64x128xf32>
    tpu.vector_store %arg9[%c0_33, %c0_34, %c0_35], %238 {strides = array<i32>} : memref<1x64x128xf32, #tpu.memory_space<vmem>>, vector<1x64x128xf32>,
    return
  }
  func.func @transform_0(%arg0: i32, %arg1: i32) -> (i32, i32, i32) {
    %c0_i32 = arith.constant 0 : i32
    %c0_i32_0 = arith.constant 0 : i32
    return %arg0, %arg1, %c0_i32 : i32, i32, i32
  }
  func.func @transform_1(%arg0: i32, %arg1: i32) -> (i32, i32, i32) {
    %c0_i32 = arith.constant 0 : i32
    %c0_i32_0 = arith.constant 0 : i32
    %c0_i32_1 = arith.constant 0 : i32
    return %arg0, %c0_i32, %c0_i32_0 : i32, i32, i32
  }
  func.func @transform_2(%arg0: i32, %arg1: i32) -> (i32, i32, i32) {
    %c0_i32 = arith.constant 0 : i32
    %c0_i32_0 = arith.constant 0 : i32
    %c0_i32_1 = arith.constant 0 : i32
    return %arg0, %c0_i32, %c0_i32_0 : i32, i32, i32
  }
  func.func @transform_3(%arg0: i32, %arg1: i32) -> (i32, i32) {
    %c0_i32 = arith.constant 0 : i32
    %c0_i32_0 = arith.constant 0 : i32
    %c0_i32_1 = arith.constant 0 : i32
    return %c0_i32, %c0_i32_0 : i32, i32
  }
  func.func @transform_4(%arg0: i32, %arg1: i32) -> (i32, i32) {
    %c0_i32 = arith.constant 0 : i32
    %c0_i32_0 = arith.constant 0 : i32
    %c0_i32_1 = arith.constant 0 : i32
    return %c0_i32, %c0_i32_0 : i32, i32
  }
  func.func @transform_5(%arg0: i32, %arg1: i32) -> (i32, i32) {
    %c0_i32 = arith.constant 0 : i32
    %c0_i32_0 = arith.constant 0 : i32
    %c0_i32_1 = arith.constant 0 : i32
    return %c0_i32, %c0_i32_0 : i32, i32
  }
  func.func @transform_6(%arg0: i32, %arg1: i32) -> (i32, i32) {
    %c0_i32 = arith.constant 0 : i32
    %c0_i32_0 = arith.constant 0 : i32
    %c0_i32_1 = arith.constant 0 : i32
    return %c0_i32, %c0_i32_0 : i32, i32
  }
  func.func @transform_7(%arg0: i32, %arg1: i32) -> (i32, i32, i32) {
    %c0_i32 = arith.constant 0 : i32
    %c0_i32_0 = arith.constant 0 : i32
    return %arg0, %arg1, %c0_i32 : i32, i32, i32
  }
}

</mosaic_0001>

<llo_original>
// kernel: tpu_custom_call.1
$region0: #{tpu_custom_call.1}
  #allocation0 [shape = 'u32[]', space=smem, size = 0x4, offset = 0x4, fixed_abs, tag = 'smem constant byte address 0x4 - core index']
  #allocation1 [shape = 'u32[144,128]{1,0:T(1,128)}', space=vmem, size = 0x12000, scoped, tag = 'internal scratch']
  %s0 = inlined_call_operand.vmem [shape: f32[2,64,32], index: 0, kind: input, shape index: {}]
  %s1 = inlined_call_operand.vmem [shape: f32[2,1,8], index: 1, kind: input, shape index: {}]
  %s2 = inlined_call_operand.vmem [shape: f32[2,1,256], index: 2, kind: input, shape index: {}]
  %s3 = inlined_call_operand.vmem [shape: f32[32,256], index: 3, kind: input, shape index: {}]
  %s4 = inlined_call_operand.vmem [shape: f32[1,256], index: 4, kind: input, shape index: {}]
  %s5 = inlined_call_operand.vmem [shape: f32[256,32], index: 5, kind: input, shape index: {}]
  %s6 = inlined_call_operand.vmem [shape: f32[128,128], index: 6, kind: input, shape index: {}]
  %s7 = inlined_call_operand.hbm [shape: f32[2,64,128], index: 7, kind: output, shape index: {}]
  %s8 = sld [smem:[#allocation0]]
  $region61: #{tpu_custom_call.1} parent=0
    _
  %s10 = ssub.s32 1, %s8
  %s11 = scalar_select 0, %s10, %s8
  $region1: #{tpu_custom_call.1} parent=0
    #allocation2 [shape = 'u8[65536]{0}', space=vmem, size = 0x10000, scoped, tag = 'output window, operand 0']
    #allocation3 [shape = 's32[2]{0}', space=sflag, size = 0x8, scoped, tag = 'scoped memory for tpu_custom_call.1']
    %12 = vsyncpa [#allocation3], 0
    %s13 = scalar_lea.sflag [#allocation3], 1
    %14 = vsyncpa %s13, 0
    loop: start=0, step=1, limit=4
    $region2: #{tpu_custom_call.1} parent=1 // loop_pre_header
      _
    $region3: #{tpu_custom_call.1} parent=1 // loop_header
      %s16 = sphi 0, %s20
      %p17 = scmp.ge.s32.totalorder %s16, 4
      %s23 = sphi 0, %s35
      %s24 = sphi 0, %s31
      %s25 = sphi 0, %s23
      %s26 = sphi 0, %s24
      %s27 = sphi 0, %s25
      %s28 = sphi 0, %s26
      %s40 = sphi 0, %s42
      %s43 = sphi 0, %s40
      %s44 = sphi 0, %s43
      %s60 = sphi 0, %s44
      %s66 = sphi 0, %s68
      %s69 = sphi 0, %s66
      %s70 = sphi 0, %s69
      %s86 = sphi 0, %s70
      %s92 = sphi 0, %s94
      %s95 = sphi 0, %s92
      %s96 = sphi 0, %s95
      %s112 = sphi 0, %s96
      %s116 = sphi 0, %s116
      %s118 = sphi 0, %s116
      %s119 = sphi 0, %s118
      %s133 = sphi 0, %s119
      %s137 = sphi 0, %s137
      %s139 = sphi 0, %s137
      %s140 = sphi 0, %s139
      %s154 = sphi 0, %s140
      %s158 = sphi 0, %s158
      %s160 = sphi 0, %s158
      %s161 = sphi 0, %s160
      %s175 = sphi 0, %s161
      %s179 = sphi 0, %s179
      %s181 = sphi 0, %s179
      %s182 = sphi 0, %s181
      %s196 = sphi 0, %s182
      %s204 = sphi 0, %s206
      %s207 = sphi 0, %s204
      %s208 = sphi 0, %s207
      %s224 = sphi 0, %s208
    $region4: #{tpu_custom_call.1} parent=1 // loop_header_branch
      %19 = sbr.rel (%p17) target = $region8
    $region5: #{tpu_custom_call.1} parent=1 // loop_body
      %s21 = ssub.s32 %s16, 1
      %s22 = ssub.s32 %s16, 2
      %s29 = sadd.s32 1, %s24
      %p30 = scmp.ge.s32.totalorder %s29, 1
      %s31 = scalar_select %p30, 0, %s29
      %s32 = sadd.s32 1, %s23
      %s33 = scalar_select %p30, %s32, %s23
      %p34 = scmp.ge.s32.totalorder %s33, 2
      %s35 = scalar_select %p34, 0, %s33
      %s36 = ssub.s32 %s23, %s35
      %s37 = ssub.s32 %s24, %s31
      %s38 = sor.u32 %s36, %s37
      %p39 = scmp.eq.s32.totalorder %s38, 0
      %s41 = sadd.s32 %s40, 1
      %s42 = scalar_select %p39, %s40, %s41
      %p45 = pneg %p39
      %p46 = scmp.eq.s32.totalorder %s16, 1
      %p47 = por %p45, %p46
      %p48 = scmp.ne.s32.totalorder %s40, %s43
      %p49 = scmp.eq.s32.totalorder %s16, 0
      %p50 = por %p48, %p49
      %p51 = scmp.ne.s32.totalorder %s40, %s43
      %p52 = scmp.eq.s32.totalorder %s21, 1
      %p53 = por %p51, %p52
      %p54 = scmp.ne.s32.totalorder %s43, %s44
      %p55 = scmp.eq.s32.totalorder %s21, 0
      %p56 = por %p54, %p55
      %p57 = scmp.ne.s32.totalorder %s43, %s44
      %p58 = scmp.eq.s32.totalorder %s22, 1
      %p59 = por %p57, %p58
      %p61 = scmp.ne.s32.totalorder %s44, %s60
      %p62 = scmp.eq.s32.totalorder %s22, 0
      %p63 = por %p61, %p62
      %s64 = ssub.s32 %s23, %s35
      %p65 = scmp.eq.s32.totalorder %s64, 0
      %s67 = sadd.s32 %s66, 1
      %s68 = scalar_select %p65, %s66, %s67
      %p71 = pneg %p65
      %p72 = scmp.eq.s32.totalorder %s16, 1
      %p73 = por %p71, %p72
      %p74 = scmp.ne.s32.totalorder %s66, %s69
      %p75 = scmp.eq.s32.totalorder %s16, 0
      %p76 = por %p74, %p75
      %p77 = scmp.ne.s32.totalorder %s66, %s69
      %p78 = scmp.eq.s32.totalorder %s21, 1
      %p79 = por %p77, %p78
      %p80 = scmp.ne.s32.totalorder %s69, %s70
      %p81 = scmp.eq.s32.totalorder %s21, 0
      %p82 = por %p80, %p81
      %p83 = scmp.ne.s32.totalorder %s69, %s70
      %p84 = scmp.eq.s32.totalorder %s22, 1
      %p85 = por %p83, %p84
      %p87 = scmp.ne.s32.totalorder %s70, %s86
      %p88 = scmp.eq.s32.totalorder %s22, 0
      %p89 = por %p87, %p88
      %s90 = ssub.s32 %s23, %s35
      %p91 = scmp.eq.s32.totalorder %s90, 0
      %s93 = sadd.s32 %s92, 1
      %s94 = scalar_select %p91, %s92, %s93
      %p97 = pneg %p91
      %p98 = scmp.eq.s32.totalorder %s16, 1
      %p99 = por %p97, %p98
      %p100 = scmp.ne.s32.totalorder %s92, %s95
      %p101 = scmp.eq.s32.totalorder %s16, 0
      %p102 = por %p100, %p101
      %p103 = scmp.ne.s32.totalorder %s92, %s95
      %p104 = scmp.eq.s32.totalorder %s21, 1
      %p105 = por %p103, %p104
      %p106 = scmp.ne.s32.totalorder %s95, %s96
      %p107 = scmp.eq.s32.totalorder %s21, 0
      %p108 = por %p106, %p107
      %p109 = scmp.ne.s32.totalorder %s95, %s96
      %p110 = scmp.eq.s32.totalorder %s22, 1
      %p111 = por %p109, %p110
      %p113 = scmp.ne.s32.totalorder %s96, %s112
      %p114 = scmp.eq.s32.totalorder %s22, 0
      %p115 = por %p113, %p114
      %s117 = sadd.s32 %s116, 1
      %p120 = scmp.eq.s32.totalorder %s16, 1
      %p121 = scmp.ne.s32.totalorder %s116, %s118
      %p122 = scmp.eq.s32.totalorder %s16, 0
      %p123 = por %p121, %p122
      %p124 = scmp.ne.s32.totalorder %s116, %s118
      %p125 = scmp.eq.s32.totalorder %s21, 1
      %p126 = por %p124, %p125
      %p127 = scmp.ne.s32.totalorder %s118, %s119
      %p128 = scmp.eq.s32.totalorder %s21, 0
      %p129 = por %p127, %p128
      %p130 = scmp.ne.s32.totalorder %s118, %s119
      %p131 = scmp.eq.s32.totalorder %s22, 1
      %p132 = por %p130, %p131
      %p134 = scmp.ne.s32.totalorder %s119, %s133
      %p135 = scmp.eq.s32.totalorder %s22, 0
      %p136 = por %p134, %p135
      %s138 = sadd.s32 %s137, 1
      %p141 = scmp.eq.s32.totalorder %s16, 1
      %p142 = scmp.ne.s32.totalorder %s137, %s139
      %p143 = scmp.eq.s32.totalorder %s16, 0
      %p144 = por %p142, %p143
      %p145 = scmp.ne.s32.totalorder %s137, %s139
      %p146 = scmp.eq.s32.totalorder %s21, 1
      %p147 = por %p145, %p146
      %p148 = scmp.ne.s32.totalorder %s139, %s140
      %p149 = scmp.eq.s32.totalorder %s21, 0
      %p150 = por %p148, %p149
      %p151 = scmp.ne.s32.totalorder %s139, %s140
      %p152 = scmp.eq.s32.totalorder %s22, 1
      %p153 = por %p151, %p152
      %p155 = scmp.ne.s32.totalorder %s140, %s154
      %p156 = scmp.eq.s32.totalorder %s22, 0
      %p157 = por %p155, %p156
      %s159 = sadd.s32 %s158, 1
      %p162 = scmp.eq.s32.totalorder %s16, 1
      %p163 = scmp.ne.s32.totalorder %s158, %s160
      %p164 = scmp.eq.s32.totalorder %s16, 0
      %p165 = por %p163, %p164
      %p166 = scmp.ne.s32.totalorder %s158, %s160
      %p167 = scmp.eq.s32.totalorder %s21, 1
      %p168 = por %p166, %p167
      %p169 = scmp.ne.s32.totalorder %s160, %s161
      %p170 = scmp.eq.s32.totalorder %s21, 0
      %p171 = por %p169, %p170
      %p172 = scmp.ne.s32.totalorder %s160, %s161
      %p173 = scmp.eq.s32.totalorder %s22, 1
      %p174 = por %p172, %p173
      %p176 = scmp.ne.s32.totalorder %s161, %s175
      %p177 = scmp.eq.s32.totalorder %s22, 0
      %p178 = por %p176, %p177
      %s180 = sadd.s32 %s179, 1
      %p183 = scmp.eq.s32.totalorder %s16, 1
      %p184 = scmp.ne.s32.totalorder %s179, %s181
      %p185 = scmp.eq.s32.totalorder %s16, 0
      %p186 = por %p184, %p185
      %p187 = scmp.ne.s32.totalorder %s179, %s181
      %p188 = scmp.eq.s32.totalorder %s21, 1
      %p189 = por %p187, %p188
      %p190 = scmp.ne.s32.totalorder %s181, %s182
      %p191 = scmp.eq.s32.totalorder %s21, 0
      %p192 = por %p190, %p191
      %p193 = scmp.ne.s32.totalorder %s181, %s182
      %p194 = scmp.eq.s32.totalorder %s22, 1
      %p195 = por %p193, %p194
      %p197 = scmp.ne.s32.totalorder %s182, %s196
      %p198 = scmp.eq.s32.totalorder %s22, 0
      %p199 = por %p197, %p198
      %s200 = ssub.s32 %s23, %s35
      %s201 = ssub.s32 %s24, %s31
      %s202 = sor.u32 %s200, %s201
      %p203 = scmp.eq.s32.totalorder %s202, 0
      %s205 = sadd.s32 %s204, 1
      %s206 = scalar_select %p203, %s204, %s205
      %p209 = pneg %p203
      %p210 = scmp.eq.s32.totalorder %s16, 1
      %p211 = por %p209, %p210
      %p212 = scmp.ne.s32.totalorder %s204, %s207
      %p213 = scmp.eq.s32.totalorder %s16, 0
      %p214 = por %p212, %p213
      %p215 = scmp.ne.s32.totalorder %s204, %s207
      %p216 = scmp.eq.s32.totalorder %s21, 1
      %p217 = por %p215, %p216
      %p218 = scmp.ne.s32.totalorder %s207, %s208
      %p219 = scmp.eq.s32.totalorder %s21, 0
      %p220 = por %p218, %p219
      %p221 = scmp.ne.s32.totalorder %s207, %s208
      %p222 = scmp.eq.s32.totalorder %s22, 1
      %p223 = por %p221, %p222
      %p225 = scmp.ne.s32.totalorder %s208, %s224
      %p226 = scmp.eq.s32.totalorder %s22, 0
      %p227 = por %p225, %p226
      %p228 = scmp.le.s32.totalorder 1, %s16
      %p229 = scmp.lt.s32.totalorder %s16, 3
      %p230 = pnand %p228, %p229
      %p231 = pneg %p230
      // Predicated region
      $region9: #{tpu_custom_call.1} parent=5 // pred_check
        _
      $region10: #{tpu_custom_call.1} parent=5 // pred_check_branch
        %233 = sbr.rel (%p230) target = $region12
      $region11: #{tpu_custom_call.1} parent=5 // pred_region
        %s234 = ssub.s32 %s16, 1
        // Predicated region
        $region13: #{tpu_custom_call.1} parent=11 // pred_check
          %p235 = pneg %p129
        $region14: #{tpu_custom_call.1} parent=11 // pred_check_branch
          %237 = sbr.rel (%p235) target = $region16
        $region15: #{tpu_custom_call.1} parent=11 // pred_region
          _
        $region16: #{tpu_custom_call.1} parent=11 // pred_fallthru
          _
        // Predicated region
        $region17: #{tpu_custom_call.1} parent=11 // pred_check
          %p238 = pneg %p150
        $region18: #{tpu_custom_call.1} parent=11 // pred_check_branch
          %240 = sbr.rel (%p238) target = $region20
        $region19: #{tpu_custom_call.1} parent=11 // pred_region
          _
        $region20: #{tpu_custom_call.1} parent=11 // pred_fallthru
          _
        // Predicated region
        $region21: #{tpu_custom_call.1} parent=11 // pred_check
          %p241 = pneg %p171
        $region22: #{tpu_custom_call.1} parent=11 // pred_check_branch
          %243 = sbr.rel (%p241) target = $region24
        $region23: #{tpu_custom_call.1} parent=11 // pred_region
          _
        $region24: #{tpu_custom_call.1} parent=11 // pred_fallthru
          _
        // Predicated region
        $region25: #{tpu_custom_call.1} parent=11 // pred_check
          %p244 = pneg %p192
        $region26: #{tpu_custom_call.1} parent=11 // pred_check_branch
          %246 = sbr.rel (%p244) target = $region28
        $region27: #{tpu_custom_call.1} parent=11 // pred_region
          _
        $region28: #{tpu_custom_call.1} parent=11 // pred_fallthru
          _
      $region12: #{tpu_custom_call.1} parent=5 // pred_fallthru
        _
      %p247 = scmp.lt.s32.totalorder %s16, 2
      // Predicated region
      $region29: #{tpu_custom_call.1} parent=5 // pred_check
        %p248 = pneg %p247
      $region30: #{tpu_custom_call.1} parent=5 // pred_check_branch
        %250 = sbr.rel (%p248) target = $region32
      $region31: #{tpu_custom_call.1} parent=5 // pred_region
        // Predicated region
        $region33: #{tpu_custom_call.1} parent=31 // pred_check
          %p251 = pneg %p50
        $region34: #{tpu_custom_call.1} parent=31 // pred_check_branch
          %253 = sbr.rel (%p251) target = $region36
        $region35: #{tpu_custom_call.1} parent=31 // pred_region
          %s254 = smul.u32 8, %s24
          %p255 = scmp.lt.s32.totalorder %s23, 1
          %s256 = scalar_select %p255, %s23, 1
          %p257 = scmp.lt.s32.totalorder %s254, 7
          %s258 = scalar_select %p257, %s254, 7
          %s259 = smul.addr %s256, 8
          %s260 = sadd.s32 %s258, %s259
          %s261 = smul.addr %s260, 8
          %s262 = scalar_lea.vmem %s0, %s261
          %s263 = smul.u32 8, %s24
        $region36: #{tpu_custom_call.1} parent=31 // pred_fallthru
          _
        // Predicated region
        $region37: #{tpu_custom_call.1} parent=31 // pred_check
          %p264 = pneg %p76
        $region38: #{tpu_custom_call.1} parent=31 // pred_check_branch
          %266 = sbr.rel (%p264) target = $region40
        $region39: #{tpu_custom_call.1} parent=31 // pred_region
          %p267 = scmp.lt.s32.totalorder %s23, 1
          %s268 = scalar_select %p267, %s23, 1
          %s269 = scalar_lea.vmem %s1, %s268
        $region40: #{tpu_custom_call.1} parent=31 // pred_fallthru
          _
        // Predicated region
        $region41: #{tpu_custom_call.1} parent=31 // pred_check
          %p270 = pneg %p102
        $region42: #{tpu_custom_call.1} parent=31 // pred_check_branch
          %272 = sbr.rel (%p270) target = $region44
        $region43: #{tpu_custom_call.1} parent=31 // pred_region
          %p273 = scmp.lt.s32.totalorder %s23, 1
          %s274 = scalar_select %p273, %s23, 1
          %s275 = smul.addr %s274, 2
          %s276 = scalar_lea.vmem %s2, %s275
        $region44: #{tpu_custom_call.1} parent=31 // pred_fallthru
          _
      $region32: #{tpu_custom_call.1} parent=5 // pred_fallthru
        _
      %p277 = scmp.le.s32.totalorder 1, %s16
      %p278 = scmp.lt.s32.totalorder %s16, 3
      %p279 = pnand %p277, %p278
      %p280 = pneg %p279
      // Predicated region
      $region45: #{tpu_custom_call.1} parent=5 // pred_check
        _
      $region46: #{tpu_custom_call.1} parent=5 // pred_check_branch
        %282 = sbr.rel (%p279) target = $region48
      $region47: #{tpu_custom_call.1} parent=5 // pred_region
        %s283 = ssub.s32 %s16, 1
        %s284 = smul.u32 8, %s26
        %p285 = scmp.lt.s32.totalorder %s25, 1
        %s286 = scalar_select %p285, %s25, 1
        %p287 = scmp.lt.s32.totalorder %s284, 7
        %s288 = scalar_select %p287, %s284, 7
        %s289 = smul.addr %s286, 8
        %s290 = sadd.s32 %s288, %s289
        %s291 = smul.addr %s290, 8
        %s292 = scalar_lea.vmem %s0, %s291
        %p293 = pneg %p56
        %p294 = pneg %p53
        %p295 = scmp.lt.s32.totalorder %s25, 1
        %s296 = scalar_select %p295, %s25, 1
        %s297 = scalar_lea.vmem %s1, %s296
        %p298 = pneg %p82
        %p299 = pneg %p79
        %p300 = scmp.lt.s32.totalorder %s25, 1
        %s301 = scalar_select %p300, %s25, 1
        %s302 = smul.addr %s301, 2
        %s303 = scalar_lea.vmem %s2, %s302
        %p304 = pneg %p108
        %p305 = pneg %p105
        %p306 = pneg %p129
        %p307 = pneg %p126
        %p308 = pneg %p150
        %p309 = pneg %p147
        %p310 = pneg %p171
        %p311 = pneg %p168
        %p312 = pneg %p192
        %p313 = pneg %p189
        %p314 = pneg %p220
        %p315 = pneg %p217
        %s316 = sand.u32 %s207, 1
        %s317 = scalar_lea.sflag [#allocation3], %s316
        %s318 = sand.u32 %s207, 1
        %s319 = smul.addr %s318, 64
        %s320 = scalar_lea.vmem [#allocation2], %s319
        %s321 = smul.u32 8, %s26
        %p322 = scmp.lt.s32.totalorder %s25, 1
        %s323 = scalar_select %p322, %s25, 1
        %p324 = scmp.lt.s32.totalorder %s321, 7
        %s325 = scalar_select %p324, %s321, 7
        %s326 = smul.addr %s323, 8
        %s327 = sadd.s32 %s325, %s326
        %s328 = smul.addr %s327, 8
        %s329 = scalar_lea.vmem %s0, %s328
        %s330 = smul.u32 8, %s26
        %p331 = scmp.lt.s32.totalorder %s25, 1
        %s332 = scalar_select %p331, %s25, 1
        %s333 = scalar_lea.vmem %s1, %s332
        %p334 = scmp.lt.s32.totalorder %s25, 1
        %s335 = scalar_select %p334, %s25, 1
        %s336 = smul.addr %s335, 2
        %s337 = scalar_lea.vmem %s2, %s336
        %s338 = smul.u32 8, %s26
        %v339 = vld [vmem:[%s329] sm:$0xff]
        %v340 = vld [vmem:[%s329 + $0x8] sm:$0xff]
        %v341 = vld [vmem:[%s329 + $0x10] sm:$0xff]
        %v342 = vld [vmem:[%s329 + $0x18] sm:$0xff]
        %v343 = vld [vmem:[%s329 + $0x20] sm:$0xff]
        %v344 = vld [vmem:[%s329 + $0x28] sm:$0xff]
        %v345 = vld [vmem:[%s329 + $0x30] sm:$0xff]
        %v346 = vld [vmem:[%s329 + $0x38] sm:$0xff]
        %v347 = vld [vmem:[%s3] sm:$0xff]
        %v348 = vld [vmem:[%s3 + $0x8] sm:$0xff]
        %v349 = vld [vmem:[%s3 + $0x10] sm:$0xff]
        %v350 = vld [vmem:[%s3 + $0x18] sm:$0xff]
        %v351 = vld [vmem:[%s3 + $0x20] sm:$0xff]
        %v352 = vld [vmem:[%s3 + $0x28] sm:$0xff]
        %v353 = vld [vmem:[%s3 + $0x30] sm:$0xff]
        %v354 = vld [vmem:[%s3 + $0x38] sm:$0xff]
        %v355 = vld [vmem:[%s4] sm:$0x3]
        %v357 = vlaneseq
        %v358 = vshrl.u32 %v357, 7
        %v359 = vsub.s32 0, %v358
        %v360 = vrot.slane %v355, %v359
        %v361 = vlaneseq
        %v362 = vshrl.u32 %v361, 7
        %v363 = vsub.s32 1, %v362
        %v364 = vrot.slane %v355, %v363
        %vm367 = vcmask 261120
        %v369 = vsel %vm367, %v339, 0
        %v372 = vsel %vm367, %v340, 0
        %v375 = vsel %vm367, %v341, 0
        %v378 = vsel %vm367, %v342, 0
        %v381 = vsel %vm367, %v343, 0
        %v384 = vsel %vm367, %v344, 0
        %v387 = vsel %vm367, %v345, 0
        %v390 = vsel %vm367, %v346, 0
        %392 = vmatprep.subr.mxu0 %v348
        %393 = vmatpush1.msra.mxu0 %v347
        %394 = vmatprep.subr.mxu0 %v350
        %395 = vmatpush1.msra.mxu0 %v349
        %396 = vmatprep.subr.mxu0 %v352
        %397 = vmatpush1.msra.mxu0 %v351
        %398 = vmatprep.subr.mxu0 %v354
        %399 = vmatpush1.msra.mxu0 %v353
        %400 = vmatprep.subr.mxu0 0.0
        %401 = vmatpush1.msra.mxu0 0.0
        %402 = vmatprep.subr.mxu0 0.0
        %403 = vmatpush1.msra.mxu0 0.0
        %404 = vmatprep.subr.mxu0 0.0
        %405 = vmatpush1.msra.mxu0 0.0
        %406 = vmatprep.subr.mxu0 0.0
        %407 = vmatpush1.msra.mxu0 0.0
        %408 = vmatprep.subr.mxu0 0.0
        %409 = vmatpush1.msra.mxu0 0.0
        %410 = vmatprep.subr.mxu0 0.0
        %411 = vmatpush1.msra.mxu0 0.0
        %412 = vmatprep.subr.mxu0 0.0
        %413 = vmatpush1.msra.mxu0 0.0
        %414 = vmatprep.subr.mxu0 0.0
        %415 = vmatpush1.msra.mxu0 0.0
        %416 = vmatprep.subr.mxu0 0.0
        %417 = vmatpush1.msra.mxu0 0.0
        %418 = vmatprep.subr.mxu0 0.0
        %419 = vmatpush1.msra.mxu0 0.0
        %420 = vmatprep.subr.mxu0 0.0
        %421 = vmatpush1.msra.mxu0 0.0
        %422 = vmatprep.subr.mxu0 0.0
        %423 = vmatpush1.msra.mxu0 0.0
        %424 = vmatprep.subr.mxu0 0.0
        %425 = vmatpush1.msra.mxu0 0.0
        %426 = vmatprep.subr.mxu0 0.0
        %427 = vmatpush1.msra.mxu0 0.0
        %428 = vmatprep.subr.mxu0 0.0
        %429 = vmatpush1.msra.mxu0 0.0
        %430 = vmatprep.subr.mxu0 0.0
        %431 = vmatpush1.msra.mxu0 0.0
        %432 = vmatprep.subr.mxu0 0.0
        %433 = vmatpush1.msra.mxu0 0.0
        %434 = vmatprep.subr.mxu0 0.0
        %435 = vmatpush1.msra.mxu0 0.0
        %436 = vmatprep.subr.mxu0 0.0
        %437 = vmatpush1.msra.mxu0 0.0
        %438 = vmatprep.subr.mxu0 0.0
        %439 = vmatpush1.msra.mxu0 0.0
        %440 = vmatprep.subr.mxu0 0.0
        %441 = vmatpush1.msra.mxu0 0.0
        %442 = vmatprep.subr.mxu0 0.0
        %443 = vmatpush1.msra.mxu0 0.0
        %444 = vmatprep.subr.mxu0 0.0
        %445 = vmatpush1.msra.mxu0 0.0
        %446 = vmatprep.subr.mxu0 0.0
        %447 = vmatpush1.msra.mxu0 0.0
        %448 = vmatprep.subr.mxu0 0.0
        %449 = vmatpush1.msra.mxu0 0.0
        %450 = vmatprep.subr.mxu0 0.0
        %451 = vmatpush1.msra.mxu0 0.0
        %452 = vmatprep.subr.mxu0 0.0
        %453 = vmatpush1.msra.mxu0 0.0
        %454 = vmatprep.subr.mxu0 0.0
        %455 = vmatpush1.msra.mxu0 0.0
        %456 = vmatprep.mubr.f32.mxu0 0.0
        %457 = vmatmul.mubr.f32.gmra.mrb[0].mxu0 %v369
        %v458 = vpop.f32.mrb[0].mxu0
        %v459 = vadd.f32 %v360, %v458
        %v460 = vpop.f32.mrb[0].mxu0
        %v461 = vadd.f32 %v364, %v460
        %462 = vmatprep.mubr.f32.mxu0 0.0
        %463 = vmatmul.mubr.f32.gmra.mrb[0].mxu0 %v372
        %v464 = vpop.f32.mrb[0].mxu0
        %v465 = vadd.f32 %v360, %v464
        %v466 = vpop.f32.mrb[0].mxu0
        %v467 = vadd.f32 %v364, %v466
        %468 = vmatprep.mubr.f32.mxu0 0.0
        %469 = vmatmul.mubr.f32.gmra.mrb[0].mxu0 %v375
        %v470 = vpop.f32.mrb[0].mxu0
        %v471 = vadd.f32 %v360, %v470
        %v472 = vpop.f32.mrb[0].mxu0
        %v473 = vadd.f32 %v364, %v472
        %474 = vmatprep.mubr.f32.mxu0 0.0
        %475 = vmatmul.mubr.f32.gmra.mrb[0].mxu0 %v378
        %v476 = vpop.f32.mrb[0].mxu0
        %v477 = vadd.f32 %v360, %v476
        %v478 = vpop.f32.mrb[0].mxu0
        %v479 = vadd.f32 %v364, %v478
        %480 = vmatprep.mubr.f32.mxu0 0.0
        %481 = vmatmul.mubr.f32.gmra.mrb[0].mxu0 %v381
        %v482 = vpop.f32.mrb[0].mxu0
        %v483 = vadd.f32 %v360, %v482
        %v484 = vpop.f32.mrb[0].mxu0
        %v485 = vadd.f32 %v364, %v484
        %486 = vmatprep.mubr.f32.mxu0 0.0
        %487 = vmatmul.mubr.f32.gmra.mrb[0].mxu0 %v384
        %v488 = vpop.f32.mrb[0].mxu0
        %v489 = vadd.f32 %v360, %v488
        %v490 = vpop.f32.mrb[0].mxu0
        %v491 = vadd.f32 %v364, %v490
        %492 = vmatprep.mubr.f32.mxu0 0.0
        %493 = vmatmul.mubr.f32.gmra.mrb[0].mxu0 %v387
        %v494 = vpop.f32.mrb[0].mxu0
        %v495 = vadd.f32 %v360, %v494
        %v496 = vpop.f32.mrb[0].mxu0
        %v497 = vadd.f32 %v364, %v496
        %498 = vmatprep.mubr.f32.mxu0 0.0
        %499 = vmatmul.mubr.f32.gmra.mrb[0].mxu0 %v390
        %v500 = vpop.f32.mrb[0].mxu0
        %v501 = vadd.f32 %v360, %v500
        %v502 = vpop.f32.mrb[0].mxu0
        %v503 = vadd.f32 %v364, %v502
        %504 = vdwg.mxu0
        %v505 = vmax.f32 %v459, 0.0
        %v506 = vmax.f32 %v461, 0.0
        %v507 = vmax.f32 %v465, 0.0
        %v508 = vmax.f32 %v467, 0.0
        %v509 = vmax.f32 %v471, 0.0
        %v510 = vmax.f32 %v473, 0.0
        %v511 = vmax.f32 %v477, 0.0
        %v512 = vmax.f32 %v479, 0.0
        %v513 = vmax.f32 %v483, 0.0
        %v514 = vmax.f32 %v485, 0.0
        %v515 = vmax.f32 %v489, 0.0
        %v516 = vmax.f32 %v491, 0.0
        %v517 = vmax.f32 %v495, 0.0
        %v518 = vmax.f32 %v497, 0.0
        %v519 = vmax.f32 %v501, 0.0
        %v520 = vmax.f32 %v503, 0.0
        %v521 = vld [vmem:[%s337] sm:$0x3]
        %v523 = vlaneseq
        %v524 = vshrl.u32 %v523, 7
        %v525 = vsub.s32 0, %v524
        %v526 = vrot.slane %v521, %v525
        %v527 = vlaneseq
        %v528 = vshrl.u32 %v527, 7
        %v529 = vsub.s32 1, %v528
        %v530 = vrot.slane %v521, %v529
        %v533 = vadd.f32 %v505, %v526
        %v534 = vadd.f32 %v506, %v530
        %v535 = vadd.f32 %v507, %v526
        %v536 = vadd.f32 %v508, %v530
        %v537 = vadd.f32 %v509, %v526
        %v538 = vadd.f32 %v510, %v530
        %v539 = vadd.f32 %v511, %v526
        %v540 = vadd.f32 %v512, %v530
        %v541 = vadd.f32 %v513, %v526
        %v542 = vadd.f32 %v514, %v530
        %v543 = vadd.f32 %v515, %v526
        %v544 = vadd.f32 %v516, %v530
        %v545 = vadd.f32 %v517, %v526
        %v546 = vadd.f32 %v518, %v530
        %v547 = vadd.f32 %v519, %v526
        %v548 = vadd.f32 %v520, %v530
        %v549 = vld [vmem:[%s5] sm:$0xff]
        %v550 = vld [vmem:[%s5 + $0x8] sm:$0xff]
        %v551 = vld [vmem:[%s5 + $0x10] sm:$0xff]
        %v552 = vld [vmem:[%s5 + $0x18] sm:$0xff]
        %v553 = vld [vmem:[%s5 + $0x20] sm:$0xff]
        %v554 = vld [vmem:[%s5 + $0x28] sm:$0xff]
        %v555 = vld [vmem:[%s5 + $0x30] sm:$0xff]
        %v556 = vld [vmem:[%s5 + $0x38] sm:$0xff]
        %v557 = vld [vmem:[%s5 + $0x40] sm:$0xff]
        %v558 = vld [vmem:[%s5 + $0x48] sm:$0xff]
        %v559 = vld [vmem:[%s5 + $0x50] sm:$0xff]
        %v560 = vld [vmem:[%s5 + $0x58] sm:$0xff]
        %v561 = vld [vmem:[%s5 + $0x60] sm:$0xff]
        %v562 = vld [vmem:[%s5 + $0x68] sm:$0xff]
        %v563 = vld [vmem:[%s5 + $0x70] sm:$0xff]
        %v564 = vld [vmem:[%s5 + $0x78] sm:$0xff]
        %v565 = vld [vmem:[%s5 + $0x80] sm:$0xff]
        %v566 = vld [vmem:[%s5 + $0x88] sm:$0xff]
        %v567 = vld [vmem:[%s5 + $0x90] sm:$0xff]
        %v568 = vld [vmem:[%s5 + $0x98] sm:$0xff]
        %v569 = vld [vmem:[%s5 + $0xa0] sm:$0xff]
        %v570 = vld [vmem:[%s5 + $0xa8] sm:$0xff]
        %v571 = vld [vmem:[%s5 + $0xb0] sm:$0xff]
        %v572 = vld [vmem:[%s5 + $0xb8] sm:$0xff]
        %v573 = vld [vmem:[%s5 + $0xc0] sm:$0xff]
        %v574 = vld [vmem:[%s5 + $0xc8] sm:$0xff]
        %v575 = vld [vmem:[%s5 + $0xd0] sm:$0xff]
        %v576 = vld [vmem:[%s5 + $0xd8] sm:$0xff]
        %v577 = vld [vmem:[%s5 + $0xe0] sm:$0xff]
        %v578 = vld [vmem:[%s5 + $0xe8] sm:$0xff]
        %v579 = vld [vmem:[%s5 + $0xf0] sm:$0xff]
        %v580 = vld [vmem:[%s5 + $0xf8] sm:$0xff]
        %581 = vmatprep.subr.mxu0 0.0
        %582 = vmatpush1.msra.mxu0 %v549
        %583 = vmatprep.subr.mxu0 0.0
        %584 = vmatpush1.msra.mxu0 %v550
        %585 = vmatprep.subr.mxu0 0.0
        %586 = vmatpush1.msra.mxu0 %v551
        %587 = vmatprep.subr.mxu0 0.0
        %588 = vmatpush1.msra.mxu0 %v552
        %589 = vmatprep.subr.mxu0 0.0
        %590 = vmatpush1.msra.mxu0 %v553
        %591 = vmatprep.subr.mxu0 0.0
        %592 = vmatpush1.msra.mxu0 %v554
        %593 = vmatprep.subr.mxu0 0.0
        %594 = vmatpush1.msra.mxu0 %v555
        %595 = vmatprep.subr.mxu0 0.0
        %596 = vmatpush1.msra.mxu0 %v556
        %597 = vmatprep.subr.mxu0 0.0
        %598 = vmatpush1.msra.mxu0 %v557
        %599 = vmatprep.subr.mxu0 0.0
        %600 = vmatpush1.msra.mxu0 %v558
        %601 = vmatprep.subr.mxu0 0.0
        %602 = vmatpush1.msra.mxu0 %v559
        %603 = vmatprep.subr.mxu0 0.0
        %604 = vmatpush1.msra.mxu0 %v560
        %605 = vmatprep.subr.mxu0 0.0
        %606 = vmatpush1.msra.mxu0 %v561
        %607 = vmatprep.subr.mxu0 0.0
        %608 = vmatpush1.msra.mxu0 %v562
        %609 = vmatprep.subr.mxu0 0.0
        %610 = vmatpush1.msra.mxu0 %v563
        %611 = vmatprep.subr.mxu0 0.0
        %612 = vmatpush1.msra.mxu0 %v564
        %613 = vmatprep.subr.mxu0 0.0
        %614 = vmatpush1.msra.mxu0 %v565
        %615 = vmatprep.subr.mxu0 0.0
        %616 = vmatpush1.msra.mxu0 %v566
        %617 = vmatprep.subr.mxu0 0.0
        %618 = vmatpush1.msra.mxu0 %v567
        %619 = vmatprep.subr.mxu0 0.0
        %620 = vmatpush1.msra.mxu0 %v568
        %621 = vmatprep.subr.mxu0 0.0
        %622 = vmatpush1.msra.mxu0 %v569
        %623 = vmatprep.subr.mxu0 0.0
        %624 = vmatpush1.msra.mxu0 %v570
        %625 = vmatprep.subr.mxu0 0.0
        %626 = vmatpush1.msra.mxu0 %v571
        %627 = vmatprep.subr.mxu0 0.0
        %628 = vmatpush1.msra.mxu0 %v572
        %629 = vmatprep.subr.mxu0 0.0
        %630 = vmatpush1.msra.mxu0 %v573
        %631 = vmatprep.subr.mxu0 0.0
        %632 = vmatpush1.msra.mxu0 %v574
        %633 = vmatprep.subr.mxu0 0.0
        %634 = vmatpush1.msra.mxu0 %v575
        %635 = vmatprep.subr.mxu0 0.0
        %636 = vmatpush1.msra.mxu0 %v576
        %637 = vmatprep.subr.mxu0 0.0
        %638 = vmatpush1.msra.mxu0 %v577
        %639 = vmatprep.subr.mxu0 0.0
        %640 = vmatpush1.msra.mxu0 %v578
        %641 = vmatprep.subr.mxu0 0.0
        %642 = vmatpush1.msra.mxu0 %v579
        %643 = vmatprep.subr.mxu0 0.0
        %644 = vmatpush1.msra.mxu0 %v580
        %645 = vmatprep.mubr.f32.mxu0 %v534
        %646 = vmatmul.mubr.f32.gmra.mrb[0].mxu0 %v533
        %v647 = vpop.f32.mrb[0].mxu0
        %v648 = vadd.f32 0.0, %v647
        %v649 = vpop.f32.mrb[0].mxu0
        %650 = vmatprep.mubr.f32.mxu0 %v536
        %651 = vmatmul.mubr.f32.gmra.mrb[0].mxu0 %v535
        %v652 = vpop.f32.mrb[0].mxu0
        %v653 = vadd.f32 0.0, %v652
        %v654 = vpop.f32.mrb[0].mxu0
        %655 = vmatprep.mubr.f32.mxu0 %v538
        %656 = vmatmul.mubr.f32.gmra.mrb[0].mxu0 %v537
        %v657 = vpop.f32.mrb[0].mxu0
        %v658 = vadd.f32 0.0, %v657
        %v659 = vpop.f32.mrb[0].mxu0
        %660 = vmatprep.mubr.f32.mxu0 %v540
        %661 = vmatmul.mubr.f32.gmra.mrb[0].mxu0 %v539
        %v662 = vpop.f32.mrb[0].mxu0
        %v663 = vadd.f32 0.0, %v662
        %v664 = vpop.f32.mrb[0].mxu0
        %665 = vmatprep.mubr.f32.mxu0 %v542
        %666 = vmatmul.mubr.f32.gmra.mrb[0].mxu0 %v541
        %v667 = vpop.f32.mrb[0].mxu0
        %v668 = vadd.f32 0.0, %v667
        %v669 = vpop.f32.mrb[0].mxu0
        %670 = vmatprep.mubr.f32.mxu0 %v544
        %671 = vmatmul.mubr.f32.gmra.mrb[0].mxu0 %v543
        %v672 = vpop.f32.mrb[0].mxu0
        %v673 = vadd.f32 0.0, %v672
        %v674 = vpop.f32.mrb[0].mxu0
        %675 = vmatprep.mubr.f32.mxu0 %v546
        %676 = vmatmul.mubr.f32.gmra.mrb[0].mxu0 %v545
        %v677 = vpop.f32.mrb[0].mxu0
        %v678 = vadd.f32 0.0, %v677
        %v679 = vpop.f32.mrb[0].mxu0
        %680 = vmatprep.mubr.f32.mxu0 %v548
        %681 = vmatmul.mubr.f32.gmra.mrb[0].mxu0 %v547
        %v682 = vpop.f32.mrb[0].mxu0
        %v683 = vadd.f32 0.0, %v682
        %v684 = vpop.f32.mrb[0].mxu0
        %685 = vdwg.mxu0
        %v686 = vmul.f32 %v648, 0.17677669
        %v687 = vmul.f32 %v653, 0.17677669
        %v688 = vmul.f32 %v658, 0.17677669
        %v689 = vmul.f32 %v663, 0.17677669
        %v690 = vmul.f32 %v668, 0.17677669
        %v691 = vmul.f32 %v673, 0.17677669
        %v692 = vmul.f32 %v678, 0.17677669
        %v693 = vmul.f32 %v683, 0.17677669
        %v694 = vld [vmem:[%s333] sm:$0x1]
        %vm695 = vcmp.gt.f32.partialorder %v694, 0.5
        %v696 = vsel %vm695, 1, 0
        %v697 = vlaneseq
        %v698 = vshrl.u32 %v697, 7
        %v699 = vsub.s32 0, %v698
        %v700 = vrot.slane %v696, %v699
        %vm701 = vcmp.eq.s32.totalorder %v700, 1
        %v702 = vsel %vm701, %v686, -1e+30
        %v703 = vsel %vm701, %v687, -1e+30
        %v704 = vsel %vm701, %v688, -1e+30
        %v705 = vsel %vm701, %v689, -1e+30
        %v706 = vsel %vm701, %v690, -1e+30
        %v707 = vsel %vm701, %v691, -1e+30
        %v708 = vsel %vm701, %v692, -1e+30
        %v709 = vsel %vm701, %v693, -1e+30
        %vm710 = vcmask 64512
        %v711 = vsel %vm710, %v702, -inf
        %712 = vmax.xlane.f32.xlu0 %v711
        %v713 = vpop.xlane.xlu0 %712
        %v714 = vsel %vm710, %v703, -inf
        %715 = vmax.xlane.f32.xlu0 %v714
        %v716 = vpop.xlane.xlu0 %715
        %v717 = vsel %vm710, %v704, -inf
        %718 = vmax.xlane.f32.xlu0 %v717
        %v719 = vpop.xlane.xlu0 %718
        %v720 = vsel %vm710, %v705, -inf
        %721 = vmax.xlane.f32.xlu0 %v720
        %v722 = vpop.xlane.xlu0 %721
        %v723 = vsel %vm710, %v706, -inf
        %724 = vmax.xlane.f32.xlu0 %v723
        %v725 = vpop.xlane.xlu0 %724
        %v726 = vsel %vm710, %v707, -inf
        %727 = vmax.xlane.f32.xlu0 %v726
        %v728 = vpop.xlane.xlu0 %727
        %v729 = vsel %vm710, %v708, -inf
        %730 = vmax.xlane.f32.xlu0 %v729
        %v731 = vpop.xlane.xlu0 %730
        %v732 = vsel %vm710, %v709, -inf
        %733 = vmax.xlane.f32.xlu0 %v732
        %v734 = vpop.xlane.xlu0 %733
        %v735 = vsub.f32 %v702, %v713
        %v736 = vsub.f32 %v703, %v716
        %v737 = vsub.f32 %v704, %v719
        %v738 = vsub.f32 %v705, %v722
        %v739 = vsub.f32 %v706, %v725
        %v740 = vsub.f32 %v707, %v728
        %v741 = vsub.f32 %v708, %v731
        %v742 = vsub.f32 %v709, %v734
        %v743 = vmul.f32 %v735, 1.442695
        %v744 = vpow.pop %v743
        %v745 = vmul.f32 %v736, 1.442695
        %v746 = vpow.pop %v745
        %v747 = vmul.f32 %v737, 1.442695
        %v748 = vpow.pop %v747
        %v749 = vmul.f32 %v738, 1.442695
        %v750 = vpow.pop %v749
        %v751 = vmul.f32 %v739, 1.442695
        %v752 = vpow.pop %v751
        %v753 = vmul.f32 %v740, 1.442695
        %v754 = vpow.pop %v753
        %v755 = vmul.f32 %v741, 1.442695
        %v756 = vpow.pop %v755
        %v757 = vmul.f32 %v742, 1.442695
        %v758 = vpow.pop %v757
        %v759 = vsel %vm710, %v744, 0.0
        %760 = vadd.xlane.f32.xlu0 %v759
        %v761 = vpop.xlane.xlu0 %760
        %v762 = vsel %vm710, %v746, 0.0
        %763 = vadd.xlane.f32.xlu0 %v762
        %v764 = vpop.xlane.xlu0 %763
        %v765 = vsel %vm710, %v748, 0.0
        %766 = vadd.xlane.f32.xlu0 %v765
        %v767 = vpop.xlane.xlu0 %766
        %v768 = vsel %vm710, %v750, 0.0
        %769 = vadd.xlane.f32.xlu0 %v768
        %v770 = vpop.xlane.xlu0 %769
        %v771 = vsel %vm710, %v752, 0.0
        %772 = vadd.xlane.f32.xlu0 %v771
        %v773 = vpop.xlane.xlu0 %772
        %v774 = vsel %vm710, %v754, 0.0
        %775 = vadd.xlane.f32.xlu0 %v774
        %v776 = vpop.xlane.xlu0 %775
        %v777 = vsel %vm710, %v756, 0.0
        %778 = vadd.xlane.f32.xlu0 %v777
        %v779 = vpop.xlane.xlu0 %778
        %v780 = vsel %vm710, %v758, 0.0
        %781 = vadd.xlane.f32.xlu0 %v780
        %v782 = vpop.xlane.xlu0 %781
        %v783 = vrcp.pop %v761
        %v784 = vmul.f32 %v744, %v783
        %v785 = vrcp.pop %v764
        %v786 = vmul.f32 %v746, %v785
        %v787 = vrcp.pop %v767
        %v788 = vmul.f32 %v748, %v787
        %v789 = vrcp.pop %v770
        %v790 = vmul.f32 %v750, %v789
        %v791 = vrcp.pop %v773
        %v792 = vmul.f32 %v752, %v791
        %v793 = vrcp.pop %v776
        %v794 = vmul.f32 %v754, %v793
        %v795 = vrcp.pop %v779
        %v796 = vmul.f32 %v756, %v795
        %v797 = vrcp.pop %v782
        %v798 = vmul.f32 %v758, %v797
        %800 = vset.pattern.permute.xlu0 0
        %801 = vperm.xlu0 %800, %v784
        %v802 = vpop.permute.xlu0 %801
        %805 = vset.pattern.permute.xlu0 0
        %806 = vperm.xlu0 %805, %v786
        %v807 = vpop.permute.xlu0 %806
        %810 = vset.pattern.permute.xlu0 0
        %811 = vperm.xlu0 %810, %v788
        %v812 = vpop.permute.xlu0 %811
        %815 = vset.pattern.permute.xlu0 0
        %816 = vperm.xlu0 %815, %v790
        %v817 = vpop.permute.xlu0 %816
        %820 = vset.pattern.permute.xlu0 0
        %821 = vperm.xlu0 %820, %v792
        %v822 = vpop.permute.xlu0 %821
        %825 = vset.pattern.permute.xlu0 0
        %826 = vperm.xlu0 %825, %v794
        %v827 = vpop.permute.xlu0 %826
        %830 = vset.pattern.permute.xlu0 0
        %831 = vperm.xlu0 %830, %v796
        %v832 = vpop.permute.xlu0 %831
        %835 = vset.pattern.permute.xlu0 0
        %836 = vperm.xlu0 %835, %v798
        %v837 = vpop.permute.xlu0 %836
        %v839 = vmul.f32 %v802, %v533
        %v840 = vmul.f32 %v807, %v535
        %v841 = vmul.f32 %v812, %v537
        %v842 = vmul.f32 %v817, %v539
        %v843 = vmul.f32 %v822, %v541
        %v844 = vmul.f32 %v827, %v543
        %v845 = vmul.f32 %v832, %v545
        %v846 = vmul.f32 %v837, %v547
        %847 = vset.pattern.permute.xlu0 1
        %848 = vperm.xlu0 %847, %v784
        %v849 = vpop.permute.xlu0 %848
        %851 = vset.pattern.permute.xlu0 1
        %852 = vperm.xlu0 %851, %v786
        %v853 = vpop.permute.xlu0 %852
        %855 = vset.pattern.permute.xlu0 1
        %856 = vperm.xlu0 %855, %v788
        %v857 = vpop.permute.xlu0 %856
        %859 = vset.pattern.permute.xlu0 1
        %860 = vperm.xlu0 %859, %v790
        %v861 = vpop.permute.xlu0 %860
        %863 = vset.pattern.permute.xlu0 1
        %864 = vperm.xlu0 %863, %v792
        %v865 = vpop.permute.xlu0 %864
        %867 = vset.pattern.permute.xlu0 1
        %868 = vperm.xlu0 %867, %v794
        %v869 = vpop.permute.xlu0 %868
        %871 = vset.pattern.permute.xlu0 1
        %872 = vperm.xlu0 %871, %v796
        %v873 = vpop.permute.xlu0 %872
        %875 = vset.pattern.permute.xlu0 1
        %876 = vperm.xlu0 %875, %v798
        %v877 = vpop.permute.xlu0 %876
        %v879 = vmul.f32 %v849, %v533
        %v880 = vmul.f32 %v853, %v535
        %v881 = vmul.f32 %v857, %v537
        %v882 = vmul.f32 %v861, %v539
        %v883 = vmul.f32 %v865, %v541
        %v884 = vmul.f32 %v869, %v543
        %v885 = vmul.f32 %v873, %v545
        %v886 = vmul.f32 %v877, %v547
        %895 = vrot.lane.b32.xlu0 %v879, 96
        %v896 = vpop.permute.xlu0 %895
        %897 = vrot.lane.b32.xlu0 %v880, 96
        %v898 = vpop.permute.xlu0 %897
        %899 = vrot.lane.b32.xlu0 %v881, 96
        %v900 = vpop.permute.xlu0 %899
        %901 = vrot.lane.b32.xlu0 %v882, 96
        %v902 = vpop.permute.xlu0 %901
        %903 = vrot.lane.b32.xlu0 %v883, 96
        %v904 = vpop.permute.xlu0 %903
        %905 = vrot.lane.b32.xlu0 %v884, 96
        %v906 = vpop.permute.xlu0 %905
        %907 = vrot.lane.b32.xlu0 %v885, 96
        %v908 = vpop.permute.xlu0 %907
        %909 = vrot.lane.b32.xlu0 %v886, 96
        %v910 = vpop.permute.xlu0 %909
        %v919 = vadd.f32 %v839, %v896
        %v920 = vadd.f32 %v840, %v898
        %v921 = vadd.f32 %v841, %v900
        %v922 = vadd.f32 %v842, %v902
        %v923 = vadd.f32 %v843, %v904
        %v924 = vadd.f32 %v844, %v906
        %v925 = vadd.f32 %v845, %v908
        %v926 = vadd.f32 %v846, %v910
        %927 = vset.pattern.permute.xlu0 2
        %928 = vperm.xlu0 %927, %v784
        %v929 = vpop.permute.xlu0 %928
        %931 = vset.pattern.permute.xlu0 2
        %932 = vperm.xlu0 %931, %v786
        %v933 = vpop.permute.xlu0 %932
        %935 = vset.pattern.permute.xlu0 2
        %936 = vperm.xlu0 %935, %v788
        %v937 = vpop.permute.xlu0 %936
        %939 = vset.pattern.permute.xlu0 2
        %940 = vperm.xlu0 %939, %v790
        %v941 = vpop.permute.xlu0 %940
        %943 = vset.pattern.permute.xlu0 2
        %944 = vperm.xlu0 %943, %v792
        %v945 = vpop.permute.xlu0 %944
        %947 = vset.pattern.permute.xlu0 2
        %948 = vperm.xlu0 %947, %v794
        %v949 = vpop.permute.xlu0 %948
        %951 = vset.pattern.permute.xlu0 2
        %952 = vperm.xlu0 %951, %v796
        %v953 = vpop.permute.xlu0 %952
        %955 = vset.pattern.permute.xlu0 2
        %956 = vperm.xlu0 %955, %v798
        %v957 = vpop.permute.xlu0 %956
        %v959 = vmul.f32 %v929, %v533
        %v960 = vmul.f32 %v933, %v535
        %v961 = vmul.f32 %v937, %v537
        %v962 = vmul.f32 %v941, %v539
        %v963 = vmul.f32 %v945, %v541
        %v964 = vmul.f32 %v949, %v543
        %v965 = vmul.f32 %v953, %v545
        %v966 = vmul.f32 %v957, %v547
        %975 = vrot.lane.b32.xlu0 %v959, 64
        %v976 = vpop.permute.xlu0 %975
        %977 = vrot.lane.b32.xlu0 %v960, 64
        %v978 = vpop.permute.xlu0 %977
        %979 = vrot.lane.b32.xlu0 %v961, 64
        %v980 = vpop.permute.xlu0 %979
        %981 = vrot.lane.b32.xlu0 %v962, 64
        %v982 = vpop.permute.xlu0 %981
        %983 = vrot.lane.b32.xlu0 %v963, 64
        %v984 = vpop.permute.xlu0 %983
        %985 = vrot.lane.b32.xlu0 %v964, 64
        %v986 = vpop.permute.xlu0 %985
        %987 = vrot.lane.b32.xlu0 %v965, 64
        %v988 = vpop.permute.xlu0 %987
        %989 = vrot.lane.b32.xlu0 %v966, 64
        %v990 = vpop.permute.xlu0 %989
        %v999 = vadd.f32 %v919, %v976
        %v1000 = vadd.f32 %v920, %v978
        %v1001 = vadd.f32 %v921, %v980
        %v1002 = vadd.f32 %v922, %v982
        %v1003 = vadd.f32 %v923, %v984
        %v1004 = vadd.f32 %v924, %v986
        %v1005 = vadd.f32 %v925, %v988
        %v1006 = vadd.f32 %v926, %v990
        %1007 = vset.pattern.permute.xlu0 3
        %1008 = vperm.xlu0 %1007, %v784
        %v1009 = vpop.permute.xlu0 %1008
        %1011 = vset.pattern.permute.xlu0 3
        %1012 = vperm.xlu0 %1011, %v786
        %v1013 = vpop.permute.xlu0 %1012
        %1015 = vset.pattern.permute.xlu0 3
        %1016 = vperm.xlu0 %1015, %v788
        %v1017 = vpop.permute.xlu0 %1016
        %1019 = vset.pattern.permute.xlu0 3
        %1020 = vperm.xlu0 %1019, %v790
        %v1021 = vpop.permute.xlu0 %1020
        %1023 = vset.pattern.permute.xlu0 3
        %1024 = vperm.xlu0 %1023, %v792
        %v1025 = vpop.permute.xlu0 %1024
        %1027 = vset.pattern.permute.xlu0 3
        %1028 = vperm.xlu0 %1027, %v794
        %v1029 = vpop.permute.xlu0 %1028
        %1031 = vset.pattern.permute.xlu0 3
        %1032 = vperm.xlu0 %1031, %v796
        %v1033 = vpop.permute.xlu0 %1032
        %1035 = vset.pattern.permute.xlu0 3
        %1036 = vperm.xlu0 %1035, %v798
        %v1037 = vpop.permute.xlu0 %1036
        %v1039 = vmul.f32 %v1009, %v533
        %v1040 = vmul.f32 %v1013, %v535
        %v1041 = vmul.f32 %v1017, %v537
        %v1042 = vmul.f32 %v1021, %v539
        %v1043 = vmul.f32 %v1025, %v541
        %v1044 = vmul.f32 %v1029, %v543
        %v1045 = vmul.f32 %v1033, %v545
        %v1046 = vmul.f32 %v1037, %v547
        %1055 = vrot.lane.b32.xlu0 %v1039, 32
        %v1056 = vpop.permute.xlu0 %1055
        %1057 = vrot.lane.b32.xlu0 %v1040, 32
        %v1058 = vpop.permute.xlu0 %1057
        %1059 = vrot.lane.b32.xlu0 %v1041, 32
        %v1060 = vpop.permute.xlu0 %1059
        %1061 = vrot.lane.b32.xlu0 %v1042, 32
        %v1062 = vpop.permute.xlu0 %1061
        %1063 = vrot.lane.b32.xlu0 %v1043, 32
        %v1064 = vpop.permute.xlu0 %1063
        %1065 = vrot.lane.b32.xlu0 %v1044, 32
        %v1066 = vpop.permute.xlu0 %1065
        %1067 = vrot.lane.b32.xlu0 %v1045, 32
        %v1068 = vpop.permute.xlu0 %1067
        %1069 = vrot.lane.b32.xlu0 %v1046, 32
        %v1070 = vpop.permute.xlu0 %1069
        %v1079 = vadd.f32 %v999, %v1056
        %v1080 = vadd.f32 %v1000, %v1058
        %v1081 = vadd.f32 %v1001, %v1060
        %v1082 = vadd.f32 %v1002, %v1062
        %v1083 = vadd.f32 %v1003, %v1064
        %v1084 = vadd.f32 %v1004, %v1066
        %v1085 = vadd.f32 %v1005, %v1068
        %v1086 = vadd.f32 %v1006, %v1070
        %1087 = vset.pattern.permute.xlu0 4
        %1088 = vperm.xlu0 %1087, %v784
        %v1089 = vpop.permute.xlu0 %1088
        %1091 = vset.pattern.permute.xlu0 4
        %1092 = vperm.xlu0 %1091, %v786
        %v1093 = vpop.permute.xlu0 %1092
        %1095 = vset.pattern.permute.xlu0 4
        %1096 = vperm.xlu0 %1095, %v788
        %v1097 = vpop.permute.xlu0 %1096
        %1099 = vset.pattern.permute.xlu0 4
        %1100 = vperm.xlu0 %1099, %v790
        %v1101 = vpop.permute.xlu0 %1100
        %1103 = vset.pattern.permute.xlu0 4
        %1104 = vperm.xlu0 %1103, %v792
        %v1105 = vpop.permute.xlu0 %1104
        %1107 = vset.pattern.permute.xlu0 4
        %1108 = vperm.xlu0 %1107, %v794
        %v1109 = vpop.permute.xlu0 %1108
        %1111 = vset.pattern.permute.xlu0 4
        %1112 = vperm.xlu0 %1111, %v796
        %v1113 = vpop.permute.xlu0 %1112
        %1115 = vset.pattern.permute.xlu0 4
        %1116 = vperm.xlu0 %1115, %v798
        %v1117 = vpop.permute.xlu0 %1116
        %v1119 = vmul.f32 %v1089, %v534
        %v1120 = vmul.f32 %v1093, %v536
        %v1121 = vmul.f32 %v1097, %v538
        %v1122 = vmul.f32 %v1101, %v540
        %v1123 = vmul.f32 %v1105, %v542
        %v1124 = vmul.f32 %v1109, %v544
        %v1125 = vmul.f32 %v1113, %v546
        %v1126 = vmul.f32 %v1117, %v548
        %v1127 = vadd.f32 %v1079, %v1119
        %v1128 = vadd.f32 %v1080, %v1120
        %v1129 = vadd.f32 %v1081, %v1121
        %v1130 = vadd.f32 %v1082, %v1122
        %v1131 = vadd.f32 %v1083, %v1123
        %v1132 = vadd.f32 %v1084, %v1124
        %v1133 = vadd.f32 %v1085, %v1125
        %v1134 = vadd.f32 %v1086, %v1126
        %1135 = vset.pattern.permute.xlu0 5
        %1136 = vperm.xlu0 %1135, %v784
        %v1137 = vpop.permute.xlu0 %1136
        %1139 = vset.pattern.permute.xlu0 5
        %1140 = vperm.xlu0 %1139, %v786
        %v1141 = vpop.permute.xlu0 %1140
        %1143 = vset.pattern.permute.xlu0 5
        %1144 = vperm.xlu0 %1143, %v788
        %v1145 = vpop.permute.xlu0 %1144
        %1147 = vset.pattern.permute.xlu0 5
        %1148 = vperm.xlu0 %1147, %v790
        %v1149 = vpop.permute.xlu0 %1148
        %1151 = vset.pattern.permute.xlu0 5
        %1152 = vperm.xlu0 %1151, %v792
        %v1153 = vpop.permute.xlu0 %1152
        %1155 = vset.pattern.permute.xlu0 5
        %1156 = vperm.xlu0 %1155, %v794
        %v1157 = vpop.permute.xlu0 %1156
        %1159 = vset.pattern.permute.xlu0 5
        %1160 = vperm.xlu0 %1159, %v796
        %v1161 = vpop.permute.xlu0 %1160
        %1163 = vset.pattern.permute.xlu0 5
        %1164 = vperm.xlu0 %1163, %v798
        %v1165 = vpop.permute.xlu0 %1164
        %v1167 = vmul.f32 %v1137, %v534
        %v1168 = vmul.f32 %v1141, %v536
        %v1169 = vmul.f32 %v1145, %v538
        %v1170 = vmul.f32 %v1149, %v540
        %v1171 = vmul.f32 %v1153, %v542
        %v1172 = vmul.f32 %v1157, %v544
        %v1173 = vmul.f32 %v1161, %v546
        %v1174 = vmul.f32 %v1165, %v548
        %1183 = vrot.lane.b32.xlu0 %v1167, 96
        %v1184 = vpop.permute.xlu0 %1183
        %1185 = vrot.lane.b32.xlu0 %v1168, 96
        %v1186 = vpop.permute.xlu0 %1185
        %1187 = vrot.lane.b32.xlu0 %v1169, 96
        %v1188 = vpop.permute.xlu0 %1187
        %1189 = vrot.lane.b32.xlu0 %v1170, 96
        %v1190 = vpop.permute.xlu0 %1189
        %1191 = vrot.lane.b32.xlu0 %v1171, 96
        %v1192 = vpop.permute.xlu0 %1191
        %1193 = vrot.lane.b32.xlu0 %v1172, 96
        %v1194 = vpop.permute.xlu0 %1193
        %1195 = vrot.lane.b32.xlu0 %v1173, 96
        %v1196 = vpop.permute.xlu0 %1195
        %1197 = vrot.lane.b32.xlu0 %v1174, 96
        %v1198 = vpop.permute.xlu0 %1197
        %v1207 = vadd.f32 %v1127, %v1184
        %v1208 = vadd.f32 %v1128, %v1186
        %v1209 = vadd.f32 %v1129, %v1188
        %v1210 = vadd.f32 %v1130, %v1190
        %v1211 = vadd.f32 %v1131, %v1192
        %v1212 = vadd.f32 %v1132, %v1194
        %v1213 = vadd.f32 %v1133, %v1196
        %v1214 = vadd.f32 %v1134, %v1198
        %1215 = vset.pattern.permute.xlu0 6
        %1216 = vperm.xlu0 %1215, %v784
        %v1217 = vpop.permute.xlu0 %1216
        %1219 = vset.pattern.permute.xlu0 6
        %1220 = vperm.xlu0 %1219, %v786
        %v1221 = vpop.permute.xlu0 %1220
        %1223 = vset.pattern.permute.xlu0 6
        %1224 = vperm.xlu0 %1223, %v788
        %v1225 = vpop.permute.xlu0 %1224
        %1227 = vset.pattern.permute.xlu0 6
        %1228 = vperm.xlu0 %1227, %v790
        %v1229 = vpop.permute.xlu0 %1228
        %1231 = vset.pattern.permute.xlu0 6
        %1232 = vperm.xlu0 %1231, %v792
        %v1233 = vpop.permute.xlu0 %1232
        %1235 = vset.pattern.permute.xlu0 6
        %1236 = vperm.xlu0 %1235, %v794
        %v1237 = vpop.permute.xlu0 %1236
        %1239 = vset.pattern.permute.xlu0 6
        %1240 = vperm.xlu0 %1239, %v796
        %v1241 = vpop.permute.xlu0 %1240
        %1243 = vset.pattern.permute.xlu0 6
        %1244 = vperm.xlu0 %1243, %v798
        %v1245 = vpop.permute.xlu0 %1244
        %v1247 = vmul.f32 %v1217, %v534
        %v1248 = vmul.f32 %v1221, %v536
        %v1249 = vmul.f32 %v1225, %v538
        %v1250 = vmul.f32 %v1229, %v540
        %v1251 = vmul.f32 %v1233, %v542
        %v1252 = vmul.f32 %v1237, %v544
        %v1253 = vmul.f32 %v1241, %v546
        %v1254 = vmul.f32 %v1245, %v548
        %1263 = vrot.lane.b32.xlu0 %v1247, 64
        %v1264 = vpop.permute.xlu0 %1263
        %1265 = vrot.lane.b32.xlu0 %v1248, 64
        %v1266 = vpop.permute.xlu0 %1265
        %1267 = vrot.lane.b32.xlu0 %v1249, 64
        %v1268 = vpop.permute.xlu0 %1267
        %1269 = vrot.lane.b32.xlu0 %v1250, 64
        %v1270 = vpop.permute.xlu0 %1269
        %1271 = vrot.lane.b32.xlu0 %v1251, 64
        %v1272 = vpop.permute.xlu0 %1271
        %1273 = vrot.lane.b32.xlu0 %v1252, 64
        %v1274 = vpop.permute.xlu0 %1273
        %1275 = vrot.lane.b32.xlu0 %v1253, 64
        %v1276 = vpop.permute.xlu0 %1275
        %1277 = vrot.lane.b32.xlu0 %v1254, 64
        %v1278 = vpop.permute.xlu0 %1277
        %v1287 = vadd.f32 %v1207, %v1264
        %v1288 = vadd.f32 %v1208, %v1266
        %v1289 = vadd.f32 %v1209, %v1268
        %v1290 = vadd.f32 %v1210, %v1270
        %v1291 = vadd.f32 %v1211, %v1272
        %v1292 = vadd.f32 %v1212, %v1274
        %v1293 = vadd.f32 %v1213, %v1276
        %v1294 = vadd.f32 %v1214, %v1278
        %1295 = vset.pattern.permute.xlu0 7
        %1296 = vperm.xlu0 %1295, %v784
        %v1297 = vpop.permute.xlu0 %1296
        %1299 = vset.pattern.permute.xlu0 7
        %1300 = vperm.xlu0 %1299, %v786
        %v1301 = vpop.permute.xlu0 %1300
        %1303 = vset.pattern.permute.xlu0 7
        %1304 = vperm.xlu0 %1303, %v788
        %v1305 = vpop.permute.xlu0 %1304
        %1307 = vset.pattern.permute.xlu0 7
        %1308 = vperm.xlu0 %1307, %v790
        %v1309 = vpop.permute.xlu0 %1308
        %1311 = vset.pattern.permute.xlu0 7
        %1312 = vperm.xlu0 %1311, %v792
        %v1313 = vpop.permute.xlu0 %1312
        %1315 = vset.pattern.permute.xlu0 7
        %1316 = vperm.xlu0 %1315, %v794
        %v1317 = vpop.permute.xlu0 %1316
        %1319 = vset.pattern.permute.xlu0 7
        %1320 = vperm.xlu0 %1319, %v796
        %v1321 = vpop.permute.xlu0 %1320
        %1323 = vset.pattern.permute.xlu0 7
        %1324 = vperm.xlu0 %1323, %v798
        %v1325 = vpop.permute.xlu0 %1324
        %v1327 = vmul.f32 %v1297, %v534
        %v1328 = vmul.f32 %v1301, %v536
        %v1329 = vmul.f32 %v1305, %v538
        %v1330 = vmul.f32 %v1309, %v540
        %v1331 = vmul.f32 %v1313, %v542
        %v1332 = vmul.f32 %v1317, %v544
        %v1333 = vmul.f32 %v1321, %v546
        %v1334 = vmul.f32 %v1325, %v548
        %1343 = vrot.lane.b32.xlu0 %v1327, 32
        %v1344 = vpop.permute.xlu0 %1343
        %1345 = vrot.lane.b32.xlu0 %v1328, 32
        %v1346 = vpop.permute.xlu0 %1345
        %1347 = vrot.lane.b32.xlu0 %v1329, 32
        %v1348 = vpop.permute.xlu0 %1347
        %1349 = vrot.lane.b32.xlu0 %v1330, 32
        %v1350 = vpop.permute.xlu0 %1349
        %1351 = vrot.lane.b32.xlu0 %v1331, 32
        %v1352 = vpop.permute.xlu0 %1351
        %1353 = vrot.lane.b32.xlu0 %v1332, 32
        %v1354 = vpop.permute.xlu0 %1353
        %1355 = vrot.lane.b32.xlu0 %v1333, 32
        %v1356 = vpop.permute.xlu0 %1355
        %1357 = vrot.lane.b32.xlu0 %v1334, 32
        %v1358 = vpop.permute.xlu0 %1357
        %v1367 = vadd.f32 %v1287, %v1344
        %v1368 = vadd.f32 %v1288, %v1346
        %v1369 = vadd.f32 %v1289, %v1348
        %v1370 = vadd.f32 %v1290, %v1350
        %v1371 = vadd.f32 %v1291, %v1352
        %v1372 = vadd.f32 %v1292, %v1354
        %v1373 = vadd.f32 %v1293, %v1356
        %v1374 = vadd.f32 %v1294, %v1358
        %1383 = vrot.lane.b32.xlu0 %v686, 120
        %v1384 = vpop.permute.xlu0 %1383
        %1385 = vrot.lane.b32.xlu0 %v687, 120
        %v1386 = vpop.permute.xlu0 %1385
        %1387 = vrot.lane.b32.xlu0 %v688, 120
        %v1388 = vpop.permute.xlu0 %1387
        %1389 = vrot.lane.b32.xlu0 %v689, 120
        %v1390 = vpop.permute.xlu0 %1389
        %1391 = vrot.lane.b32.xlu0 %v690, 120
        %v1392 = vpop.permute.xlu0 %1391
        %1393 = vrot.lane.b32.xlu0 %v691, 120
        %v1394 = vpop.permute.xlu0 %1393
        %1395 = vrot.lane.b32.xlu0 %v692, 120
        %v1396 = vpop.permute.xlu0 %1395
        %1397 = vrot.lane.b32.xlu0 %v693, 120
        %v1398 = vpop.permute.xlu0 %1397
        %v1407 = vsel %vm701, %v1384, -1e+30
        %v1408 = vsel %vm701, %v1386, -1e+30
        %v1409 = vsel %vm701, %v1388, -1e+30
        %v1410 = vsel %vm701, %v1390, -1e+30
        %v1411 = vsel %vm701, %v1392, -1e+30
        %v1412 = vsel %vm701, %v1394, -1e+30
        %v1413 = vsel %vm701, %v1396, -1e+30
        %v1414 = vsel %vm701, %v1398, -1e+30
        %v1415 = vsel %vm710, %v1407, -inf
        %1416 = vmax.xlane.f32.xlu0 %v1415
        %v1417 = vpop.xlane.xlu0 %1416
        %v1418 = vsel %vm710, %v1408, -inf
        %1419 = vmax.xlane.f32.xlu0 %v1418
        %v1420 = vpop.xlane.xlu0 %1419
        %v1421 = vsel %vm710, %v1409, -inf
        %1422 = vmax.xlane.f32.xlu0 %v1421
        %v1423 = vpop.xlane.xlu0 %1422
        %v1424 = vsel %vm710, %v1410, -inf
        %1425 = vmax.xlane.f32.xlu0 %v1424
        %v1426 = vpop.xlane.xlu0 %1425
        %v1427 = vsel %vm710, %v1411, -inf
        %1428 = vmax.xlane.f32.xlu0 %v1427
        %v1429 = vpop.xlane.xlu0 %1428
        %v1430 = vsel %vm710, %v1412, -inf
        %1431 = vmax.xlane.f32.xlu0 %v1430
        %v1432 = vpop.xlane.xlu0 %1431
        %v1433 = vsel %vm710, %v1413, -inf
        %1434 = vmax.xlane.f32.xlu0 %v1433
        %v1435 = vpop.xlane.xlu0 %1434
        %v1436 = vsel %vm710, %v1414, -inf
        %1437 = vmax.xlane.f32.xlu0 %v1436
        %v1438 = vpop.xlane.xlu0 %1437
        %v1439 = vsub.f32 %v1407, %v1417
        %v1440 = vsub.f32 %v1408, %v1420
        %v1441 = vsub.f32 %v1409, %v1423
        %v1442 = vsub.f32 %v1410, %v1426
        %v1443 = vsub.f32 %v1411, %v1429
        %v1444 = vsub.f32 %v1412, %v1432
        %v1445 = vsub.f32 %v1413, %v1435
        %v1446 = vsub.f32 %v1414, %v1438
        %v1447 = vmul.f32 %v1439, 1.442695
        %v1448 = vpow.pop %v1447
        %v1449 = vmul.f32 %v1440, 1.442695
        %v1450 = vpow.pop %v1449
        %v1451 = vmul.f32 %v1441, 1.442695
        %v1452 = vpow.pop %v1451
        %v1453 = vmul.f32 %v1442, 1.442695
        %v1454 = vpow.pop %v1453
        %v1455 = vmul.f32 %v1443, 1.442695
        %v1456 = vpow.pop %v1455
        %v1457 = vmul.f32 %v1444, 1.442695
        %v1458 = vpow.pop %v1457
        %v1459 = vmul.f32 %v1445, 1.442695
        %v1460 = vpow.pop %v1459
        %v1461 = vmul.f32 %v1446, 1.442695
        %v1462 = vpow.pop %v1461
        %v1463 = vsel %vm710, %v1448, 0.0
        %1464 = vadd.xlane.f32.xlu0 %v1463
        %v1465 = vpop.xlane.xlu0 %1464
        %v1466 = vsel %vm710, %v1450, 0.0
        %1467 = vadd.xlane.f32.xlu0 %v1466
        %v1468 = vpop.xlane.xlu0 %1467
        %v1469 = vsel %vm710, %v1452, 0.0
        %1470 = vadd.xlane.f32.xlu0 %v1469
        %v1471 = vpop.xlane.xlu0 %1470
        %v1472 = vsel %vm710, %v1454, 0.0
        %1473 = vadd.xlane.f32.xlu0 %v1472
        %v1474 = vpop.xlane.xlu0 %1473
        %v1475 = vsel %vm710, %v1456, 0.0
        %1476 = vadd.xlane.f32.xlu0 %v1475
        %v1477 = vpop.xlane.xlu0 %1476
        %v1478 = vsel %vm710, %v1458, 0.0
        %1479 = vadd.xlane.f32.xlu0 %v1478
        %v1480 = vpop.xlane.xlu0 %1479
        %v1481 = vsel %vm710, %v1460, 0.0
        %1482 = vadd.xlane.f32.xlu0 %v1481
        %v1483 = vpop.xlane.xlu0 %1482
        %v1484 = vsel %vm710, %v1462, 0.0
        %1485 = vadd.xlane.f32.xlu0 %v1484
        %v1486 = vpop.xlane.xlu0 %1485
        %v1487 = vrcp.pop %v1465
        %v1488 = vmul.f32 %v1448, %v1487
        %v1489 = vrcp.pop %v1468
        %v1490 = vmul.f32 %v1450, %v1489
        %v1491 = vrcp.pop %v1471
        %v1492 = vmul.f32 %v1452, %v1491
        %v1493 = vrcp.pop %v1474
        %v1494 = vmul.f32 %v1454, %v1493
        %v1495 = vrcp.pop %v1477
        %v1496 = vmul.f32 %v1456, %v1495
        %v1497 = vrcp.pop %v1480
        %v1498 = vmul.f32 %v1458, %v1497
        %v1499 = vrcp.pop %v1483
        %v1500 = vmul.f32 %v1460, %v1499
        %v1501 = vrcp.pop %v1486
        %v1502 = vmul.f32 %v1462, %v1501
        %1504 = vset.pattern.permute.xlu0 0
        %1505 = vperm.xlu0 %1504, %v1488
        %v1506 = vpop.permute.xlu0 %1505
        %1509 = vset.pattern.permute.xlu0 0
        %1510 = vperm.xlu0 %1509, %v1490
        %v1511 = vpop.permute.xlu0 %1510
        %1514 = vset.pattern.permute.xlu0 0
        %1515 = vperm.xlu0 %1514, %v1492
        %v1516 = vpop.permute.xlu0 %1515
        %1519 = vset.pattern.permute.xlu0 0
        %1520 = vperm.xlu0 %1519, %v1494
        %v1521 = vpop.permute.xlu0 %1520
        %1524 = vset.pattern.permute.xlu0 0
        %1525 = vperm.xlu0 %1524, %v1496
        %v1526 = vpop.permute.xlu0 %1525
        %1529 = vset.pattern.permute.xlu0 0
        %1530 = vperm.xlu0 %1529, %v1498
        %v1531 = vpop.permute.xlu0 %1530
        %1534 = vset.pattern.permute.xlu0 0
        %1535 = vperm.xlu0 %1534, %v1500
        %v1536 = vpop.permute.xlu0 %1535
        %1539 = vset.pattern.permute.xlu0 0
        %1540 = vperm.xlu0 %1539, %v1502
        %v1541 = vpop.permute.xlu0 %1540
        %v1543 = vmul.f32 %v1506, %v533
        %v1544 = vmul.f32 %v1511, %v535
        %v1545 = vmul.f32 %v1516, %v537
        %v1546 = vmul.f32 %v1521, %v539
        %v1547 = vmul.f32 %v1526, %v541
        %v1548 = vmul.f32 %v1531, %v543
        %v1549 = vmul.f32 %v1536, %v545
        %v1550 = vmul.f32 %v1541, %v547
        %1551 = vset.pattern.permute.xlu0 1
        %1552 = vperm.xlu0 %1551, %v1488
        %v1553 = vpop.permute.xlu0 %1552
        %1555 = vset.pattern.permute.xlu0 1
        %1556 = vperm.xlu0 %1555, %v1490
        %v1557 = vpop.permute.xlu0 %1556
        %1559 = vset.pattern.permute.xlu0 1
        %1560 = vperm.xlu0 %1559, %v1492
        %v1561 = vpop.permute.xlu0 %1560
        %1563 = vset.pattern.permute.xlu0 1
        %1564 = vperm.xlu0 %1563, %v1494
        %v1565 = vpop.permute.xlu0 %1564
        %1567 = vset.pattern.permute.xlu0 1
        %1568 = vperm.xlu0 %1567, %v1496
        %v1569 = vpop.permute.xlu0 %1568
        %1571 = vset.pattern.permute.xlu0 1
        %1572 = vperm.xlu0 %1571, %v1498
        %v1573 = vpop.permute.xlu0 %1572
        %1575 = vset.pattern.permute.xlu0 1
        %1576 = vperm.xlu0 %1575, %v1500
        %v1577 = vpop.permute.xlu0 %1576
        %1579 = vset.pattern.permute.xlu0 1
        %1580 = vperm.xlu0 %1579, %v1502
        %v1581 = vpop.permute.xlu0 %1580
        %v1583 = vmul.f32 %v1553, %v533
        %v1584 = vmul.f32 %v1557, %v535
        %v1585 = vmul.f32 %v1561, %v537
        %v1586 = vmul.f32 %v1565, %v539
        %v1587 = vmul.f32 %v1569, %v541
        %v1588 = vmul.f32 %v1573, %v543
        %v1589 = vmul.f32 %v1577, %v545
        %v1590 = vmul.f32 %v1581, %v547
        %1599 = vrot.lane.b32.xlu0 %v1583, 96
        %v1600 = vpop.permute.xlu0 %1599
        %1601 = vrot.lane.b32.xlu0 %v1584, 96
        %v1602 = vpop.permute.xlu0 %1601
        %1603 = vrot.lane.b32.xlu0 %v1585, 96
        %v1604 = vpop.permute.xlu0 %1603
        %1605 = vrot.lane.b32.xlu0 %v1586, 96
        %v1606 = vpop.permute.xlu0 %1605
        %1607 = vrot.lane.b32.xlu0 %v1587, 96
        %v1608 = vpop.permute.xlu0 %1607
        %1609 = vrot.lane.b32.xlu0 %v1588, 96
        %v1610 = vpop.permute.xlu0 %1609
        %1611 = vrot.lane.b32.xlu0 %v1589, 96
        %v1612 = vpop.permute.xlu0 %1611
        %1613 = vrot.lane.b32.xlu0 %v1590, 96
        %v1614 = vpop.permute.xlu0 %1613
        %v1623 = vadd.f32 %v1543, %v1600
        %v1624 = vadd.f32 %v1544, %v1602
        %v1625 = vadd.f32 %v1545, %v1604
        %v1626 = vadd.f32 %v1546, %v1606
        %v1627 = vadd.f32 %v1547, %v1608
        %v1628 = vadd.f32 %v1548, %v1610
        %v1629 = vadd.f32 %v1549, %v1612
        %v1630 = vadd.f32 %v1550, %v1614
        %1631 = vset.pattern.permute.xlu0 2
        %1632 = vperm.xlu0 %1631, %v1488
        %v1633 = vpop.permute.xlu0 %1632
        %1635 = vset.pattern.permute.xlu0 2
        %1636 = vperm.xlu0 %1635, %v1490
        %v1637 = vpop.permute.xlu0 %1636
        %1639 = vset.pattern.permute.xlu0 2
        %1640 = vperm.xlu0 %1639, %v1492
        %v1641 = vpop.permute.xlu0 %1640
        %1643 = vset.pattern.permute.xlu0 2
        %1644 = vperm.xlu0 %1643, %v1494
        %v1645 = vpop.permute.xlu0 %1644
        %1647 = vset.pattern.permute.xlu0 2
        %1648 = vperm.xlu0 %1647, %v1496
        %v1649 = vpop.permute.xlu0 %1648
        %1651 = vset.pattern.permute.xlu0 2
        %1652 = vperm.xlu0 %1651, %v1498
        %v1653 = vpop.permute.xlu0 %1652
        %1655 = vset.pattern.permute.xlu0 2
        %1656 = vperm.xlu0 %1655, %v1500
        %v1657 = vpop.permute.xlu0 %1656
        %1659 = vset.pattern.permute.xlu0 2
        %1660 = vperm.xlu0 %1659, %v1502
        %v1661 = vpop.permute.xlu0 %1660
        %v1663 = vmul.f32 %v1633, %v533
        %v1664 = vmul.f32 %v1637, %v535
        %v1665 = vmul.f32 %v1641, %v537
        %v1666 = vmul.f32 %v1645, %v539
        %v1667 = vmul.f32 %v1649, %v541
        %v1668 = vmul.f32 %v1653, %v543
        %v1669 = vmul.f32 %v1657, %v545
        %v1670 = vmul.f32 %v1661, %v547
        %1679 = vrot.lane.b32.xlu0 %v1663, 64
        %v1680 = vpop.permute.xlu0 %1679
        %1681 = vrot.lane.b32.xlu0 %v1664, 64
        %v1682 = vpop.permute.xlu0 %1681
        %1683 = vrot.lane.b32.xlu0 %v1665, 64
        %v1684 = vpop.permute.xlu0 %1683
        %1685 = vrot.lane.b32.xlu0 %v1666, 64
        %v1686 = vpop.permute.xlu0 %1685
        %1687 = vrot.lane.b32.xlu0 %v1667, 64
        %v1688 = vpop.permute.xlu0 %1687
        %1689 = vrot.lane.b32.xlu0 %v1668, 64
        %v1690 = vpop.permute.xlu0 %1689
        %1691 = vrot.lane.b32.xlu0 %v1669, 64
        %v1692 = vpop.permute.xlu0 %1691
        %1693 = vrot.lane.b32.xlu0 %v1670, 64
        %v1694 = vpop.permute.xlu0 %1693
        %v1703 = vadd.f32 %v1623, %v1680
        %v1704 = vadd.f32 %v1624, %v1682
        %v1705 = vadd.f32 %v1625, %v1684
        %v1706 = vadd.f32 %v1626, %v1686
        %v1707 = vadd.f32 %v1627, %v1688
        %v1708 = vadd.f32 %v1628, %v1690
        %v1709 = vadd.f32 %v1629, %v1692
        %v1710 = vadd.f32 %v1630, %v1694
        %1711 = vset.pattern.permute.xlu0 3
        %1712 = vperm.xlu0 %1711, %v1488
        %v1713 = vpop.permute.xlu0 %1712
        %1715 = vset.pattern.permute.xlu0 3
        %1716 = vperm.xlu0 %1715, %v1490
        %v1717 = vpop.permute.xlu0 %1716
        %1719 = vset.pattern.permute.xlu0 3
        %1720 = vperm.xlu0 %1719, %v1492
        %v1721 = vpop.permute.xlu0 %1720
        %1723 = vset.pattern.permute.xlu0 3
        %1724 = vperm.xlu0 %1723, %v1494
        %v1725 = vpop.permute.xlu0 %1724
        %1727 = vset.pattern.permute.xlu0 3
        %1728 = vperm.xlu0 %1727, %v1496
        %v1729 = vpop.permute.xlu0 %1728
        %1731 = vset.pattern.permute.xlu0 3
        %1732 = vperm.xlu0 %1731, %v1498
        %v1733 = vpop.permute.xlu0 %1732
        %1735 = vset.pattern.permute.xlu0 3
        %1736 = vperm.xlu0 %1735, %v1500
        %v1737 = vpop.permute.xlu0 %1736
        %1739 = vset.pattern.permute.xlu0 3
        %1740 = vperm.xlu0 %1739, %v1502
        %v1741 = vpop.permute.xlu0 %1740
        %v1743 = vmul.f32 %v1713, %v533
        %v1744 = vmul.f32 %v1717, %v535
        %v1745 = vmul.f32 %v1721, %v537
        %v1746 = vmul.f32 %v1725, %v539
        %v1747 = vmul.f32 %v1729, %v541
        %v1748 = vmul.f32 %v1733, %v543
        %v1749 = vmul.f32 %v1737, %v545
        %v1750 = vmul.f32 %v1741, %v547
        %1759 = vrot.lane.b32.xlu0 %v1743, 32
        %v1760 = vpop.permute.xlu0 %1759
        %1761 = vrot.lane.b32.xlu0 %v1744, 32
        %v1762 = vpop.permute.xlu0 %1761
        %1763 = vrot.lane.b32.xlu0 %v1745, 32
        %v1764 = vpop.permute.xlu0 %1763
        %1765 = vrot.lane.b32.xlu0 %v1746, 32
        %v1766 = vpop.permute.xlu0 %1765
        %1767 = vrot.lane.b32.xlu0 %v1747, 32
        %v1768 = vpop.permute.xlu0 %1767
        %1769 = vrot.lane.b32.xlu0 %v1748, 32
        %v1770 = vpop.permute.xlu0 %1769
        %1771 = vrot.lane.b32.xlu0 %v1749, 32
        %v1772 = vpop.permute.xlu0 %1771
        %1773 = vrot.lane.b32.xlu0 %v1750, 32
        %v1774 = vpop.permute.xlu0 %1773
        %v1783 = vadd.f32 %v1703, %v1760
        %v1784 = vadd.f32 %v1704, %v1762
        %v1785 = vadd.f32 %v1705, %v1764
        %v1786 = vadd.f32 %v1706, %v1766
        %v1787 = vadd.f32 %v1707, %v1768
        %v1788 = vadd.f32 %v1708, %v1770
        %v1789 = vadd.f32 %v1709, %v1772
        %v1790 = vadd.f32 %v1710, %v1774
        %1791 = vset.pattern.permute.xlu0 4
        %1792 = vperm.xlu0 %1791, %v1488
        %v1793 = vpop.permute.xlu0 %1792
        %1795 = vset.pattern.permute.xlu0 4
        %1796 = vperm.xlu0 %1795, %v1490
        %v1797 = vpop.permute.xlu0 %1796
        %1799 = vset.pattern.permute.xlu0 4
        %1800 = vperm.xlu0 %1799, %v1492
        %v1801 = vpop.permute.xlu0 %1800
        %1803 = vset.pattern.permute.xlu0 4
        %1804 = vperm.xlu0 %1803, %v1494
        %v1805 = vpop.permute.xlu0 %1804
        %1807 = vset.pattern.permute.xlu0 4
        %1808 = vperm.xlu0 %1807, %v1496
        %v1809 = vpop.permute.xlu0 %1808
        %1811 = vset.pattern.permute.xlu0 4
        %1812 = vperm.xlu0 %1811, %v1498
        %v1813 = vpop.permute.xlu0 %1812
        %1815 = vset.pattern.permute.xlu0 4
        %1816 = vperm.xlu0 %1815, %v1500
        %v1817 = vpop.permute.xlu0 %1816
        %1819 = vset.pattern.permute.xlu0 4
        %1820 = vperm.xlu0 %1819, %v1502
        %v1821 = vpop.permute.xlu0 %1820
        %v1823 = vmul.f32 %v1793, %v534
        %v1824 = vmul.f32 %v1797, %v536
        %v1825 = vmul.f32 %v1801, %v538
        %v1826 = vmul.f32 %v1805, %v540
        %v1827 = vmul.f32 %v1809, %v542
        %v1828 = vmul.f32 %v1813, %v544
        %v1829 = vmul.f32 %v1817, %v546
        %v1830 = vmul.f32 %v1821, %v548
        %v1831 = vadd.f32 %v1783, %v1823
        %v1832 = vadd.f32 %v1784, %v1824
        %v1833 = vadd.f32 %v1785, %v1825
        %v1834 = vadd.f32 %v1786, %v1826
        %v1835 = vadd.f32 %v1787, %v1827
        %v1836 = vadd.f32 %v1788, %v1828
        %v1837 = vadd.f32 %v1789, %v1829
        %v1838 = vadd.f32 %v1790, %v1830
        %1839 = vset.pattern.permute.xlu0 5
        %1840 = vperm.xlu0 %1839, %v1488
        %v1841 = vpop.permute.xlu0 %1840
        %1843 = vset.pattern.permute.xlu0 5
        %1844 = vperm.xlu0 %1843, %v1490
        %v1845 = vpop.permute.xlu0 %1844
        %1847 = vset.pattern.permute.xlu0 5
        %1848 = vperm.xlu0 %1847, %v1492
        %v1849 = vpop.permute.xlu0 %1848
        %1851 = vset.pattern.permute.xlu0 5
        %1852 = vperm.xlu0 %1851, %v1494
        %v1853 = vpop.permute.xlu0 %1852
        %1855 = vset.pattern.permute.xlu0 5
        %1856 = vperm.xlu0 %1855, %v1496
        %v1857 = vpop.permute.xlu0 %1856
        %1859 = vset.pattern.permute.xlu0 5
        %1860 = vperm.xlu0 %1859, %v1498
        %v1861 = vpop.permute.xlu0 %1860
        %1863 = vset.pattern.permute.xlu0 5
        %1864 = vperm.xlu0 %1863, %v1500
        %v1865 = vpop.permute.xlu0 %1864
        %1867 = vset.pattern.permute.xlu0 5
        %1868 = vperm.xlu0 %1867, %v1502
        %v1869 = vpop.permute.xlu0 %1868
        %v1871 = vmul.f32 %v1841, %v534
        %v1872 = vmul.f32 %v1845, %v536
        %v1873 = vmul.f32 %v1849, %v538
        %v1874 = vmul.f32 %v1853, %v540
        %v1875 = vmul.f32 %v1857, %v542
        %v1876 = vmul.f32 %v1861, %v544
        %v1877 = vmul.f32 %v1865, %v546
        %v1878 = vmul.f32 %v1869, %v548
        %1887 = vrot.lane.b32.xlu0 %v1871, 96
        %v1888 = vpop.permute.xlu0 %1887
        %1889 = vrot.lane.b32.xlu0 %v1872, 96
        %v1890 = vpop.permute.xlu0 %1889
        %1891 = vrot.lane.b32.xlu0 %v1873, 96
        %v1892 = vpop.permute.xlu0 %1891
        %1893 = vrot.lane.b32.xlu0 %v1874, 96
        %v1894 = vpop.permute.xlu0 %1893
        %1895 = vrot.lane.b32.xlu0 %v1875, 96
        %v1896 = vpop.permute.xlu0 %1895
        %1897 = vrot.lane.b32.xlu0 %v1876, 96
        %v1898 = vpop.permute.xlu0 %1897
        %1899 = vrot.lane.b32.xlu0 %v1877, 96
        %v1900 = vpop.permute.xlu0 %1899
        %1901 = vrot.lane.b32.xlu0 %v1878, 96
        %v1902 = vpop.permute.xlu0 %1901
        %v1911 = vadd.f32 %v1831, %v1888
        %v1912 = vadd.f32 %v1832, %v1890
        %v1913 = vadd.f32 %v1833, %v1892
        %v1914 = vadd.f32 %v1834, %v1894
        %v1915 = vadd.f32 %v1835, %v1896
        %v1916 = vadd.f32 %v1836, %v1898
        %v1917 = vadd.f32 %v1837, %v1900
        %v1918 = vadd.f32 %v1838, %v1902
        %1919 = vset.pattern.permute.xlu0 6
        %1920 = vperm.xlu0 %1919, %v1488
        %v1921 = vpop.permute.xlu0 %1920
        %1923 = vset.pattern.permute.xlu0 6
        %1924 = vperm.xlu0 %1923, %v1490
        %v1925 = vpop.permute.xlu0 %1924
        %1927 = vset.pattern.permute.xlu0 6
        %1928 = vperm.xlu0 %1927, %v1492
        %v1929 = vpop.permute.xlu0 %1928
        %1931 = vset.pattern.permute.xlu0 6
        %1932 = vperm.xlu0 %1931, %v1494
        %v1933 = vpop.permute.xlu0 %1932
        %1935 = vset.pattern.permute.xlu0 6
        %1936 = vperm.xlu0 %1935, %v1496
        %v1937 = vpop.permute.xlu0 %1936
        %1939 = vset.pattern.permute.xlu0 6
        %1940 = vperm.xlu0 %1939, %v1498
        %v1941 = vpop.permute.xlu0 %1940
        %1943 = vset.pattern.permute.xlu0 6
        %1944 = vperm.xlu0 %1943, %v1500
        %v1945 = vpop.permute.xlu0 %1944
        %1947 = vset.pattern.permute.xlu0 6
        %1948 = vperm.xlu0 %1947, %v1502
        %v1949 = vpop.permute.xlu0 %1948
        %v1951 = vmul.f32 %v1921, %v534
        %v1952 = vmul.f32 %v1925, %v536
        %v1953 = vmul.f32 %v1929, %v538
        %v1954 = vmul.f32 %v1933, %v540
        %v1955 = vmul.f32 %v1937, %v542
        %v1956 = vmul.f32 %v1941, %v544
        %v1957 = vmul.f32 %v1945, %v546
        %v1958 = vmul.f32 %v1949, %v548
        %1967 = vrot.lane.b32.xlu0 %v1951, 64
        %v1968 = vpop.permute.xlu0 %1967
        %1969 = vrot.lane.b32.xlu0 %v1952, 64
        %v1970 = vpop.permute.xlu0 %1969
        %1971 = vrot.lane.b32.xlu0 %v1953, 64
        %v1972 = vpop.permute.xlu0 %1971
        %1973 = vrot.lane.b32.xlu0 %v1954, 64
        %v1974 = vpop.permute.xlu0 %1973
        %1975 = vrot.lane.b32.xlu0 %v1955, 64
        %v1976 = vpop.permute.xlu0 %1975
        %1977 = vrot.lane.b32.xlu0 %v1956, 64
        %v1978 = vpop.permute.xlu0 %1977
        %1979 = vrot.lane.b32.xlu0 %v1957, 64
        %v1980 = vpop.permute.xlu0 %1979
        %1981 = vrot.lane.b32.xlu0 %v1958, 64
        %v1982 = vpop.permute.xlu0 %1981
        %v1991 = vadd.f32 %v1911, %v1968
        %v1992 = vadd.f32 %v1912, %v1970
        %v1993 = vadd.f32 %v1913, %v1972
        %v1994 = vadd.f32 %v1914, %v1974
        %v1995 = vadd.f32 %v1915, %v1976
        %v1996 = vadd.f32 %v1916, %v1978
        %v1997 = vadd.f32 %v1917, %v1980
        %v1998 = vadd.f32 %v1918, %v1982
        %1999 = vset.pattern.permute.xlu0 7
        %2000 = vperm.xlu0 %1999, %v1488
        %v2001 = vpop.permute.xlu0 %2000
        %2003 = vset.pattern.permute.xlu0 7
        %2004 = vperm.xlu0 %2003, %v1490
        %v2005 = vpop.permute.xlu0 %2004
        %2007 = vset.pattern.permute.xlu0 7
        %2008 = vperm.xlu0 %2007, %v1492
        %v2009 = vpop.permute.xlu0 %2008
        %2011 = vset.pattern.permute.xlu0 7
        %2012 = vperm.xlu0 %2011, %v1494
        %v2013 = vpop.permute.xlu0 %2012
        %2015 = vset.pattern.permute.xlu0 7
        %2016 = vperm.xlu0 %2015, %v1496
        %v2017 = vpop.permute.xlu0 %2016
        %2019 = vset.pattern.permute.xlu0 7
        %2020 = vperm.xlu0 %2019, %v1498
        %v2021 = vpop.permute.xlu0 %2020
        %2023 = vset.pattern.permute.xlu0 7
        %2024 = vperm.xlu0 %2023, %v1500
        %v2025 = vpop.permute.xlu0 %2024
        %2027 = vset.pattern.permute.xlu0 7
        %2028 = vperm.xlu0 %2027, %v1502
        %v2029 = vpop.permute.xlu0 %2028
        %v2031 = vmul.f32 %v2001, %v534
        %v2032 = vmul.f32 %v2005, %v536
        %v2033 = vmul.f32 %v2009, %v538
        %v2034 = vmul.f32 %v2013, %v540
        %v2035 = vmul.f32 %v2017, %v542
        %v2036 = vmul.f32 %v2021, %v544
        %v2037 = vmul.f32 %v2025, %v546
        %v2038 = vmul.f32 %v2029, %v548
        %2047 = vrot.lane.b32.xlu0 %v2031, 32
        %v2048 = vpop.permute.xlu0 %2047
        %2049 = vrot.lane.b32.xlu0 %v2032, 32
        %v2050 = vpop.permute.xlu0 %2049
        %2051 = vrot.lane.b32.xlu0 %v2033, 32
        %v2052 = vpop.permute.xlu0 %2051
        %2053 = vrot.lane.b32.xlu0 %v2034, 32
        %v2054 = vpop.permute.xlu0 %2053
        %2055 = vrot.lane.b32.xlu0 %v2035, 32
        %v2056 = vpop.permute.xlu0 %2055
        %2057 = vrot.lane.b32.xlu0 %v2036, 32
        %v2058 = vpop.permute.xlu0 %2057
        %2059 = vrot.lane.b32.xlu0 %v2037, 32
        %v2060 = vpop.permute.xlu0 %2059
        %2061 = vrot.lane.b32.xlu0 %v2038, 32
        %v2062 = vpop.permute.xlu0 %2061
        %v2071 = vadd.f32 %v1991, %v2048
        %v2072 = vadd.f32 %v1992, %v2050
        %v2073 = vadd.f32 %v1993, %v2052
        %v2074 = vadd.f32 %v1994, %v2054
        %v2075 = vadd.f32 %v1995, %v2056
        %v2076 = vadd.f32 %v1996, %v2058
        %v2077 = vadd.f32 %v1997, %v2060
        %v2078 = vadd.f32 %v1998, %v2062
        %2079 = vrot.lane.b32.xlu0 %v686, 112
        %v2080 = vpop.permute.xlu0 %2079
        %2081 = vrot.lane.b32.xlu0 %v687, 112
        %v2082 = vpop.permute.xlu0 %2081
        %2083 = vrot.lane.b32.xlu0 %v688, 112
        %v2084 = vpop.permute.xlu0 %2083
        %2085 = vrot.lane.b32.xlu0 %v689, 112
        %v2086 = vpop.permute.xlu0 %2085
        %2087 = vrot.lane.b32.xlu0 %v690, 112
        %v2088 = vpop.permute.xlu0 %2087
        %2089 = vrot.lane.b32.xlu0 %v691, 112
        %v2090 = vpop.permute.xlu0 %2089
        %2091 = vrot.lane.b32.xlu0 %v692, 112
        %v2092 = vpop.permute.xlu0 %2091
        %2093 = vrot.lane.b32.xlu0 %v693, 112
        %v2094 = vpop.permute.xlu0 %2093
        %v2103 = vsel %vm701, %v2080, -1e+30
        %v2104 = vsel %vm701, %v2082, -1e+30
        %v2105 = vsel %vm701, %v2084, -1e+30
        %v2106 = vsel %vm701, %v2086, -1e+30
        %v2107 = vsel %vm701, %v2088, -1e+30
        %v2108 = vsel %vm701, %v2090, -1e+30
        %v2109 = vsel %vm701, %v2092, -1e+30
        %v2110 = vsel %vm701, %v2094, -1e+30
        %v2111 = vsel %vm710, %v2103, -inf
        %2112 = vmax.xlane.f32.xlu0 %v2111
        %v2113 = vpop.xlane.xlu0 %2112
        %v2114 = vsel %vm710, %v2104, -inf
        %2115 = vmax.xlane.f32.xlu0 %v2114
        %v2116 = vpop.xlane.xlu0 %2115
        %v2117 = vsel %vm710, %v2105, -inf
        %2118 = vmax.xlane.f32.xlu0 %v2117
        %v2119 = vpop.xlane.xlu0 %2118
        %v2120 = vsel %vm710, %v2106, -inf
        %2121 = vmax.xlane.f32.xlu0 %v2120
        %v2122 = vpop.xlane.xlu0 %2121
        %v2123 = vsel %vm710, %v2107, -inf
        %2124 = vmax.xlane.f32.xlu0 %v2123
        %v2125 = vpop.xlane.xlu0 %2124
        %v2126 = vsel %vm710, %v2108, -inf
        %2127 = vmax.xlane.f32.xlu0 %v2126
        %v2128 = vpop.xlane.xlu0 %2127
        %v2129 = vsel %vm710, %v2109, -inf
        %2130 = vmax.xlane.f32.xlu0 %v2129
        %v2131 = vpop.xlane.xlu0 %2130
        %v2132 = vsel %vm710, %v2110, -inf
        %2133 = vmax.xlane.f32.xlu0 %v2132
        %v2134 = vpop.xlane.xlu0 %2133
        %v2135 = vsub.f32 %v2103, %v2113
        %v2136 = vsub.f32 %v2104, %v2116
        %v2137 = vsub.f32 %v2105, %v2119
        %v2138 = vsub.f32 %v2106, %v2122
        %v2139 = vsub.f32 %v2107, %v2125
        %v2140 = vsub.f32 %v2108, %v2128
        %v2141 = vsub.f32 %v2109, %v2131
        %v2142 = vsub.f32 %v2110, %v2134
        %v2143 = vmul.f32 %v2135, 1.442695
        %v2144 = vpow.pop %v2143
        %v2145 = vmul.f32 %v2136, 1.442695
        %v2146 = vpow.pop %v2145
        %v2147 = vmul.f32 %v2137, 1.442695
        %v2148 = vpow.pop %v2147
        %v2149 = vmul.f32 %v2138, 1.442695
        %v2150 = vpow.pop %v2149
        %v2151 = vmul.f32 %v2139, 1.442695
        %v2152 = vpow.pop %v2151
        %v2153 = vmul.f32 %v2140, 1.442695
        %v2154 = vpow.pop %v2153
        %v2155 = vmul.f32 %v2141, 1.442695
        %v2156 = vpow.pop %v2155
        %v2157 = vmul.f32 %v2142, 1.442695
        %v2158 = vpow.pop %v2157
        %v2159 = vsel %vm710, %v2144, 0.0
        %2160 = vadd.xlane.f32.xlu0 %v2159
        %v2161 = vpop.xlane.xlu0 %2160
        %v2162 = vsel %vm710, %v2146, 0.0
        %2163 = vadd.xlane.f32.xlu0 %v2162
        %v2164 = vpop.xlane.xlu0 %2163
        %v2165 = vsel %vm710, %v2148, 0.0
        %2166 = vadd.xlane.f32.xlu0 %v2165
        %v2167 = vpop.xlane.xlu0 %2166
        %v2168 = vsel %vm710, %v2150, 0.0
        %2169 = vadd.xlane.f32.xlu0 %v2168
        %v2170 = vpop.xlane.xlu0 %2169
        %v2171 = vsel %vm710, %v2152, 0.0
        %2172 = vadd.xlane.f32.xlu0 %v2171
        %v2173 = vpop.xlane.xlu0 %2172
        %v2174 = vsel %vm710, %v2154, 0.0
        %2175 = vadd.xlane.f32.xlu0 %v2174
        %v2176 = vpop.xlane.xlu0 %2175
        %v2177 = vsel %vm710, %v2156, 0.0
        %2178 = vadd.xlane.f32.xlu0 %v2177
        %v2179 = vpop.xlane.xlu0 %2178
        %v2180 = vsel %vm710, %v2158, 0.0
        %2181 = vadd.xlane.f32.xlu0 %v2180
        %v2182 = vpop.xlane.xlu0 %2181
        %v2183 = vrcp.pop %v2161
        %v2184 = vmul.f32 %v2144, %v2183
        %v2185 = vrcp.pop %v2164
        %v2186 = vmul.f32 %v2146, %v2185
        %v2187 = vrcp.pop %v2167
        %v2188 = vmul.f32 %v2148, %v2187
        %v2189 = vrcp.pop %v2170
        %v2190 = vmul.f32 %v2150, %v2189
        %v2191 = vrcp.pop %v2173
        %v2192 = vmul.f32 %v2152, %v2191
        %v2193 = vrcp.pop %v2176
        %v2194 = vmul.f32 %v2154, %v2193
        %v2195 = vrcp.pop %v2179
        %v2196 = vmul.f32 %v2156, %v2195
        %v2197 = vrcp.pop %v2182
        %v2198 = vmul.f32 %v2158, %v2197
        %2200 = vset.pattern.permute.xlu0 0
        %2201 = vperm.xlu0 %2200, %v2184
        %v2202 = vpop.permute.xlu0 %2201
        %2205 = vset.pattern.permute.xlu0 0
        %2206 = vperm.xlu0 %2205, %v2186
        %v2207 = vpop.permute.xlu0 %2206
        %2210 = vset.pattern.permute.xlu0 0
        %2211 = vperm.xlu0 %2210, %v2188
        %v2212 = vpop.permute.xlu0 %2211
        %2215 = vset.pattern.permute.xlu0 0
        %2216 = vperm.xlu0 %2215, %v2190
        %v2217 = vpop.permute.xlu0 %2216
        %2220 = vset.pattern.permute.xlu0 0
        %2221 = vperm.xlu0 %2220, %v2192
        %v2222 = vpop.permute.xlu0 %2221
        %2225 = vset.pattern.permute.xlu0 0
        %2226 = vperm.xlu0 %2225, %v2194
        %v2227 = vpop.permute.xlu0 %2226
        %2230 = vset.pattern.permute.xlu0 0
        %2231 = vperm.xlu0 %2230, %v2196
        %v2232 = vpop.permute.xlu0 %2231
        %2235 = vset.pattern.permute.xlu0 0
        %2236 = vperm.xlu0 %2235, %v2198
        %v2237 = vpop.permute.xlu0 %2236
        %v2239 = vmul.f32 %v2202, %v533
        %v2240 = vmul.f32 %v2207, %v535
        %v2241 = vmul.f32 %v2212, %v537
        %v2242 = vmul.f32 %v2217, %v539
        %v2243 = vmul.f32 %v2222, %v541
        %v2244 = vmul.f32 %v2227, %v543
        %v2245 = vmul.f32 %v2232, %v545
        %v2246 = vmul.f32 %v2237, %v547
        %2247 = vset.pattern.permute.xlu0 1
        %2248 = vperm.xlu0 %2247, %v2184
        %v2249 = vpop.permute.xlu0 %2248
        %2251 = vset.pattern.permute.xlu0 1
        %2252 = vperm.xlu0 %2251, %v2186
        %v2253 = vpop.permute.xlu0 %2252
        %2255 = vset.pattern.permute.xlu0 1
        %2256 = vperm.xlu0 %2255, %v2188
        %v2257 = vpop.permute.xlu0 %2256
        %2259 = vset.pattern.permute.xlu0 1
        %2260 = vperm.xlu0 %2259, %v2190
        %v2261 = vpop.permute.xlu0 %2260
        %2263 = vset.pattern.permute.xlu0 1
        %2264 = vperm.xlu0 %2263, %v2192
        %v2265 = vpop.permute.xlu0 %2264
        %2267 = vset.pattern.permute.xlu0 1
        %2268 = vperm.xlu0 %2267, %v2194
        %v2269 = vpop.permute.xlu0 %2268
        %2271 = vset.pattern.permute.xlu0 1
        %2272 = vperm.xlu0 %2271, %v2196
        %v2273 = vpop.permute.xlu0 %2272
        %2275 = vset.pattern.permute.xlu0 1
        %2276 = vperm.xlu0 %2275, %v2198
        %v2277 = vpop.permute.xlu0 %2276
        %v2279 = vmul.f32 %v2249, %v533
        %v2280 = vmul.f32 %v2253, %v535
        %v2281 = vmul.f32 %v2257, %v537
        %v2282 = vmul.f32 %v2261, %v539
        %v2283 = vmul.f32 %v2265, %v541
        %v2284 = vmul.f32 %v2269, %v543
        %v2285 = vmul.f32 %v2273, %v545
        %v2286 = vmul.f32 %v2277, %v547
        %2295 = vrot.lane.b32.xlu0 %v2279, 96
        %v2296 = vpop.permute.xlu0 %2295
        %2297 = vrot.lane.b32.xlu0 %v2280, 96
        %v2298 = vpop.permute.xlu0 %2297
        %2299 = vrot.lane.b32.xlu0 %v2281, 96
        %v2300 = vpop.permute.xlu0 %2299
        %2301 = vrot.lane.b32.xlu0 %v2282, 96
        %v2302 = vpop.permute.xlu0 %2301
        %2303 = vrot.lane.b32.xlu0 %v2283, 96
        %v2304 = vpop.permute.xlu0 %2303
        %2305 = vrot.lane.b32.xlu0 %v2284, 96
        %v2306 = vpop.permute.xlu0 %2305
        %2307 = vrot.lane.b32.xlu0 %v2285, 96
        %v2308 = vpop.permute.xlu0 %2307
        %2309 = vrot.lane.b32.xlu0 %v2286, 96
        %v2310 = vpop.permute.xlu0 %2309
        %v2319 = vadd.f32 %v2239, %v2296
        %v2320 = vadd.f32 %v2240, %v2298
        %v2321 = vadd.f32 %v2241, %v2300
        %v2322 = vadd.f32 %v2242, %v2302
        %v2323 = vadd.f32 %v2243, %v2304
        %v2324 = vadd.f32 %v2244, %v2306
        %v2325 = vadd.f32 %v2245, %v2308
        %v2326 = vadd.f32 %v2246, %v2310
        %2327 = vset.pattern.permute.xlu0 2
        %2328 = vperm.xlu0 %2327, %v2184
        %v2329 = vpop.permute.xlu0 %2328
        %2331 = vset.pattern.permute.xlu0 2
        %2332 = vperm.xlu0 %2331, %v2186
        %v2333 = vpop.permute.xlu0 %2332
        %2335 = vset.pattern.permute.xlu0 2
        %2336 = vperm.xlu0 %2335, %v2188
        %v2337 = vpop.permute.xlu0 %2336
        %2339 = vset.pattern.permute.xlu0 2
        %2340 = vperm.xlu0 %2339, %v2190
        %v2341 = vpop.permute.xlu0 %2340
        %2343 = vset.pattern.permute.xlu0 2
        %2344 = vperm.xlu0 %2343, %v2192
        %v2345 = vpop.permute.xlu0 %2344
        %2347 = vset.pattern.permute.xlu0 2
        %2348 = vperm.xlu0 %2347, %v2194
        %v2349 = vpop.permute.xlu0 %2348
        %2351 = vset.pattern.permute.xlu0 2
        %2352 = vperm.xlu0 %2351, %v2196
        %v2353 = vpop.permute.xlu0 %2352
        %2355 = vset.pattern.permute.xlu0 2
        %2356 = vperm.xlu0 %2355, %v2198
        %v2357 = vpop.permute.xlu0 %2356
        %v2359 = vmul.f32 %v2329, %v533
        %v2360 = vmul.f32 %v2333, %v535
        %v2361 = vmul.f32 %v2337, %v537
        %v2362 = vmul.f32 %v2341, %v539
        %v2363 = vmul.f32 %v2345, %v541
        %v2364 = vmul.f32 %v2349, %v543
        %v2365 = vmul.f32 %v2353, %v545
        %v2366 = vmul.f32 %v2357, %v547
        %2375 = vrot.lane.b32.xlu0 %v2359, 64
        %v2376 = vpop.permute.xlu0 %2375
        %2377 = vrot.lane.b32.xlu0 %v2360, 64
        %v2378 = vpop.permute.xlu0 %2377
        %2379 = vrot.lane.b32.xlu0 %v2361, 64
        %v2380 = vpop.permute.xlu0 %2379
        %2381 = vrot.lane.b32.xlu0 %v2362, 64
        %v2382 = vpop.permute.xlu0 %2381
        %2383 = vrot.lane.b32.xlu0 %v2363, 64
        %v2384 = vpop.permute.xlu0 %2383
        %2385 = vrot.lane.b32.xlu0 %v2364, 64
        %v2386 = vpop.permute.xlu0 %2385
        %2387 = vrot.lane.b32.xlu0 %v2365, 64
        %v2388 = vpop.permute.xlu0 %2387
        %2389 = vrot.lane.b32.xlu0 %v2366, 64
        %v2390 = vpop.permute.xlu0 %2389
        %v2399 = vadd.f32 %v2319, %v2376
        %v2400 = vadd.f32 %v2320, %v2378
        %v2401 = vadd.f32 %v2321, %v2380
        %v2402 = vadd.f32 %v2322, %v2382
        %v2403 = vadd.f32 %v2323, %v2384
        %v2404 = vadd.f32 %v2324, %v2386
        %v2405 = vadd.f32 %v2325, %v2388
        %v2406 = vadd.f32 %v2326, %v2390
        %2407 = vset.pattern.permute.xlu0 3
        %2408 = vperm.xlu0 %2407, %v2184
        %v2409 = vpop.permute.xlu0 %2408
        %2411 = vset.pattern.permute.xlu0 3
        %2412 = vperm.xlu0 %2411, %v2186
        %v2413 = vpop.permute.xlu0 %2412
        %2415 = vset.pattern.permute.xlu0 3
        %2416 = vperm.xlu0 %2415, %v2188
        %v2417 = vpop.permute.xlu0 %2416
        %2419 = vset.pattern.permute.xlu0 3
        %2420 = vperm.xlu0 %2419, %v2190
        %v2421 = vpop.permute.xlu0 %2420
        %2423 = vset.pattern.permute.xlu0 3
        %2424 = vperm.xlu0 %2423, %v2192
        %v2425 = vpop.permute.xlu0 %2424
        %2427 = vset.pattern.permute.xlu0 3
        %2428 = vperm.xlu0 %2427, %v2194
        %v2429 = vpop.permute.xlu0 %2428
        %2431 = vset.pattern.permute.xlu0 3
        %2432 = vperm.xlu0 %2431, %v2196
        %v2433 = vpop.permute.xlu0 %2432
        %2435 = vset.pattern.permute.xlu0 3
        %2436 = vperm.xlu0 %2435, %v2198
        %v2437 = vpop.permute.xlu0 %2436
        %v2439 = vmul.f32 %v2409, %v533
        %v2440 = vmul.f32 %v2413, %v535
        %v2441 = vmul.f32 %v2417, %v537
        %v2442 = vmul.f32 %v2421, %v539
        %v2443 = vmul.f32 %v2425, %v541
        %v2444 = vmul.f32 %v2429, %v543
        %v2445 = vmul.f32 %v2433, %v545
        %v2446 = vmul.f32 %v2437, %v547
        %2455 = vrot.lane.b32.xlu0 %v2439, 32
        %v2456 = vpop.permute.xlu0 %2455
        %2457 = vrot.lane.b32.xlu0 %v2440, 32
        %v2458 = vpop.permute.xlu0 %2457
        %2459 = vrot.lane.b32.xlu0 %v2441, 32
        %v2460 = vpop.permute.xlu0 %2459
        %2461 = vrot.lane.b32.xlu0 %v2442, 32
        %v2462 = vpop.permute.xlu0 %2461
        %2463 = vrot.lane.b32.xlu0 %v2443, 32
        %v2464 = vpop.permute.xlu0 %2463
        %2465 = vrot.lane.b32.xlu0 %v2444, 32
        %v2466 = vpop.permute.xlu0 %2465
        %2467 = vrot.lane.b32.xlu0 %v2445, 32
        %v2468 = vpop.permute.xlu0 %2467
        %2469 = vrot.lane.b32.xlu0 %v2446, 32
        %v2470 = vpop.permute.xlu0 %2469
        %v2479 = vadd.f32 %v2399, %v2456
        %v2480 = vadd.f32 %v2400, %v2458
        %v2481 = vadd.f32 %v2401, %v2460
        %v2482 = vadd.f32 %v2402, %v2462
        %v2483 = vadd.f32 %v2403, %v2464
        %v2484 = vadd.f32 %v2404, %v2466
        %v2485 = vadd.f32 %v2405, %v2468
        %v2486 = vadd.f32 %v2406, %v2470
        %2487 = vset.pattern.permute.xlu0 4
        %2488 = vperm.xlu0 %2487, %v2184
        %v2489 = vpop.permute.xlu0 %2488
        %2491 = vset.pattern.permute.xlu0 4
        %2492 = vperm.xlu0 %2491, %v2186
        %v2493 = vpop.permute.xlu0 %2492
        %2495 = vset.pattern.permute.xlu0 4
        %2496 = vperm.xlu0 %2495, %v2188
        %v2497 = vpop.permute.xlu0 %2496
        %2499 = vset.pattern.permute.xlu0 4
        %2500 = vperm.xlu0 %2499, %v2190
        %v2501 = vpop.permute.xlu0 %2500
        %2503 = vset.pattern.permute.xlu0 4
        %2504 = vperm.xlu0 %2503, %v2192
        %v2505 = vpop.permute.xlu0 %2504
        %2507 = vset.pattern.permute.xlu0 4
        %2508 = vperm.xlu0 %2507, %v2194
        %v2509 = vpop.permute.xlu0 %2508
        %2511 = vset.pattern.permute.xlu0 4
        %2512 = vperm.xlu0 %2511, %v2196
        %v2513 = vpop.permute.xlu0 %2512
        %2515 = vset.pattern.permute.xlu0 4
        %2516 = vperm.xlu0 %2515, %v2198
        %v2517 = vpop.permute.xlu0 %2516
        %v2519 = vmul.f32 %v2489, %v534
        %v2520 = vmul.f32 %v2493, %v536
        %v2521 = vmul.f32 %v2497, %v538
        %v2522 = vmul.f32 %v2501, %v540
        %v2523 = vmul.f32 %v2505, %v542
        %v2524 = vmul.f32 %v2509, %v544
        %v2525 = vmul.f32 %v2513, %v546
        %v2526 = vmul.f32 %v2517, %v548
        %v2527 = vadd.f32 %v2479, %v2519
        %v2528 = vadd.f32 %v2480, %v2520
        %v2529 = vadd.f32 %v2481, %v2521
        %v2530 = vadd.f32 %v2482, %v2522
        %v2531 = vadd.f32 %v2483, %v2523
        %v2532 = vadd.f32 %v2484, %v2524
        %v2533 = vadd.f32 %v2485, %v2525
        %v2534 = vadd.f32 %v2486, %v2526
        %2535 = vset.pattern.permute.xlu0 5
        %2536 = vperm.xlu0 %2535, %v2184
        %v2537 = vpop.permute.xlu0 %2536
        %2539 = vset.pattern.permute.xlu0 5
        %2540 = vperm.xlu0 %2539, %v2186
        %v2541 = vpop.permute.xlu0 %2540
        %2543 = vset.pattern.permute.xlu0 5
        %2544 = vperm.xlu0 %2543, %v2188
        %v2545 = vpop.permute.xlu0 %2544
        %2547 = vset.pattern.permute.xlu0 5
        %2548 = vperm.xlu0 %2547, %v2190
        %v2549 = vpop.permute.xlu0 %2548
        %2551 = vset.pattern.permute.xlu0 5
        %2552 = vperm.xlu0 %2551, %v2192
        %v2553 = vpop.permute.xlu0 %2552
        %2555 = vset.pattern.permute.xlu0 5
        %2556 = vperm.xlu0 %2555, %v2194
        %v2557 = vpop.permute.xlu0 %2556
        %2559 = vset.pattern.permute.xlu0 5
        %2560 = vperm.xlu0 %2559, %v2196
        %v2561 = vpop.permute.xlu0 %2560
        %2563 = vset.pattern.permute.xlu0 5
        %2564 = vperm.xlu0 %2563, %v2198
        %v2565 = vpop.permute.xlu0 %2564
        %v2567 = vmul.f32 %v2537, %v534
        %v2568 = vmul.f32 %v2541, %v536
        %v2569 = vmul.f32 %v2545, %v538
        %v2570 = vmul.f32 %v2549, %v540
        %v2571 = vmul.f32 %v2553, %v542
        %v2572 = vmul.f32 %v2557, %v544
        %v2573 = vmul.f32 %v2561, %v546
        %v2574 = vmul.f32 %v2565, %v548
        %2583 = vrot.lane.b32.xlu0 %v2567, 96
        %v2584 = vpop.permute.xlu0 %2583
        %2585 = vrot.lane.b32.xlu0 %v2568, 96
        %v2586 = vpop.permute.xlu0 %2585
        %2587 = vrot.lane.b32.xlu0 %v2569, 96
        %v2588 = vpop.permute.xlu0 %2587
        %2589 = vrot.lane.b32.xlu0 %v2570, 96
        %v2590 = vpop.permute.xlu0 %2589
        %2591 = vrot.lane.b32.xlu0 %v2571, 96
        %v2592 = vpop.permute.xlu0 %2591
        %2593 = vrot.lane.b32.xlu0 %v2572, 96
        %v2594 = vpop.permute.xlu0 %2593
        %2595 = vrot.lane.b32.xlu0 %v2573, 96
        %v2596 = vpop.permute.xlu0 %2595
        %2597 = vrot.lane.b32.xlu0 %v2574, 96
        %v2598 = vpop.permute.xlu0 %2597
        %v2607 = vadd.f32 %v2527, %v2584
        %v2608 = vadd.f32 %v2528, %v2586
        %v2609 = vadd.f32 %v2529, %v2588
        %v2610 = vadd.f32 %v2530, %v2590
        %v2611 = vadd.f32 %v2531, %v2592
        %v2612 = vadd.f32 %v2532, %v2594
        %v2613 = vadd.f32 %v2533, %v2596
        %v2614 = vadd.f32 %v2534, %v2598
        %2615 = vset.pattern.permute.xlu0 6
        %2616 = vperm.xlu0 %2615, %v2184
        %v2617 = vpop.permute.xlu0 %2616
        %2619 = vset.pattern.permute.xlu0 6
        %2620 = vperm.xlu0 %2619, %v2186
        %v2621 = vpop.permute.xlu0 %2620
        %2623 = vset.pattern.permute.xlu0 6
        %2624 = vperm.xlu0 %2623, %v2188
        %v2625 = vpop.permute.xlu0 %2624
        %2627 = vset.pattern.permute.xlu0 6
        %2628 = vperm.xlu0 %2627, %v2190
        %v2629 = vpop.permute.xlu0 %2628
        %2631 = vset.pattern.permute.xlu0 6
        %2632 = vperm.xlu0 %2631, %v2192
        %v2633 = vpop.permute.xlu0 %2632
        %2635 = vset.pattern.permute.xlu0 6
        %2636 = vperm.xlu0 %2635, %v2194
        %v2637 = vpop.permute.xlu0 %2636
        %2639 = vset.pattern.permute.xlu0 6
        %2640 = vperm.xlu0 %2639, %v2196
        %v2641 = vpop.permute.xlu0 %2640
        %2643 = vset.pattern.permute.xlu0 6
        %2644 = vperm.xlu0 %2643, %v2198
        %v2645 = vpop.permute.xlu0 %2644
        %v2647 = vmul.f32 %v2617, %v534
        %v2648 = vmul.f32 %v2621, %v536
        %v2649 = vmul.f32 %v2625, %v538
        %v2650 = vmul.f32 %v2629, %v540
        %v2651 = vmul.f32 %v2633, %v542
        %v2652 = vmul.f32 %v2637, %v544
        %v2653 = vmul.f32 %v2641, %v546
        %v2654 = vmul.f32 %v2645, %v548
        %2663 = vrot.lane.b32.xlu0 %v2647, 64
        %v2664 = vpop.permute.xlu0 %2663
        %2665 = vrot.lane.b32.xlu0 %v2648, 64
        %v2666 = vpop.permute.xlu0 %2665
        %2667 = vrot.lane.b32.xlu0 %v2649, 64
        %v2668 = vpop.permute.xlu0 %2667
        %2669 = vrot.lane.b32.xlu0 %v2650, 64
        %v2670 = vpop.permute.xlu0 %2669
        %2671 = vrot.lane.b32.xlu0 %v2651, 64
        %v2672 = vpop.permute.xlu0 %2671
        %2673 = vrot.lane.b32.xlu0 %v2652, 64
        %v2674 = vpop.permute.xlu0 %2673
        %2675 = vrot.lane.b32.xlu0 %v2653, 64
        %v2676 = vpop.permute.xlu0 %2675
        %2677 = vrot.lane.b32.xlu0 %v2654, 64
        %v2678 = vpop.permute.xlu0 %2677
        %v2687 = vadd.f32 %v2607, %v2664
        %v2688 = vadd.f32 %v2608, %v2666
        %v2689 = vadd.f32 %v2609, %v2668
        %v2690 = vadd.f32 %v2610, %v2670
        %v2691 = vadd.f32 %v2611, %v2672
        %v2692 = vadd.f32 %v2612, %v2674
        %v2693 = vadd.f32 %v2613, %v2676
        %v2694 = vadd.f32 %v2614, %v2678
        %2695 = vset.pattern.permute.xlu0 7
        %2696 = vperm.xlu0 %2695, %v2184
        %v2697 = vpop.permute.xlu0 %2696
        %2699 = vset.pattern.permute.xlu0 7
        %2700 = vperm.xlu0 %2699, %v2186
        %v2701 = vpop.permute.xlu0 %2700
        %2703 = vset.pattern.permute.xlu0 7
        %2704 = vperm.xlu0 %2703, %v2188
        %v2705 = vpop.permute.xlu0 %2704
        %2707 = vset.pattern.permute.xlu0 7
        %2708 = vperm.xlu0 %2707, %v2190
        %v2709 = vpop.permute.xlu0 %2708
        %2711 = vset.pattern.permute.xlu0 7
        %2712 = vperm.xlu0 %2711, %v2192
        %v2713 = vpop.permute.xlu0 %2712
        %2715 = vset.pattern.permute.xlu0 7
        %2716 = vperm.xlu0 %2715, %v2194
        %v2717 = vpop.permute.xlu0 %2716
        %2719 = vset.pattern.permute.xlu0 7
        %2720 = vperm.xlu0 %2719, %v2196
        %v2721 = vpop.permute.xlu0 %2720
        %2723 = vset.pattern.permute.xlu0 7
        %2724 = vperm.xlu0 %2723, %v2198
        %v2725 = vpop.permute.xlu0 %2724
        %v2727 = vmul.f32 %v2697, %v534
        %v2728 = vmul.f32 %v2701, %v536
        %v2729 = vmul.f32 %v2705, %v538
        %v2730 = vmul.f32 %v2709, %v540
        %v2731 = vmul.f32 %v2713, %v542
        %v2732 = vmul.f32 %v2717, %v544
        %v2733 = vmul.f32 %v2721, %v546
        %v2734 = vmul.f32 %v2725, %v548
        %2743 = vrot.lane.b32.xlu0 %v2727, 32
        %v2744 = vpop.permute.xlu0 %2743
        %2745 = vrot.lane.b32.xlu0 %v2728, 32
        %v2746 = vpop.permute.xlu0 %2745
        %2747 = vrot.lane.b32.xlu0 %v2729, 32
        %v2748 = vpop.permute.xlu0 %2747
        %2749 = vrot.lane.b32.xlu0 %v2730, 32
        %v2750 = vpop.permute.xlu0 %2749
        %2751 = vrot.lane.b32.xlu0 %v2731, 32
        %v2752 = vpop.permute.xlu0 %2751
        %2753 = vrot.lane.b32.xlu0 %v2732, 32
        %v2754 = vpop.permute.xlu0 %2753
        %2755 = vrot.lane.b32.xlu0 %v2733, 32
        %v2756 = vpop.permute.xlu0 %2755
        %2757 = vrot.lane.b32.xlu0 %v2734, 32
        %v2758 = vpop.permute.xlu0 %2757
        %v2767 = vadd.f32 %v2687, %v2744
        %v2768 = vadd.f32 %v2688, %v2746
        %v2769 = vadd.f32 %v2689, %v2748
        %v2770 = vadd.f32 %v2690, %v2750
        %v2771 = vadd.f32 %v2691, %v2752
        %v2772 = vadd.f32 %v2692, %v2754
        %v2773 = vadd.f32 %v2693, %v2756
        %v2774 = vadd.f32 %v2694, %v2758
        %2775 = vrot.lane.b32.xlu0 %v686, 104
        %v2776 = vpop.permute.xlu0 %2775
        %2777 = vrot.lane.b32.xlu0 %v687, 104
        %v2778 = vpop.permute.xlu0 %2777
        %2779 = vrot.lane.b32.xlu0 %v688, 104
        %v2780 = vpop.permute.xlu0 %2779
        %2781 = vrot.lane.b32.xlu0 %v689, 104
        %v2782 = vpop.permute.xlu0 %2781
        %2783 = vrot.lane.b32.xlu0 %v690, 104
        %v2784 = vpop.permute.xlu0 %2783
        %2785 = vrot.lane.b32.xlu0 %v691, 104
        %v2786 = vpop.permute.xlu0 %2785
        %2787 = vrot.lane.b32.xlu0 %v692, 104
        %v2788 = vpop.permute.xlu0 %2787
        %2789 = vrot.lane.b32.xlu0 %v693, 104
        %v2790 = vpop.permute.xlu0 %2789
        %v2799 = vsel %vm701, %v2776, -1e+30
        %v2800 = vsel %vm701, %v2778, -1e+30
        %v2801 = vsel %vm701, %v2780, -1e+30
        %v2802 = vsel %vm701, %v2782, -1e+30
        %v2803 = vsel %vm701, %v2784, -1e+30
        %v2804 = vsel %vm701, %v2786, -1e+30
        %v2805 = vsel %vm701, %v2788, -1e+30
        %v2806 = vsel %vm701, %v2790, -1e+30
        %v2807 = vsel %vm710, %v2799, -inf
        %2808 = vmax.xlane.f32.xlu0 %v2807
        %v2809 = vpop.xlane.xlu0 %2808
        %v2810 = vsel %vm710, %v2800, -inf
        %2811 = vmax.xlane.f32.xlu0 %v2810
        %v2812 = vpop.xlane.xlu0 %2811
        %v2813 = vsel %vm710, %v2801, -inf
        %2814 = vmax.xlane.f32.xlu0 %v2813
        %v2815 = vpop.xlane.xlu0 %2814
        %v2816 = vsel %vm710, %v2802, -inf
        %2817 = vmax.xlane.f32.xlu0 %v2816
        %v2818 = vpop.xlane.xlu0 %2817
        %v2819 = vsel %vm710, %v2803, -inf
        %2820 = vmax.xlane.f32.xlu0 %v2819
        %v2821 = vpop.xlane.xlu0 %2820
        %v2822 = vsel %vm710, %v2804, -inf
        %2823 = vmax.xlane.f32.xlu0 %v2822
        %v2824 = vpop.xlane.xlu0 %2823
        %v2825 = vsel %vm710, %v2805, -inf
        %2826 = vmax.xlane.f32.xlu0 %v2825
        %v2827 = vpop.xlane.xlu0 %2826
        %v2828 = vsel %vm710, %v2806, -inf
        %2829 = vmax.xlane.f32.xlu0 %v2828
        %v2830 = vpop.xlane.xlu0 %2829
        %v2831 = vsub.f32 %v2799, %v2809
        %v2832 = vsub.f32 %v2800, %v2812
        %v2833 = vsub.f32 %v2801, %v2815
        %v2834 = vsub.f32 %v2802, %v2818
        %v2835 = vsub.f32 %v2803, %v2821
        %v2836 = vsub.f32 %v2804, %v2824
        %v2837 = vsub.f32 %v2805, %v2827
        %v2838 = vsub.f32 %v2806, %v2830
        %v2839 = vmul.f32 %v2831, 1.442695
        %v2840 = vpow.pop %v2839
        %v2841 = vmul.f32 %v2832, 1.442695
        %v2842 = vpow.pop %v2841
        %v2843 = vmul.f32 %v2833, 1.442695
        %v2844 = vpow.pop %v2843
        %v2845 = vmul.f32 %v2834, 1.442695
        %v2846 = vpow.pop %v2845
        %v2847 = vmul.f32 %v2835, 1.442695
        %v2848 = vpow.pop %v2847
        %v2849 = vmul.f32 %v2836, 1.442695
        %v2850 = vpow.pop %v2849
        %v2851 = vmul.f32 %v2837, 1.442695
        %v2852 = vpow.pop %v2851
        %v2853 = vmul.f32 %v2838, 1.442695
        %v2854 = vpow.pop %v2853
        %v2855 = vsel %vm710, %v2840, 0.0
        %2856 = vadd.xlane.f32.xlu0 %v2855
        %v2857 = vpop.xlane.xlu0 %2856
        %v2858 = vsel %vm710, %v2842, 0.0
        %2859 = vadd.xlane.f32.xlu0 %v2858
        %v2860 = vpop.xlane.xlu0 %2859
        %v2861 = vsel %vm710, %v2844, 0.0
        %2862 = vadd.xlane.f32.xlu0 %v2861
        %v2863 = vpop.xlane.xlu0 %2862
        %v2864 = vsel %vm710, %v2846, 0.0
        %2865 = vadd.xlane.f32.xlu0 %v2864
        %v2866 = vpop.xlane.xlu0 %2865
        %v2867 = vsel %vm710, %v2848, 0.0
        %2868 = vadd.xlane.f32.xlu0 %v2867
        %v2869 = vpop.xlane.xlu0 %2868
        %v2870 = vsel %vm710, %v2850, 0.0
        %2871 = vadd.xlane.f32.xlu0 %v2870
        %v2872 = vpop.xlane.xlu0 %2871
        %v2873 = vsel %vm710, %v2852, 0.0
        %2874 = vadd.xlane.f32.xlu0 %v2873
        %v2875 = vpop.xlane.xlu0 %2874
        %v2876 = vsel %vm710, %v2854, 0.0
        %2877 = vadd.xlane.f32.xlu0 %v2876
        %v2878 = vpop.xlane.xlu0 %2877
        %v2879 = vrcp.pop %v2857
        %v2880 = vmul.f32 %v2840, %v2879
        %v2881 = vrcp.pop %v2860
        %v2882 = vmul.f32 %v2842, %v2881
        %v2883 = vrcp.pop %v2863
        %v2884 = vmul.f32 %v2844, %v2883
        %v2885 = vrcp.pop %v2866
        %v2886 = vmul.f32 %v2846, %v2885
        %v2887 = vrcp.pop %v2869
        %v2888 = vmul.f32 %v2848, %v2887
        %v2889 = vrcp.pop %v2872
        %v2890 = vmul.f32 %v2850, %v2889
        %v2891 = vrcp.pop %v2875
        %v2892 = vmul.f32 %v2852, %v2891
        %v2893 = vrcp.pop %v2878
        %v2894 = vmul.f32 %v2854, %v2893
        %2896 = vset.pattern.permute.xlu0 0
        %2897 = vperm.xlu0 %2896, %v2880
        %v2898 = vpop.permute.xlu0 %2897
        %2901 = vset.pattern.permute.xlu0 0
        %2902 = vperm.xlu0 %2901, %v2882
        %v2903 = vpop.permute.xlu0 %2902
        %2906 = vset.pattern.permute.xlu0 0
        %2907 = vperm.xlu0 %2906, %v2884
        %v2908 = vpop.permute.xlu0 %2907
        %2911 = vset.pattern.permute.xlu0 0
        %2912 = vperm.xlu0 %2911, %v2886
        %v2913 = vpop.permute.xlu0 %2912
        %2916 = vset.pattern.permute.xlu0 0
        %2917 = vperm.xlu0 %2916, %v2888
        %v2918 = vpop.permute.xlu0 %2917
        %2921 = vset.pattern.permute.xlu0 0
        %2922 = vperm.xlu0 %2921, %v2890
        %v2923 = vpop.permute.xlu0 %2922
        %2926 = vset.pattern.permute.xlu0 0
        %2927 = vperm.xlu0 %2926, %v2892
        %v2928 = vpop.permute.xlu0 %2927
        %2931 = vset.pattern.permute.xlu0 0
        %2932 = vperm.xlu0 %2931, %v2894
        %v2933 = vpop.permute.xlu0 %2932
        %v2935 = vmul.f32 %v2898, %v533
        %v2936 = vmul.f32 %v2903, %v535
        %v2937 = vmul.f32 %v2908, %v537
        %v2938 = vmul.f32 %v2913, %v539
        %v2939 = vmul.f32 %v2918, %v541
        %v2940 = vmul.f32 %v2923, %v543
        %v2941 = vmul.f32 %v2928, %v545
        %v2942 = vmul.f32 %v2933, %v547
        %2943 = vset.pattern.permute.xlu0 1
        %2944 = vperm.xlu0 %2943, %v2880
        %v2945 = vpop.permute.xlu0 %2944
        %2947 = vset.pattern.permute.xlu0 1
        %2948 = vperm.xlu0 %2947, %v2882
        %v2949 = vpop.permute.xlu0 %2948
        %2951 = vset.pattern.permute.xlu0 1
        %2952 = vperm.xlu0 %2951, %v2884
        %v2953 = vpop.permute.xlu0 %2952
        %2955 = vset.pattern.permute.xlu0 1
        %2956 = vperm.xlu0 %2955, %v2886
        %v2957 = vpop.permute.xlu0 %2956
        %2959 = vset.pattern.permute.xlu0 1
        %2960 = vperm.xlu0 %2959, %v2888
        %v2961 = vpop.permute.xlu0 %2960
        %2963 = vset.pattern.permute.xlu0 1
        %2964 = vperm.xlu0 %2963, %v2890
        %v2965 = vpop.permute.xlu0 %2964
        %2967 = vset.pattern.permute.xlu0 1
        %2968 = vperm.xlu0 %2967, %v2892
        %v2969 = vpop.permute.xlu0 %2968
        %2971 = vset.pattern.permute.xlu0 1
        %2972 = vperm.xlu0 %2971, %v2894
        %v2973 = vpop.permute.xlu0 %2972
        %v2975 = vmul.f32 %v2945, %v533
        %v2976 = vmul.f32 %v2949, %v535
        %v2977 = vmul.f32 %v2953, %v537
        %v2978 = vmul.f32 %v2957, %v539
        %v2979 = vmul.f32 %v2961, %v541
        %v2980 = vmul.f32 %v2965, %v543
        %v2981 = vmul.f32 %v2969, %v545
        %v2982 = vmul.f32 %v2973, %v547
        %2991 = vrot.lane.b32.xlu0 %v2975, 96
        %v2992 = vpop.permute.xlu0 %2991
        %2993 = vrot.lane.b32.xlu0 %v2976, 96
        %v2994 = vpop.permute.xlu0 %2993
        %2995 = vrot.lane.b32.xlu0 %v2977, 96
        %v2996 = vpop.permute.xlu0 %2995
        %2997 = vrot.lane.b32.xlu0 %v2978, 96
        %v2998 = vpop.permute.xlu0 %2997
        %2999 = vrot.lane.b32.xlu0 %v2979, 96
        %v3000 = vpop.permute.xlu0 %2999
        %3001 = vrot.lane.b32.xlu0 %v2980, 96
        %v3002 = vpop.permute.xlu0 %3001
        %3003 = vrot.lane.b32.xlu0 %v2981, 96
        %v3004 = vpop.permute.xlu0 %3003
        %3005 = vrot.lane.b32.xlu0 %v2982, 96
        %v3006 = vpop.permute.xlu0 %3005
        %v3015 = vadd.f32 %v2935, %v2992
        %v3016 = vadd.f32 %v2936, %v2994
        %v3017 = vadd.f32 %v2937, %v2996
        %v3018 = vadd.f32 %v2938, %v2998
        %v3019 = vadd.f32 %v2939, %v3000
        %v3020 = vadd.f32 %v2940, %v3002
        %v3021 = vadd.f32 %v2941, %v3004
        %v3022 = vadd.f32 %v2942, %v3006
        %3023 = vset.pattern.permute.xlu0 2
        %3024 = vperm.xlu0 %3023, %v2880
        %v3025 = vpop.permute.xlu0 %3024
        %3027 = vset.pattern.permute.xlu0 2
        %3028 = vperm.xlu0 %3027, %v2882
        %v3029 = vpop.permute.xlu0 %3028
        %3031 = vset.pattern.permute.xlu0 2
        %3032 = vperm.xlu0 %3031, %v2884
        %v3033 = vpop.permute.xlu0 %3032
        %3035 = vset.pattern.permute.xlu0 2
        %3036 = vperm.xlu0 %3035, %v2886
        %v3037 = vpop.permute.xlu0 %3036
        %3039 = vset.pattern.permute.xlu0 2
        %3040 = vperm.xlu0 %3039, %v2888
        %v3041 = vpop.permute.xlu0 %3040
        %3043 = vset.pattern.permute.xlu0 2
        %3044 = vperm.xlu0 %3043, %v2890
        %v3045 = vpop.permute.xlu0 %3044
        %3047 = vset.pattern.permute.xlu0 2
        %3048 = vperm.xlu0 %3047, %v2892
        %v3049 = vpop.permute.xlu0 %3048
        %3051 = vset.pattern.permute.xlu0 2
        %3052 = vperm.xlu0 %3051, %v2894
        %v3053 = vpop.permute.xlu0 %3052
        %v3055 = vmul.f32 %v3025, %v533
        %v3056 = vmul.f32 %v3029, %v535
        %v3057 = vmul.f32 %v3033, %v537
        %v3058 = vmul.f32 %v3037, %v539
        %v3059 = vmul.f32 %v3041, %v541
        %v3060 = vmul.f32 %v3045, %v543
        %v3061 = vmul.f32 %v3049, %v545
        %v3062 = vmul.f32 %v3053, %v547
        %3071 = vrot.lane.b32.xlu0 %v3055, 64
        %v3072 = vpop.permute.xlu0 %3071
        %3073 = vrot.lane.b32.xlu0 %v3056, 64
        %v3074 = vpop.permute.xlu0 %3073
        %3075 = vrot.lane.b32.xlu0 %v3057, 64
        %v3076 = vpop.permute.xlu0 %3075
        %3077 = vrot.lane.b32.xlu0 %v3058, 64
        %v3078 = vpop.permute.xlu0 %3077
        %3079 = vrot.lane.b32.xlu0 %v3059, 64
        %v3080 = vpop.permute.xlu0 %3079
        %3081 = vrot.lane.b32.xlu0 %v3060, 64
        %v3082 = vpop.permute.xlu0 %3081
        %3083 = vrot.lane.b32.xlu0 %v3061, 64
        %v3084 = vpop.permute.xlu0 %3083
        %3085 = vrot.lane.b32.xlu0 %v3062, 64
        %v3086 = vpop.permute.xlu0 %3085
        %v3095 = vadd.f32 %v3015, %v3072
        %v3096 = vadd.f32 %v3016, %v3074
        %v3097 = vadd.f32 %v3017, %v3076
        %v3098 = vadd.f32 %v3018, %v3078
        %v3099 = vadd.f32 %v3019, %v3080
        %v3100 = vadd.f32 %v3020, %v3082
        %v3101 = vadd.f32 %v3021, %v3084
        %v3102 = vadd.f32 %v3022, %v3086
        %3103 = vset.pattern.permute.xlu0 3
        %3104 = vperm.xlu0 %3103, %v2880
        %v3105 = vpop.permute.xlu0 %3104
        %3107 = vset.pattern.permute.xlu0 3
        %3108 = vperm.xlu0 %3107, %v2882
        %v3109 = vpop.permute.xlu0 %3108
        %3111 = vset.pattern.permute.xlu0 3
        %3112 = vperm.xlu0 %3111, %v2884
        %v3113 = vpop.permute.xlu0 %3112
        %3115 = vset.pattern.permute.xlu0 3
        %3116 = vperm.xlu0 %3115, %v2886
        %v3117 = vpop.permute.xlu0 %3116
        %3119 = vset.pattern.permute.xlu0 3
        %3120 = vperm.xlu0 %3119, %v2888
        %v3121 = vpop.permute.xlu0 %3120
        %3123 = vset.pattern.permute.xlu0 3
        %3124 = vperm.xlu0 %3123, %v2890
        %v3125 = vpop.permute.xlu0 %3124
        %3127 = vset.pattern.permute.xlu0 3
        %3128 = vperm.xlu0 %3127, %v2892
        %v3129 = vpop.permute.xlu0 %3128
        %3131 = vset.pattern.permute.xlu0 3
        %3132 = vperm.xlu0 %3131, %v2894
        %v3133 = vpop.permute.xlu0 %3132
        %v3135 = vmul.f32 %v3105, %v533
        %v3136 = vmul.f32 %v3109, %v535
        %v3137 = vmul.f32 %v3113, %v537
        %v3138 = vmul.f32 %v3117, %v539
        %v3139 = vmul.f32 %v3121, %v541
        %v3140 = vmul.f32 %v3125, %v543
        %v3141 = vmul.f32 %v3129, %v545
        %v3142 = vmul.f32 %v3133, %v547
        %3151 = vrot.lane.b32.xlu0 %v3135, 32
        %v3152 = vpop.permute.xlu0 %3151
        %3153 = vrot.lane.b32.xlu0 %v3136, 32
        %v3154 = vpop.permute.xlu0 %3153
        %3155 = vrot.lane.b32.xlu0 %v3137, 32
        %v3156 = vpop.permute.xlu0 %3155
        %3157 = vrot.lane.b32.xlu0 %v3138, 32
        %v3158 = vpop.permute.xlu0 %3157
        %3159 = vrot.lane.b32.xlu0 %v3139, 32
        %v3160 = vpop.permute.xlu0 %3159
        %3161 = vrot.lane.b32.xlu0 %v3140, 32
        %v3162 = vpop.permute.xlu0 %3161
        %3163 = vrot.lane.b32.xlu0 %v3141, 32
        %v3164 = vpop.permute.xlu0 %3163
        %3165 = vrot.lane.b32.xlu0 %v3142, 32
        %v3166 = vpop.permute.xlu0 %3165
        %v3175 = vadd.f32 %v3095, %v3152
        %v3176 = vadd.f32 %v3096, %v3154
        %v3177 = vadd.f32 %v3097, %v3156
        %v3178 = vadd.f32 %v3098, %v3158
        %v3179 = vadd.f32 %v3099, %v3160
        %v3180 = vadd.f32 %v3100, %v3162
        %v3181 = vadd.f32 %v3101, %v3164
        %v3182 = vadd.f32 %v3102, %v3166
        %3183 = vset.pattern.permute.xlu0 4
        %3184 = vperm.xlu0 %3183, %v2880
        %v3185 = vpop.permute.xlu0 %3184
        %3187 = vset.pattern.permute.xlu0 4
        %3188 = vperm.xlu0 %3187, %v2882
        %v3189 = vpop.permute.xlu0 %3188
        %3191 = vset.pattern.permute.xlu0 4
        %3192 = vperm.xlu0 %3191, %v2884
        %v3193 = vpop.permute.xlu0 %3192
        %3195 = vset.pattern.permute.xlu0 4
        %3196 = vperm.xlu0 %3195, %v2886
        %v3197 = vpop.permute.xlu0 %3196
        %3199 = vset.pattern.permute.xlu0 4
        %3200 = vperm.xlu0 %3199, %v2888
        %v3201 = vpop.permute.xlu0 %3200
        %3203 = vset.pattern.permute.xlu0 4
        %3204 = vperm.xlu0 %3203, %v2890
        %v3205 = vpop.permute.xlu0 %3204
        %3207 = vset.pattern.permute.xlu0 4
        %3208 = vperm.xlu0 %3207, %v2892
        %v3209 = vpop.permute.xlu0 %3208
        %3211 = vset.pattern.permute.xlu0 4
        %3212 = vperm.xlu0 %3211, %v2894
        %v3213 = vpop.permute.xlu0 %3212
        %v3215 = vmul.f32 %v3185, %v534
        %v3216 = vmul.f32 %v3189, %v536
        %v3217 = vmul.f32 %v3193, %v538
        %v3218 = vmul.f32 %v3197, %v540
        %v3219 = vmul.f32 %v3201, %v542
        %v3220 = vmul.f32 %v3205, %v544
        %v3221 = vmul.f32 %v3209, %v546
        %v3222 = vmul.f32 %v3213, %v548
        %v3223 = vadd.f32 %v3175, %v3215
        %v3224 = vadd.f32 %v3176, %v3216
        %v3225 = vadd.f32 %v3177, %v3217
        %v3226 = vadd.f32 %v3178, %v3218
        %v3227 = vadd.f32 %v3179, %v3219
        %v3228 = vadd.f32 %v3180, %v3220
        %v3229 = vadd.f32 %v3181, %v3221
        %v3230 = vadd.f32 %v3182, %v3222
        %3231 = vset.pattern.permute.xlu0 5
        %3232 = vperm.xlu0 %3231, %v2880
        %v3233 = vpop.permute.xlu0 %3232
        %3235 = vset.pattern.permute.xlu0 5
        %3236 = vperm.xlu0 %3235, %v2882
        %v3237 = vpop.permute.xlu0 %3236
        %3239 = vset.pattern.permute.xlu0 5
        %3240 = vperm.xlu0 %3239, %v2884
        %v3241 = vpop.permute.xlu0 %3240
        %3243 = vset.pattern.permute.xlu0 5
        %3244 = vperm.xlu0 %3243, %v2886
        %v3245 = vpop.permute.xlu0 %3244
        %3247 = vset.pattern.permute.xlu0 5
        %3248 = vperm.xlu0 %3247, %v2888
        %v3249 = vpop.permute.xlu0 %3248
        %3251 = vset.pattern.permute.xlu0 5
        %3252 = vperm.xlu0 %3251, %v2890
        %v3253 = vpop.permute.xlu0 %3252
        %3255 = vset.pattern.permute.xlu0 5
        %3256 = vperm.xlu0 %3255, %v2892
        %v3257 = vpop.permute.xlu0 %3256
        %3259 = vset.pattern.permute.xlu0 5
        %3260 = vperm.xlu0 %3259, %v2894
        %v3261 = vpop.permute.xlu0 %3260
        %v3263 = vmul.f32 %v3233, %v534
        %v3264 = vmul.f32 %v3237, %v536
        %v3265 = vmul.f32 %v3241, %v538
        %v3266 = vmul.f32 %v3245, %v540
        %v3267 = vmul.f32 %v3249, %v542
        %v3268 = vmul.f32 %v3253, %v544
        %v3269 = vmul.f32 %v3257, %v546
        %v3270 = vmul.f32 %v3261, %v548
        %3279 = vrot.lane.b32.xlu0 %v3263, 96
        %v3280 = vpop.permute.xlu0 %3279
        %3281 = vrot.lane.b32.xlu0 %v3264, 96
        %v3282 = vpop.permute.xlu0 %3281
        %3283 = vrot.lane.b32.xlu0 %v3265, 96
        %v3284 = vpop.permute.xlu0 %3283
        %3285 = vrot.lane.b32.xlu0 %v3266, 96
        %v3286 = vpop.permute.xlu0 %3285
        %3287 = vrot.lane.b32.xlu0 %v3267, 96
        %v3288 = vpop.permute.xlu0 %3287
        %3289 = vrot.lane.b32.xlu0 %v3268, 96
        %v3290 = vpop.permute.xlu0 %3289
        %3291 = vrot.lane.b32.xlu0 %v3269, 96
        %v3292 = vpop.permute.xlu0 %3291
        %3293 = vrot.lane.b32.xlu0 %v3270, 96
        %v3294 = vpop.permute.xlu0 %3293
        %v3303 = vadd.f32 %v3223, %v3280
        %v3304 = vadd.f32 %v3224, %v3282
        %v3305 = vadd.f32 %v3225, %v3284
        %v3306 = vadd.f32 %v3226, %v3286
        %v3307 = vadd.f32 %v3227, %v3288
        %v3308 = vadd.f32 %v3228, %v3290
        %v3309 = vadd.f32 %v3229, %v3292
        %v3310 = vadd.f32 %v3230, %v3294
        %3311 = vset.pattern.permute.xlu0 6
        %3312 = vperm.xlu0 %3311, %v2880
        %v3313 = vpop.permute.xlu0 %3312
        %3315 = vset.pattern.permute.xlu0 6
        %3316 = vperm.xlu0 %3315, %v2882
        %v3317 = vpop.permute.xlu0 %3316
        %3319 = vset.pattern.permute.xlu0 6
        %3320 = vperm.xlu0 %3319, %v2884
        %v3321 = vpop.permute.xlu0 %3320
        %3323 = vset.pattern.permute.xlu0 6
        %3324 = vperm.xlu0 %3323, %v2886
        %v3325 = vpop.permute.xlu0 %3324
        %3327 = vset.pattern.permute.xlu0 6
        %3328 = vperm.xlu0 %3327, %v2888
        %v3329 = vpop.permute.xlu0 %3328
        %3331 = vset.pattern.permute.xlu0 6
        %3332 = vperm.xlu0 %3331, %v2890
        %v3333 = vpop.permute.xlu0 %3332
        %3335 = vset.pattern.permute.xlu0 6
        %3336 = vperm.xlu0 %3335, %v2892
        %v3337 = vpop.permute.xlu0 %3336
        %3339 = vset.pattern.permute.xlu0 6
        %3340 = vperm.xlu0 %3339, %v2894
        %v3341 = vpop.permute.xlu0 %3340
        %v3343 = vmul.f32 %v3313, %v534
        %v3344 = vmul.f32 %v3317, %v536
        %v3345 = vmul.f32 %v3321, %v538
        %v3346 = vmul.f32 %v3325, %v540
        %v3347 = vmul.f32 %v3329, %v542
        %v3348 = vmul.f32 %v3333, %v544
        %v3349 = vmul.f32 %v3337, %v546
        %v3350 = vmul.f32 %v3341, %v548
        %3359 = vrot.lane.b32.xlu0 %v3343, 64
        %v3360 = vpop.permute.xlu0 %3359
        %3361 = vrot.lane.b32.xlu0 %v3344, 64
        %v3362 = vpop.permute.xlu0 %3361
        %3363 = vrot.lane.b32.xlu0 %v3345, 64
        %v3364 = vpop.permute.xlu0 %3363
        %3365 = vrot.lane.b32.xlu0 %v3346, 64
        %v3366 = vpop.permute.xlu0 %3365
        %3367 = vrot.lane.b32.xlu0 %v3347, 64
        %v3368 = vpop.permute.xlu0 %3367
        %3369 = vrot.lane.b32.xlu0 %v3348, 64
        %v3370 = vpop.permute.xlu0 %3369
        %3371 = vrot.lane.b32.xlu0 %v3349, 64
        %v3372 = vpop.permute.xlu0 %3371
        %3373 = vrot.lane.b32.xlu0 %v3350, 64
        %v3374 = vpop.permute.xlu0 %3373
        %v3383 = vadd.f32 %v3303, %v3360
        %v3384 = vadd.f32 %v3304, %v3362
        %v3385 = vadd.f32 %v3305, %v3364
        %v3386 = vadd.f32 %v3306, %v3366
        %v3387 = vadd.f32 %v3307, %v3368
        %v3388 = vadd.f32 %v3308, %v3370
        %v3389 = vadd.f32 %v3309, %v3372
        %v3390 = vadd.f32 %v3310, %v3374
        %3391 = vset.pattern.permute.xlu0 7
        %3392 = vperm.xlu0 %3391, %v2880
        %v3393 = vpop.permute.xlu0 %3392
        %3395 = vset.pattern.permute.xlu0 7
        %3396 = vperm.xlu0 %3395, %v2882
        %v3397 = vpop.permute.xlu0 %3396
        %3399 = vset.pattern.permute.xlu0 7
        %3400 = vperm.xlu0 %3399, %v2884
        %v3401 = vpop.permute.xlu0 %3400
        %3403 = vset.pattern.permute.xlu0 7
        %3404 = vperm.xlu0 %3403, %v2886
        %v3405 = vpop.permute.xlu0 %3404
        %3407 = vset.pattern.permute.xlu0 7
        %3408 = vperm.xlu0 %3407, %v2888
        %v3409 = vpop.permute.xlu0 %3408
        %3411 = vset.pattern.permute.xlu0 7
        %3412 = vperm.xlu0 %3411, %v2890
        %v3413 = vpop.permute.xlu0 %3412
        %3415 = vset.pattern.permute.xlu0 7
        %3416 = vperm.xlu0 %3415, %v2892
        %v3417 = vpop.permute.xlu0 %3416
        %3419 = vset.pattern.permute.xlu0 7
        %3420 = vperm.xlu0 %3419, %v2894
        %v3421 = vpop.permute.xlu0 %3420
        %v3423 = vmul.f32 %v3393, %v534
        %v3424 = vmul.f32 %v3397, %v536
        %v3425 = vmul.f32 %v3401, %v538
        %v3426 = vmul.f32 %v3405, %v540
        %v3427 = vmul.f32 %v3409, %v542
        %v3428 = vmul.f32 %v3413, %v544
        %v3429 = vmul.f32 %v3417, %v546
        %v3430 = vmul.f32 %v3421, %v548
        %3439 = vrot.lane.b32.xlu0 %v3423, 32
        %v3440 = vpop.permute.xlu0 %3439
        %3441 = vrot.lane.b32.xlu0 %v3424, 32
        %v3442 = vpop.permute.xlu0 %3441
        %3443 = vrot.lane.b32.xlu0 %v3425, 32
        %v3444 = vpop.permute.xlu0 %3443
        %3445 = vrot.lane.b32.xlu0 %v3426, 32
        %v3446 = vpop.permute.xlu0 %3445
        %3447 = vrot.lane.b32.xlu0 %v3427, 32
        %v3448 = vpop.permute.xlu0 %3447
        %3449 = vrot.lane.b32.xlu0 %v3428, 32
        %v3450 = vpop.permute.xlu0 %3449
        %3451 = vrot.lane.b32.xlu0 %v3429, 32
        %v3452 = vpop.permute.xlu0 %3451
        %3453 = vrot.lane.b32.xlu0 %v3430, 32
        %v3454 = vpop.permute.xlu0 %3453
        %v3463 = vadd.f32 %v3383, %v3440
        %v3464 = vadd.f32 %v3384, %v3442
        %v3465 = vadd.f32 %v3385, %v3444
        %v3466 = vadd.f32 %v3386, %v3446
        %v3467 = vadd.f32 %v3387, %v3448
        %v3468 = vadd.f32 %v3388, %v3450
        %v3469 = vadd.f32 %v3389, %v3452
        %v3470 = vadd.f32 %v3390, %v3454
        %3479 = vrot.lane.b32.xlu0 %v2071, 32
        %v3480 = vpop.permute.xlu0 %3479
        %3481 = vrot.lane.b32.xlu0 %v2072, 32
        %v3482 = vpop.permute.xlu0 %3481
        %3483 = vrot.lane.b32.xlu0 %v2073, 32
        %v3484 = vpop.permute.xlu0 %3483
        %3485 = vrot.lane.b32.xlu0 %v2074, 32
        %v3486 = vpop.permute.xlu0 %3485
        %3487 = vrot.lane.b32.xlu0 %v2075, 32
        %v3488 = vpop.permute.xlu0 %3487
        %3489 = vrot.lane.b32.xlu0 %v2076, 32
        %v3490 = vpop.permute.xlu0 %3489
        %3491 = vrot.lane.b32.xlu0 %v2077, 32
        %v3492 = vpop.permute.xlu0 %3491
        %3493 = vrot.lane.b32.xlu0 %v2078, 32
        %v3494 = vpop.permute.xlu0 %3493
        %3511 = vrot.lane.b32.xlu0 %v2767, 64
        %v3512 = vpop.permute.xlu0 %3511
        %3513 = vrot.lane.b32.xlu0 %v2768, 64
        %v3514 = vpop.permute.xlu0 %3513
        %3515 = vrot.lane.b32.xlu0 %v2769, 64
        %v3516 = vpop.permute.xlu0 %3515
        %3517 = vrot.lane.b32.xlu0 %v2770, 64
        %v3518 = vpop.permute.xlu0 %3517
        %3519 = vrot.lane.b32.xlu0 %v2771, 64
        %v3520 = vpop.permute.xlu0 %3519
        %3521 = vrot.lane.b32.xlu0 %v2772, 64
        %v3522 = vpop.permute.xlu0 %3521
        %3523 = vrot.lane.b32.xlu0 %v2773, 64
        %v3524 = vpop.permute.xlu0 %3523
        %3525 = vrot.lane.b32.xlu0 %v2774, 64
        %v3526 = vpop.permute.xlu0 %3525
        %3543 = vrot.lane.b32.xlu0 %v3463, 96
        %v3544 = vpop.permute.xlu0 %3543
        %3545 = vrot.lane.b32.xlu0 %v3464, 96
        %v3546 = vpop.permute.xlu0 %3545
        %3547 = vrot.lane.b32.xlu0 %v3465, 96
        %v3548 = vpop.permute.xlu0 %3547
        %3549 = vrot.lane.b32.xlu0 %v3466, 96
        %v3550 = vpop.permute.xlu0 %3549
        %3551 = vrot.lane.b32.xlu0 %v3467, 96
        %v3552 = vpop.permute.xlu0 %3551
        %3553 = vrot.lane.b32.xlu0 %v3468, 96
        %v3554 = vpop.permute.xlu0 %3553
        %3555 = vrot.lane.b32.xlu0 %v3469, 96
        %v3556 = vpop.permute.xlu0 %3555
        %3557 = vrot.lane.b32.xlu0 %v3470, 96
        %v3558 = vpop.permute.xlu0 %3557
        %v3567 = vsel %vm367, %v1367, %v3480
        %v3568 = vsel %vm367, %v1368, %v3482
        %v3569 = vsel %vm367, %v1369, %v3484
        %v3570 = vsel %vm367, %v1370, %v3486
        %v3571 = vsel %vm367, %v1371, %v3488
        %v3572 = vsel %vm367, %v1372, %v3490
        %v3573 = vsel %vm367, %v1373, %v3492
        %v3574 = vsel %vm367, %v1374, %v3494
        %vm3575 = vcmask 523264
        %v3576 = vsel %vm3575, %v3567, %v3512
        %v3577 = vsel %vm3575, %v3568, %v3514
        %v3578 = vsel %vm3575, %v3569, %v3516
        %v3579 = vsel %vm3575, %v3570, %v3518
        %v3580 = vsel %vm3575, %v3571, %v3520
        %v3581 = vsel %vm3575, %v3572, %v3522
        %v3582 = vsel %vm3575, %v3573, %v3524
        %v3583 = vsel %vm3575, %v3574, %v3526
        %vm3584 = vcmask 785408
        %v3585 = vsel %vm3584, %v3576, %v3544
        %v3586 = vsel %vm3584, %v3577, %v3546
        %v3587 = vsel %vm3584, %v3578, %v3548
        %v3588 = vsel %vm3584, %v3579, %v3550
        %v3589 = vsel %vm3584, %v3580, %v3552
        %v3590 = vsel %vm3584, %v3581, %v3554
        %v3591 = vsel %vm3584, %v3582, %v3556
        %v3592 = vsel %vm3584, %v3583, %v3558
        %v3593 = vld [vmem:[%s6] sm:$0xff]
        %v3594 = vld [vmem:[%s6 + $0x8] sm:$0xff]
        %v3595 = vld [vmem:[%s6 + $0x10] sm:$0xff]
        %v3596 = vld [vmem:[%s6 + $0x18] sm:$0xff]
        %v3597 = vld [vmem:[%s6 + $0x20] sm:$0xff]
        %v3598 = vld [vmem:[%s6 + $0x28] sm:$0xff]
        %v3599 = vld [vmem:[%s6 + $0x30] sm:$0xff]
        %v3600 = vld [vmem:[%s6 + $0x38] sm:$0xff]
        %v3601 = vld [vmem:[%s6 + $0x40] sm:$0xff]
        %v3602 = vld [vmem:[%s6 + $0x48] sm:$0xff]
        %v3603 = vld [vmem:[%s6 + $0x50] sm:$0xff]
        %v3604 = vld [vmem:[%s6 + $0x58] sm:$0xff]
        %v3605 = vld [vmem:[%s6 + $0x60] sm:$0xff]
        %v3606 = vld [vmem:[%s6 + $0x68] sm:$0xff]
        %v3607 = vld [vmem:[%s6 + $0x70] sm:$0xff]
        %v3608 = vld [vmem:[%s6 + $0x78] sm:$0xff]
        %3609 = vmatprep.subr.mxu0 0.0
        %3610 = vmatpush1.msra.mxu0 %v3593
        %3611 = vmatprep.subr.mxu0 0.0
        %3612 = vmatpush1.msra.mxu0 %v3594
        %3613 = vmatprep.subr.mxu0 0.0
        %3614 = vmatpush1.msra.mxu0 %v3595
        %3615 = vmatprep.subr.mxu0 0.0
        %3616 = vmatpush1.msra.mxu0 %v3596
        %3617 = vmatprep.subr.mxu0 0.0
        %3618 = vmatpush1.msra.mxu0 %v3597
        %3619 = vmatprep.subr.mxu0 0.0
        %3620 = vmatpush1.msra.mxu0 %v3598
        %3621 = vmatprep.subr.mxu0 0.0
        %3622 = vmatpush1.msra.mxu0 %v3599
        %3623 = vmatprep.subr.mxu0 0.0
        %3624 = vmatpush1.msra.mxu0 %v3600
        %3625 = vmatprep.subr.mxu0 0.0
        %3626 = vmatpush1.msra.mxu0 %v3601
        %3627 = vmatprep.subr.mxu0 0.0
        %3628 = vmatpush1.msra.mxu0 %v3602
        %3629 = vmatprep.subr.mxu0 0.0
        %3630 = vmatpush1.msra.mxu0 %v3603
        %3631 = vmatprep.subr.mxu0 0.0
        %3632 = vmatpush1.msra.mxu0 %v3604
        %3633 = vmatprep.subr.mxu0 0.0
        %3634 = vmatpush1.msra.mxu0 %v3605
        %3635 = vmatprep.subr.mxu0 0.0
        %3636 = vmatpush1.msra.mxu0 %v3606
        %3637 = vmatprep.subr.mxu0 0.0
        %3638 = vmatpush1.msra.mxu0 %v3607
        %3639 = vmatprep.subr.mxu0 0.0
        %3640 = vmatpush1.msra.mxu0 %v3608
        %3641 = vmatprep.subr.mxu0 0.0
        %3642 = vmatpush1.msra.mxu0 0.0
        %3643 = vmatprep.subr.mxu0 0.0
        %3644 = vmatpush1.msra.mxu0 0.0
        %3645 = vmatprep.subr.mxu0 0.0
        %3646 = vmatpush1.msra.mxu0 0.0
        %3647 = vmatprep.subr.mxu0 0.0
        %3648 = vmatpush1.msra.mxu0 0.0
        %3649 = vmatprep.subr.mxu0 0.0
        %3650 = vmatpush1.msra.mxu0 0.0
        %3651 = vmatprep.subr.mxu0 0.0
        %3652 = vmatpush1.msra.mxu0 0.0
        %3653 = vmatprep.subr.mxu0 0.0
        %3654 = vmatpush1.msra.mxu0 0.0
        %3655 = vmatprep.subr.mxu0 0.0
        %3656 = vmatpush1.msra.mxu0 0.0
        %3657 = vmatprep.subr.mxu0 0.0
        %3658 = vmatpush1.msra.mxu0 0.0
        %3659 = vmatprep.subr.mxu0 0.0
        %3660 = vmatpush1.msra.mxu0 0.0
        %3661 = vmatprep.subr.mxu0 0.0
        %3662 = vmatpush1.msra.mxu0 0.0
        %3663 = vmatprep.subr.mxu0 0.0
        %3664 = vmatpush1.msra.mxu0 0.0
        %3665 = vmatprep.subr.mxu0 0.0
        %3666 = vmatpush1.msra.mxu0 0.0
        %3667 = vmatprep.subr.mxu0 0.0
        %3668 = vmatpush1.msra.mxu0 0.0
        %3669 = vmatprep.subr.mxu0 0.0
        %3670 = vmatpush1.msra.mxu0 0.0
        %3671 = vmatprep.subr.mxu0 0.0
        %3672 = vmatpush1.msra.mxu0 0.0
        %3673 = vmatprep.mubr.f32.mxu0 0.0
        %3674 = vmatmul.mubr.f32.gmra.mrb[0].mxu0 %v3585
        %v3675 = vpop.f32.mrb[0].mxu0
        %v3676 = vadd.f32 0.0, %v3675
        %v3677 = vpop.f32.mrb[0].mxu0
        %3678 = vmatprep.mubr.f32.mxu0 0.0
        %3679 = vmatmul.mubr.f32.gmra.mrb[0].mxu0 %v3586
        %v3680 = vpop.f32.mrb[0].mxu0
        %v3681 = vadd.f32 0.0, %v3680
        %v3682 = vpop.f32.mrb[0].mxu0
        %3683 = vmatprep.mubr.f32.mxu0 0.0
        %3684 = vmatmul.mubr.f32.gmra.mrb[0].mxu0 %v3587
        %v3685 = vpop.f32.mrb[0].mxu0
        %v3686 = vadd.f32 0.0, %v3685
        %v3687 = vpop.f32.mrb[0].mxu0
        %3688 = vmatprep.mubr.f32.mxu0 0.0
        %3689 = vmatmul.mubr.f32.gmra.mrb[0].mxu0 %v3588
        %v3690 = vpop.f32.mrb[0].mxu0
        %v3691 = vadd.f32 0.0, %v3690
        %v3692 = vpop.f32.mrb[0].mxu0
        %3693 = vmatprep.mubr.f32.mxu0 0.0
        %3694 = vmatmul.mubr.f32.gmra.mrb[0].mxu0 %v3589
        %v3695 = vpop.f32.mrb[0].mxu0
        %v3696 = vadd.f32 0.0, %v3695
        %v3697 = vpop.f32.mrb[0].mxu0
        %3698 = vmatprep.mubr.f32.mxu0 0.0
        %3699 = vmatmul.mubr.f32.gmra.mrb[0].mxu0 %v3590
        %v3700 = vpop.f32.mrb[0].mxu0
        %v3701 = vadd.f32 0.0, %v3700
        %v3702 = vpop.f32.mrb[0].mxu0
        %3703 = vmatprep.mubr.f32.mxu0 0.0
        %3704 = vmatmul.mubr.f32.gmra.mrb[0].mxu0 %v3591
        %v3705 = vpop.f32.mrb[0].mxu0
        %v3706 = vadd.f32 0.0, %v3705
        %v3707 = vpop.f32.mrb[0].mxu0
        %3708 = vmatprep.mubr.f32.mxu0 0.0
        %3709 = vmatmul.mubr.f32.gmra.mrb[0].mxu0 %v3592
        %v3710 = vpop.f32.mrb[0].mxu0
        %v3711 = vadd.f32 0.0, %v3710
        %v3712 = vpop.f32.mrb[0].mxu0
        %3713 = vdwg.mxu0
        %3714 = vst [vmem:[%s320] sm:$0xff] %v3676
        %3715 = vst [vmem:[%s320 + $0x8] sm:$0xff] %v3681
        %3716 = vst [vmem:[%s320 + $0x10] sm:$0xff] %v3686
        %3717 = vst [vmem:[%s320 + $0x18] sm:$0xff] %v3691
        %3718 = vst [vmem:[%s320 + $0x20] sm:$0xff] %v3696
        %3719 = vst [vmem:[%s320 + $0x28] sm:$0xff] %v3701
        %3720 = vst [vmem:[%s320 + $0x30] sm:$0xff] %v3706
        %3721 = vst [vmem:[%s320 + $0x38] sm:$0xff] %v3711
        %s3722 = sand.u32 %s207, 1
        %s3723 = scalar_lea.sflag [#allocation3], %s3722
        %s3724 = sand.u32 %s207, 1
        %s3725 = smul.addr %s3724, 64
        %s3726 = scalar_lea.vmem [#allocation2], %s3725
        // Predicated region
        $region49: #{tpu_custom_call.1} parent=47 // pred_check
          %p3727 = pneg %p217
        $region50: #{tpu_custom_call.1} parent=47 // pred_check_branch
          %3729 = sbr.rel (%p3727) target = $region52
        $region51: #{tpu_custom_call.1} parent=47 // pred_region
          %s3730 = smul.u32 8, %s26
          %s3732 = ssub.s32 1024, 1024
          %3733 = vsyncadd %s3723, %s3732
          %s3734 = smul.addr %s25, 8
          %s3735 = sadd.s32 %s3730, %s3734
          %s3736 = smul.addr %s3735, 128
          %s3737 = scalar_lea.hbm %s7, %s3736
          %s3738 = sshll.u32 %s3726, 4
          %s3739 = int_to_ptr.vmem [resolvable:$true] %s3738
          %3744 = dma.vmem_to_hbm [thread:$0]  %s3739, 1024, %s3737, %s3723, 128, 128, 8
        $region52: #{tpu_custom_call.1} parent=47 // pred_fallthru
          _
      $region48: #{tpu_custom_call.1} parent=5 // pred_fallthru
        _
      %p3745 = scmp.le.s32.totalorder 2, %s16
      // Predicated region
      $region53: #{tpu_custom_call.1} parent=5 // pred_check
        %p3746 = pneg %p3745
      $region54: #{tpu_custom_call.1} parent=5 // pred_check_branch
        %3748 = sbr.rel (%p3746) target = $region56
      $region55: #{tpu_custom_call.1} parent=5 // pred_region
        %s3749 = ssub.s32 %s16, 2
        // Predicated region
        $region57: #{tpu_custom_call.1} parent=55 // pred_check
          %p3750 = pneg %p223
        $region58: #{tpu_custom_call.1} parent=55 // pred_check_branch
          %3752 = sbr.rel (%p3750) target = $region60
        $region59: #{tpu_custom_call.1} parent=55 // pred_region
          %s3753 = sand.u32 %s208, 1
          %s3754 = scalar_lea.sflag [#allocation3], %s3753
          %s3755 = sand.u32 %s208, 1
          %s3756 = smul.addr %s3755, 64
          %s3757 = scalar_lea.vmem [#allocation2], %s3756
          %3758 = dma.done %s3754, 1024
        $region60: #{tpu_custom_call.1} parent=55 // pred_fallthru
          _
      $region56: #{tpu_custom_call.1} parent=5 // pred_fallthru
        _
    $region6: #{tpu_custom_call.1} parent=1 // loop_footer
      %s20 = sadd.s32 1, %s16
    $region7: #{tpu_custom_call.1} parent=1 // loop_footer_branch
      %15 = sbr.rel target = $region3
    $region8: #{tpu_custom_call.1} parent=1 // loop_exit
      _
    %3759 = vsyncpa [#allocation3], 1
    %s3760 = scalar_lea.sflag [#allocation3], 1
    %3761 = vsyncpa %s3760, 1

</llo_original>
